<compile_context>
chip_gen: v6e
topology: v6e:2x2x1
jax: 0.10.0
libtpu: 0.0.40
codegen_flags: <defaults>
</compile_context>

<pallas_src>
import jax
import jax.numpy as jnp
from jax.experimental import pallas as pl
from jax.experimental.pallas import tpu as pltpu

IN_IBS = 1000
IN_KNN = 1000
IN_TOTAL = IN_IBS + IN_KNN
HIDDEN = 1000
OUT = 1


def _mlp_kernel(ibs_ref, knn_ref, w1_ref, b1_ref, w2_ref, b2_ref, o_ref):
    # Layer 1 on the (virtual) concatenation [ibs | knn]:
    # two partial matmuls against static slices of the full w1 ref.
    ibs = ibs_ref[...].astype(jnp.bfloat16)
    knn = knn_ref[...].astype(jnp.bfloat16)
    h = jnp.dot(ibs, w1_ref[:IN_IBS, :], preferred_element_type=jnp.float32)
    h = h + jnp.dot(knn, w1_ref[IN_IBS:, :], preferred_element_type=jnp.float32)
    h = h + b1_ref[...]                     # b1 is [1, HIDDEN], broadcasts over batch
    h = jnp.maximum(h, 0.0)                 # ReLU (f32, VPU)
    # Layer 2 (out_features == 1): VPU multiply + cross-lane reduce instead of a
    # 1-column MXU matmul (MXU would use 1/256 of its lanes here).
    o = jnp.sum(h * w2_ref[...], axis=-1, keepdims=True) + b2_ref[...]
    o_ref[...] = o.astype(o_ref.dtype)


def logits_assignment(ibs_logits, knn_logits, w1, b1, w2, b2):
    """ibs_logits, knn_logits: [B, 1000] float32.
    w1: [2000, 1000] (ideally stored bf16), b1: [1000], w2: [1000, 1], b2: [1].
    Returns [B] float32."""
    B = ibs_logits.shape[0]

    # The big weight should be stored in bf16; the cast is a no-op if it already is.
    w1 = w1.astype(jnp.bfloat16)
    b1_2d = b1.reshape(1, HIDDEN).astype(jnp.float32)
    w2_row = w2.reshape(1, HIDDEN).astype(jnp.float32)   # [1000,1] -> [1,1000]
    b2_2d = b2.reshape(1, OUT).astype(jnp.float32)

    # Batch tiling: full batch if small, 256-row tiles otherwise; weights keep a
    # constant block index so they stay VMEM-resident across batch tiles.
    TB = B if B <= 256 else 256
    grid = (pl.cdiv(B, TB),)

    out = pl.pallas_call(
        _mlp_kernel,
        out_shape=jax.ShapeDtypeStruct((B, OUT), jnp.float32),
        grid=grid,
        in_specs=[
            pl.BlockSpec((TB, IN_IBS), lambda i: (i, 0)),
            pl.BlockSpec((TB, IN_KNN), lambda i: (i, 0)),
            pl.BlockSpec((IN_TOTAL, HIDDEN), lambda i: (0, 0)),   # full w1, resident
            pl.BlockSpec((1, HIDDEN), lambda i: (0, 0)),          # b1
            pl.BlockSpec((1, HIDDEN), lambda i: (0, 0)),          # w2 as a row
            pl.BlockSpec((1, OUT), lambda i: (0, 0)),             # b2
        ],
        out_specs=pl.BlockSpec((TB, OUT), lambda i: (i, 0)),
        compiler_params=pltpu.CompilerParams(
            dimension_semantics=("parallel",),
            vmem_limit_bytes=32 << 20,   # actual footprint ~9-15 MiB; legal on v7x
        ),
    )(ibs_logits, knn_logits, w1, b1_2d, w2_row, b2_2d)

    return out[:, 0]  # squeeze(1)


def init_params(key):
    """Deterministic init mimicking nn.Linear defaults (uniform +-1/sqrt(fan_in))."""
    k1, k2, k3, k4 = jax.random.split(key, 4)
    bound1 = 1.0 / jnp.sqrt(2000.0)
    bound2 = 1.0 / jnp.sqrt(1000.0)
    w1 = jax.random.uniform(k1, (2000, 1000), jnp.float32, -bound1, bound1)
    b1 = jax.random.uniform(k2, (1000,), jnp.float32, -bound1, bound1)
    w2 = jax.random.uniform(k3, (1000, 1), jnp.float32, -bound2, bound2)
    b2 = jax.random.uniform(k4, (1,), jnp.float32, -bound2, bound2)
    return w1, b1, w2, b2


if __name__ == "__main__":
    key = jax.random.PRNGKey(0)
    kp, ka, kb = jax.random.split(key, 3)
    w1, b1, w2, b2 = init_params(kp)

    B = 8  # small batch
    ibs_logits = jax.random.normal(ka, (B, IN_IBS), jnp.float32)
    knn_logits = jax.random.normal(kb, (B, IN_KNN), jnp.float32)

    # Store the large weight in bf16 once (what the kernel streams from HBM).
    w1_bf16 = w1.astype(jnp.bfloat16)

    out = logits_assignment(ibs_logits, knn_logits, w1_bf16, b1, w2, b2)
    out = jax.block_until_ready(out)

    # Sanity check against the pure-JAX f32 reference of the original module.
    x = jnp.concatenate([ibs_logits, knn_logits], axis=1)
    ref = (jnp.maximum(x @ w1 + b1, 0.0) @ w2 + b2)[:, 0]
    assert out.shape == (B,)
    err = float(jnp.max(jnp.abs(out - ref)))
    assert jnp.allclose(out, ref, atol=1e-2, rtol=1e-2), f"max abs err {err}"

    print("KERNEL_OK")
</pallas_src>

<mosaic_0001>
module attributes {stable_mosaic.version = 11 : i64} {
  func.func @_mlp_kernel(%arg0: i32, %arg1: memref<8x1000xf32, #tpu.memory_space<vmem>>, %arg2: memref<8x1000xf32, #tpu.memory_space<vmem>>, %arg3: memref<2000x1000xbf16, #tpu.memory_space<vmem>>, %arg4: memref<1x1000xf32, #tpu.memory_space<vmem>>, %arg5: memref<1x1000xf32, #tpu.memory_space<vmem>>, %arg6: memref<1x1xf32, #tpu.memory_space<vmem>>, %arg7: memref<8x1xf32, #tpu.memory_space<vmem>>) attributes {dimension_semantics = [#tpu.dimension_semantics<parallel>], iteration_bounds = array<i64: 1>, scalar_prefetch = 0 : i64, scratch_operands = 0 : i64, tpu.core_type = #tpu.core_type<tc>, window_params = [{transform_indices = @transform_0, window_bounds = array<i64: 8, 1000>}, {transform_indices = @transform_1, window_bounds = array<i64: 8, 1000>}, {pipeline_mode = #tpu.pipeline_mode<synchronous>, transform_indices = @transform_2, window_bounds = array<i64: 2000, 1000>}, {pipeline_mode = #tpu.pipeline_mode<synchronous>, transform_indices = @transform_3, window_bounds = array<i64: 1, 1000>}, {pipeline_mode = #tpu.pipeline_mode<synchronous>, transform_indices = @transform_4, window_bounds = array<i64: 1, 1000>}, {pipeline_mode = #tpu.pipeline_mode<synchronous>, transform_indices = @transform_5, window_bounds = array<i64: 1, 1>}, {transform_indices = @transform_6, window_bounds = array<i64: 8, 1>}]} {
    %c0 = arith.constant 0 : index
    %c0_0 = arith.constant 0 : index
    %0 = vector.load %arg1[%c0, %c0_0] : memref<8x1000xf32, #tpu.memory_space<vmem>>, vector<8x1000xf32>
    %1 = arith.truncf %0 : vector<8x1000xf32> to vector<8x1000xbf16>
    %c0_1 = arith.constant 0 : index
    %c0_2 = arith.constant 0 : index
    %2 = vector.load %arg2[%c0_1, %c0_2] : memref<8x1000xf32, #tpu.memory_space<vmem>>, vector<8x1000xf32>
    %3 = arith.truncf %2 : vector<8x1000xf32> to vector<8x1000xbf16>
    %c0_3 = arith.constant 0 : index
    %c0_4 = arith.constant 0 : index
    %4 = vector.load %arg3[%c0_3, %c0_4] : memref<2000x1000xbf16, #tpu.memory_space<vmem>>, vector<1000x1000xbf16>
    %cst = arith.constant dense<0.000000e+00> : vector<8x1000xf32>
    %5 = tpu.matmul %1, %4, %cst {dimension_numbers = #tpu.dot_dimension_numbers<[1], [0], [0], [1], [0, 0, 1, 1], [], []>} : vector<8x1000xbf16>, vector<1000x1000xbf16>, vector<8x1000xf32> -> vector<8x1000xf32>
    %c1000 = arith.constant 1000 : index
    %c0_5 = arith.constant 0 : index
    %6 = vector.load %arg3[%c1000, %c0_5] : memref<2000x1000xbf16, #tpu.memory_space<vmem>>, vector<1000x1000xbf16>
    %cst_6 = arith.constant dense<0.000000e+00> : vector<8x1000xf32>
    %7 = tpu.matmul %3, %6, %cst_6 {dimension_numbers = #tpu.dot_dimension_numbers<[1], [0], [0], [1], [0, 0, 1, 1], [], []>} : vector<8x1000xbf16>, vector<1000x1000xbf16>, vector<8x1000xf32> -> vector<8x1000xf32>
    %8 = arith.addf %5, %7 : vector<8x1000xf32>
    %c0_7 = arith.constant 0 : index
    %c0_8 = arith.constant 0 : index
    %9 = vector.load %arg4[%c0_7, %c0_8] : memref<1x1000xf32, #tpu.memory_space<vmem>>, vector<1x1000xf32>
    %10 = vector.broadcast %9 : vector<1x1000xf32> to vector<8x1000xf32>
    %11 = arith.addf %8, %10 : vector<8x1000xf32>
    %cst_9 = arith.constant 0.000000e+00 : f32
    %12 = vector.broadcast %cst_9 : f32 to vector<8x1000xf32>
    %13 = arith.maximumf %11, %12 : vector<8x1000xf32>
    %c0_10 = arith.constant 0 : index
    %c0_11 = arith.constant 0 : index
    %14 = vector.load %arg5[%c0_10, %c0_11] : memref<1x1000xf32, #tpu.memory_space<vmem>>, vector<1x1000xf32>
    %15 = vector.broadcast %14 : vector<1x1000xf32> to vector<8x1000xf32>
    %16 = arith.mulf %13, %15 : vector<8x1000xf32>
    %cst_12 = arith.constant dense<0.000000e+00> : vector<8xf32>
    %17 = vector.multi_reduction <add>, %16, %cst_12 [1] : vector<8x1000xf32> to vector<8xf32>
    %18 = vector.shape_cast %17 : vector<8xf32> to vector<8x1xf32>
    %c0_13 = arith.constant 0 : index
    %c0_14 = arith.constant 0 : index
    %19 = vector.load %arg6[%c0_13, %c0_14] : memref<1x1xf32, #tpu.memory_space<vmem>>, vector<1x1xf32>
    %20 = vector.broadcast %19 : vector<1x1xf32> to vector<8x1xf32>
    %21 = arith.addf %18, %20 : vector<8x1xf32>
    %c0_15 = arith.constant 0 : index
    %c0_16 = arith.constant 0 : index
    %22 = vector.load %arg7[%c0_15, %c0_16] : memref<8x1xf32, #tpu.memory_space<vmem>>, vector<8x1xf32>
    tpu.vector_store %arg7[%c0_15, %c0_16], %21 {strides = array<i32>} : memref<8x1xf32, #tpu.memory_space<vmem>>, vector<8x1xf32>,
    return
  }
  func.func @transform_0(%arg0: i32) -> (i32, i32) {
    %c0_i32 = arith.constant 0 : i32
    %c0_i32_0 = arith.constant 0 : i32
    return %arg0, %c0_i32 : i32, i32
  }
  func.func @transform_1(%arg0: i32) -> (i32, i32) {
    %c0_i32 = arith.constant 0 : i32
    %c0_i32_0 = arith.constant 0 : i32
    return %arg0, %c0_i32 : i32, i32
  }
  func.func @transform_2(%arg0: i32) -> (i32, i32) {
    %c0_i32 = arith.constant 0 : i32
    %c0_i32_0 = arith.constant 0 : i32
    %c0_i32_1 = arith.constant 0 : i32
    return %c0_i32, %c0_i32_0 : i32, i32
  }
  func.func @transform_3(%arg0: i32) -> (i32, i32) {
    %c0_i32 = arith.constant 0 : i32
    %c0_i32_0 = arith.constant 0 : i32
    %c0_i32_1 = arith.constant 0 : i32
    return %c0_i32, %c0_i32_0 : i32, i32
  }
  func.func @transform_4(%arg0: i32) -> (i32, i32) {
    %c0_i32 = arith.constant 0 : i32
    %c0_i32_0 = arith.constant 0 : i32
    %c0_i32_1 = arith.constant 0 : i32
    return %c0_i32, %c0_i32_0 : i32, i32
  }
  func.func @transform_5(%arg0: i32) -> (i32, i32) {
    %c0_i32 = arith.constant 0 : i32
    %c0_i32_0 = arith.constant 0 : i32
    %c0_i32_1 = arith.constant 0 : i32
    return %c0_i32, %c0_i32_0 : i32, i32
  }
  func.func @transform_6(%arg0: i32) -> (i32, i32) {
    %c0_i32 = arith.constant 0 : i32
    %c0_i32_0 = arith.constant 0 : i32
    return %arg0, %c0_i32 : i32, i32
  }
}

</mosaic_0001>

<llo_original>
// kernel: tpu_custom_call.1
$region0: #{tpu_custom_call.1}
  #allocation0 [shape = 'u32[]', space=smem, size = 0x4, offset = 0x4, fixed_abs, tag = 'smem constant byte address 0x4 - core index']
  #allocation1 [shape = 'u32[144,128]{1,0:T(1,128)}', space=vmem, size = 0x12000, scoped, tag = 'internal scratch']
  #allocation2 [shape = 'f32[1,1]{1,0:T(1,128)S(1)}', space=vmem, size = 0x200, scoped, tag = 'scoped memory for tpu_custom_call.1']
  %s0 = inlined_call_operand.hbm [shape: f32[8,1000], index: 0, kind: input, shape index: {}]
  %s1 = inlined_call_operand.hbm [shape: f32[8,1000], index: 1, kind: input, shape index: {}]
  %s2 = inlined_call_operand.hbm [shape: bf16[2000,1000], index: 2, kind: input, shape index: {}]
  %s3 = inlined_call_operand.hbm [shape: f32[1,1000], index: 3, kind: input, shape index: {}]
  %s4 = inlined_call_operand.hbm [shape: f32[1,1000], index: 4, kind: input, shape index: {}]
  %s5 = inlined_call_operand.<no memory space> [shape: f32[1,1], index: 5, kind: input, shape index: {}]
  %s6 = inlined_call_operand.vmem [shape: f32[8,1], index: 6, kind: output, shape index: {}]
  %s7 = sld [smem:[#allocation0]]
  $region54: #{tpu_custom_call.1} parent=0
    _
  %s9 = ssub.s32 1, %s7
  %s10 = scalar_select 0, %s9, %s7
  %v11 = vstv %s5
  %12 = vst [vmem:[#allocation2] sm:$0x1] %v11
  $region1: #{tpu_custom_call.1} parent=0
    #allocation3 [shape = 'u8[32768]{0}', space=vmem, size = 0x8000, scoped, tag = 'input window, operand 0, single buffered']
    #allocation4 [shape = 's32[1]{0}', space=sflag, size = 0x4, scoped, tag = 'scoped memory for tpu_custom_call.1']
    #allocation5 [shape = 'u8[32768]{0}', space=vmem, size = 0x8000, scoped, tag = 'input window, operand 1, single buffered']
    #allocation6 [shape = 's32[1]{0}', space=sflag, size = 0x4, scoped, tag = 'scoped memory for tpu_custom_call.1']
    #allocation7 [shape = 'u8[4096000]{0}', space=vmem, size = 0x3e8000, scoped, tag = 'input window, operand 2, single buffered']
    #allocation8 [shape = 'u8[4096]{0}', space=vmem, size = 0x1000, scoped, tag = 'input window, operand 3, single buffered']
    #allocation9 [shape = 's32[1]{0}', space=sflag, size = 0x4, scoped, tag = 'scoped memory for tpu_custom_call.1']
    #allocation10 [shape = 'u8[4096]{0}', space=vmem, size = 0x1000, scoped, tag = 'input window, operand 4, single buffered']
    %13 = vsyncpa [#allocation4], 0
    %14 = vsyncpa [#allocation6], 0
    %15 = vsyncpa [#allocation9], 0
    // Predicated region
    $region2: #{tpu_custom_call.1} parent=1 // pred_check
      _
    $region3: #{tpu_custom_call.1} parent=1 // pred_check_branch
      %17 = sbr.rel (0) target = $region5
    $region4: #{tpu_custom_call.1} parent=1 // pred_region
      %s19 = ssub.s32 1024, 1024
      %20 = vsyncadd [#allocation4], %s19
      %s22 = sshll.u32 [#allocation3], 4
      %s23 = int_to_ptr.vmem [resolvable:$true] %s22
      %25 = dma.hbm_to_vmem [thread:$0]  %s0, 1024, %s23, [#allocation4]
    $region5: #{tpu_custom_call.1} parent=1 // pred_fallthru
      _
    // Predicated region
    $region6: #{tpu_custom_call.1} parent=1 // pred_check
      _
    $region7: #{tpu_custom_call.1} parent=1 // pred_check_branch
      %27 = sbr.rel (0) target = $region9
    $region8: #{tpu_custom_call.1} parent=1 // pred_region
      %s29 = ssub.s32 1024, 1024
      %30 = vsyncadd [#allocation6], %s29
      %s32 = sshll.u32 [#allocation5], 4
      %s33 = int_to_ptr.vmem [resolvable:$true] %s32
      %35 = dma.hbm_to_vmem [thread:$0]  %s1, 1024, %s33, [#allocation6]
    $region9: #{tpu_custom_call.1} parent=1 // pred_fallthru
      _
    // Predicated region
    $region10: #{tpu_custom_call.1} parent=1 // pred_check
      _
    $region11: #{tpu_custom_call.1} parent=1 // pred_check_branch
      %37 = sbr.rel (0) target = $region13
    $region12: #{tpu_custom_call.1} parent=1 // pred_region
      %s39 = ssub.s32 128000, 128000
      %40 = vsyncadd [#allocation6], %s39
      %s41 = sshll.u32 [#allocation7], 4
      %s42 = int_to_ptr.vmem [resolvable:$true] %s41
      %47 = dma.hbm_to_vmem [thread:$0]  %s2, 128000, %s42, [#allocation6], 512, 512, 32
    $region13: #{tpu_custom_call.1} parent=1 // pred_fallthru
      _
    // Predicated region
    $region14: #{tpu_custom_call.1} parent=1 // pred_check
      _
    $region15: #{tpu_custom_call.1} parent=1 // pred_check_branch
      %49 = sbr.rel (0) target = $region17
    $region16: #{tpu_custom_call.1} parent=1 // pred_region
      %s51 = ssub.s32 128, 128
      %52 = vsyncadd [#allocation9], %s51
      %s54 = sshll.u32 [#allocation8], 4
      %s55 = int_to_ptr.vmem [resolvable:$true] %s54
      %57 = dma.hbm_to_vmem [thread:$0]  %s3, 128, %s55, [#allocation9]
    $region17: #{tpu_custom_call.1} parent=1 // pred_fallthru
      _
    // Predicated region
    $region18: #{tpu_custom_call.1} parent=1 // pred_check
      _
    $region19: #{tpu_custom_call.1} parent=1 // pred_check_branch
      %59 = sbr.rel (0) target = $region21
    $region20: #{tpu_custom_call.1} parent=1 // pred_region
      %s61 = ssub.s32 128, 128
      %62 = vsyncadd [#allocation9], %s61
      %s64 = sshll.u32 [#allocation10], 4
      %s65 = int_to_ptr.vmem [resolvable:$true] %s64
      %67 = dma.hbm_to_vmem [thread:$0]  %s4, 128, %s65, [#allocation9]
    $region21: #{tpu_custom_call.1} parent=1 // pred_fallthru
      _
    // Predicated region
    $region22: #{tpu_custom_call.1} parent=1 // pred_check
      _
    $region23: #{tpu_custom_call.1} parent=1 // pred_check_branch
      %69 = sbr.rel (0) target = $region25
    $region24: #{tpu_custom_call.1} parent=1 // pred_region
      _
    $region25: #{tpu_custom_call.1} parent=1 // pred_fallthru
      _
    // Predicated region
    $region26: #{tpu_custom_call.1} parent=1 // pred_check
      _
    $region27: #{tpu_custom_call.1} parent=1 // pred_check_branch
      %71 = sbr.rel (0) target = $region29
    $region28: #{tpu_custom_call.1} parent=1 // pred_region
      %72 = dma.done [#allocation4], 1024
    $region29: #{tpu_custom_call.1} parent=1 // pred_fallthru
      _
    // Predicated region
    $region30: #{tpu_custom_call.1} parent=1 // pred_check
      _
    $region31: #{tpu_custom_call.1} parent=1 // pred_check_branch
      %74 = sbr.rel (0) target = $region33
    $region32: #{tpu_custom_call.1} parent=1 // pred_region
      %75 = dma.done [#allocation6], 1024
    $region33: #{tpu_custom_call.1} parent=1 // pred_fallthru
      _
    // Predicated region
    $region34: #{tpu_custom_call.1} parent=1 // pred_check
      _
    $region35: #{tpu_custom_call.1} parent=1 // pred_check_branch
      %77 = sbr.rel (0) target = $region37
    $region36: #{tpu_custom_call.1} parent=1 // pred_region
      %78 = dma.done [#allocation6], 128000
    $region37: #{tpu_custom_call.1} parent=1 // pred_fallthru
      _
    // Predicated region
    $region38: #{tpu_custom_call.1} parent=1 // pred_check
      _
    $region39: #{tpu_custom_call.1} parent=1 // pred_check_branch
      %80 = sbr.rel (0) target = $region41
    $region40: #{tpu_custom_call.1} parent=1 // pred_region
      %81 = dma.done [#allocation9], 128
    $region41: #{tpu_custom_call.1} parent=1 // pred_fallthru
      _
    // Predicated region
    $region42: #{tpu_custom_call.1} parent=1 // pred_check
      _
    $region43: #{tpu_custom_call.1} parent=1 // pred_check_branch
      %83 = sbr.rel (0) target = $region45
    $region44: #{tpu_custom_call.1} parent=1 // pred_region
      %84 = dma.done [#allocation9], 128
    $region45: #{tpu_custom_call.1} parent=1 // pred_fallthru
      _
    %v86 = vld [vmem:[#allocation3] sm:$0xff]
    %v87 = vld [vmem:[#allocation3 + $0x8] sm:$0xff]
    %v88 = vld [vmem:[#allocation3 + $0x10] sm:$0xff]
    %v89 = vld [vmem:[#allocation3 + $0x18] sm:$0xff]
    %v90 = vld [vmem:[#allocation3 + $0x20] sm:$0xff]
    %v91 = vld [vmem:[#allocation3 + $0x28] sm:$0xff]
    %v92 = vld [vmem:[#allocation3 + $0x30] sm:$0xff]
    %v93 = vld [vmem:[#allocation3 + $0x38] sm:$0xff]
    %v94 = vpack.c.bf16 %v86, %v86
    %v95 = vpack.c.bf16 %v87, %v87
    %v96 = vpack.c.bf16 %v88, %v88
    %v97 = vpack.c.bf16 %v89, %v89
    %v98 = vpack.c.bf16 %v90, %v90
    %v99 = vpack.c.bf16 %v91, %v91
    %v100 = vpack.c.bf16 %v92, %v92
    %v101 = vpack.c.bf16 %v93, %v93
    %v102 = vld [vmem:[#allocation5] sm:$0xff]
    %v103 = vld [vmem:[#allocation5 + $0x8] sm:$0xff]
    %v104 = vld [vmem:[#allocation5 + $0x10] sm:$0xff]
    %v105 = vld [vmem:[#allocation5 + $0x18] sm:$0xff]
    %v106 = vld [vmem:[#allocation5 + $0x20] sm:$0xff]
    %v107 = vld [vmem:[#allocation5 + $0x28] sm:$0xff]
    %v108 = vld [vmem:[#allocation5 + $0x30] sm:$0xff]
    %v109 = vld [vmem:[#allocation5 + $0x38] sm:$0xff]
    %v110 = vpack.c.bf16 %v102, %v102
    %v111 = vpack.c.bf16 %v103, %v103
    %v112 = vpack.c.bf16 %v104, %v104
    %v113 = vpack.c.bf16 %v105, %v105
    %v114 = vpack.c.bf16 %v106, %v106
    %v115 = vpack.c.bf16 %v107, %v107
    %v116 = vpack.c.bf16 %v108, %v108
    %v117 = vpack.c.bf16 %v109, %v109
    %v118 = vld [vmem:[#allocation7] sm:$0xff]
    %v119 = vld [vmem:[#allocation7 + $0x8] sm:$0xff]
    %v120 = vld [vmem:[#allocation7 + $0x10] sm:$0xff]
    %v121 = vld [vmem:[#allocation7 + $0x18] sm:$0xff]
    %v122 = vld [vmem:[#allocation7 + $0x20] sm:$0xff]
    %v123 = vld [vmem:[#allocation7 + $0x28] sm:$0xff]
    %v124 = vld [vmem:[#allocation7 + $0x30] sm:$0xff]
    %v125 = vld [vmem:[#allocation7 + $0x38] sm:$0xff]
    %v126 = vld [vmem:[#allocation7 + $0x40] sm:$0xff]
    %v127 = vld [vmem:[#allocation7 + $0x48] sm:$0xff]
    %v128 = vld [vmem:[#allocation7 + $0x50] sm:$0xff]
    %v129 = vld [vmem:[#allocation7 + $0x58] sm:$0xff]
    %v130 = vld [vmem:[#allocation7 + $0x60] sm:$0xff]
    %v131 = vld [vmem:[#allocation7 + $0x68] sm:$0xff]
    %v132 = vld [vmem:[#allocation7 + $0x70] sm:$0xff]
    %v133 = vld [vmem:[#allocation7 + $0x78] sm:$0xff]
    %v134 = vld [vmem:[#allocation7 + $0x80] sm:$0xff]
    %v135 = vld [vmem:[#allocation7 + $0x88] sm:$0xff]
    %v136 = vld [vmem:[#allocation7 + $0x90] sm:$0xff]
    %v137 = vld [vmem:[#allocation7 + $0x98] sm:$0xff]
    %v138 = vld [vmem:[#allocation7 + $0xa0] sm:$0xff]
    %v139 = vld [vmem:[#allocation7 + $0xa8] sm:$0xff]
    %v140 = vld [vmem:[#allocation7 + $0xb0] sm:$0xff]
    %v141 = vld [vmem:[#allocation7 + $0xb8] sm:$0xff]
    %v142 = vld [vmem:[#allocation7 + $0xc0] sm:$0xff]
    %v143 = vld [vmem:[#allocation7 + $0xc8] sm:$0xff]
    %v144 = vld [vmem:[#allocation7 + $0xd0] sm:$0xff]
    %v145 = vld [vmem:[#allocation7 + $0xd8] sm:$0xff]
    %v146 = vld [vmem:[#allocation7 + $0xe0] sm:$0xff]
    %v147 = vld [vmem:[#allocation7 + $0xe8] sm:$0xff]
    %v148 = vld [vmem:[#allocation7 + $0xf0] sm:$0xff]
    %v149 = vld [vmem:[#allocation7 + $0xf8] sm:$0xff]
    %v150 = vld [vmem:[#allocation7 + $0x100] sm:$0xff]
    %v151 = vld [vmem:[#allocation7 + $0x108] sm:$0xff]
    %v152 = vld [vmem:[#allocation7 + $0x110] sm:$0xff]
    %v153 = vld [vmem:[#allocation7 + $0x118] sm:$0xff]
    %v154 = vld [vmem:[#allocation7 + $0x120] sm:$0xff]
    %v155 = vld [vmem:[#allocation7 + $0x128] sm:$0xff]
    %v156 = vld [vmem:[#allocation7 + $0x130] sm:$0xff]
    %v157 = vld [vmem:[#allocation7 + $0x138] sm:$0xff]
    %v158 = vld [vmem:[#allocation7 + $0x140] sm:$0xff]
    %v159 = vld [vmem:[#allocation7 + $0x148] sm:$0xff]
    %v160 = vld [vmem:[#allocation7 + $0x150] sm:$0xff]
    %v161 = vld [vmem:[#allocation7 + $0x158] sm:$0xff]
    %v162 = vld [vmem:[#allocation7 + $0x160] sm:$0xff]
    %v163 = vld [vmem:[#allocation7 + $0x168] sm:$0xff]
    %v164 = vld [vmem:[#allocation7 + $0x170] sm:$0xff]
    %v165 = vld [vmem:[#allocation7 + $0x178] sm:$0xff]
    %v166 = vld [vmem:[#allocation7 + $0x180] sm:$0xff]
    %v167 = vld [vmem:[#allocation7 + $0x188] sm:$0xff]
    %v168 = vld [vmem:[#allocation7 + $0x190] sm:$0xff]
    %v169 = vld [vmem:[#allocation7 + $0x198] sm:$0xff]
    %v170 = vld [vmem:[#allocation7 + $0x1a0] sm:$0xff]
    %v171 = vld [vmem:[#allocation7 + $0x1a8] sm:$0xff]
    %v172 = vld [vmem:[#allocation7 + $0x1b0] sm:$0xff]
    %v173 = vld [vmem:[#allocation7 + $0x1b8] sm:$0xff]
    %v174 = vld [vmem:[#allocation7 + $0x1c0] sm:$0xff]
    %v175 = vld [vmem:[#allocation7 + $0x1c8] sm:$0xff]
    %v176 = vld [vmem:[#allocation7 + $0x1d0] sm:$0xff]
    %v177 = vld [vmem:[#allocation7 + $0x1d8] sm:$0xff]
    %v178 = vld [vmem:[#allocation7 + $0x1e0] sm:$0xff]
    %v179 = vld [vmem:[#allocation7 + $0x1e8] sm:$0xff]
    %v180 = vld [vmem:[#allocation7 + $0x1f0] sm:$0xff]
    %v181 = vld [vmem:[#allocation7 + $0x1f8] sm:$0xff]
    %v182 = vld [vmem:[#allocation7 + $0x200] sm:$0xff]
    %v183 = vld [vmem:[#allocation7 + $0x208] sm:$0xff]
    %v184 = vld [vmem:[#allocation7 + $0x210] sm:$0xff]
    %v185 = vld [vmem:[#allocation7 + $0x218] sm:$0xff]
    %v186 = vld [vmem:[#allocation7 + $0x220] sm:$0xff]
    %v187 = vld [vmem:[#allocation7 + $0x228] sm:$0xff]
    %v188 = vld [vmem:[#allocation7 + $0x230] sm:$0xff]
    %v189 = vld [vmem:[#allocation7 + $0x238] sm:$0xff]
    %v190 = vld [vmem:[#allocation7 + $0x240] sm:$0xff]
    %v191 = vld [vmem:[#allocation7 + $0x248] sm:$0xff]
    %v192 = vld [vmem:[#allocation7 + $0x250] sm:$0xff]
    %v193 = vld [vmem:[#allocation7 + $0x258] sm:$0xff]
    %v194 = vld [vmem:[#allocation7 + $0x260] sm:$0xff]
    %v195 = vld [vmem:[#allocation7 + $0x268] sm:$0xff]
    %v196 = vld [vmem:[#allocation7 + $0x270] sm:$0xff]
    %v197 = vld [vmem:[#allocation7 + $0x278] sm:$0xff]
    %v198 = vld [vmem:[#allocation7 + $0x280] sm:$0xff]
    %v199 = vld [vmem:[#allocation7 + $0x288] sm:$0xff]
    %v200 = vld [vmem:[#allocation7 + $0x290] sm:$0xff]
    %v201 = vld [vmem:[#allocation7 + $0x298] sm:$0xff]
    %v202 = vld [vmem:[#allocation7 + $0x2a0] sm:$0xff]
    %v203 = vld [vmem:[#allocation7 + $0x2a8] sm:$0xff]
    %v204 = vld [vmem:[#allocation7 + $0x2b0] sm:$0xff]
    %v205 = vld [vmem:[#allocation7 + $0x2b8] sm:$0xff]
    %v206 = vld [vmem:[#allocation7 + $0x2c0] sm:$0xff]
    %v207 = vld [vmem:[#allocation7 + $0x2c8] sm:$0xff]
    %v208 = vld [vmem:[#allocation7 + $0x2d0] sm:$0xff]
    %v209 = vld [vmem:[#allocation7 + $0x2d8] sm:$0xff]
    %v210 = vld [vmem:[#allocation7 + $0x2e0] sm:$0xff]
    %v211 = vld [vmem:[#allocation7 + $0x2e8] sm:$0xff]
    %v212 = vld [vmem:[#allocation7 + $0x2f0] sm:$0xff]
    %v213 = vld [vmem:[#allocation7 + $0x2f8] sm:$0xff]
    %v214 = vld [vmem:[#allocation7 + $0x300] sm:$0xff]
    %v215 = vld [vmem:[#allocation7 + $0x308] sm:$0xff]
    %v216 = vld [vmem:[#allocation7 + $0x310] sm:$0xff]
    %v217 = vld [vmem:[#allocation7 + $0x318] sm:$0xff]
    %v218 = vld [vmem:[#allocation7 + $0x320] sm:$0xff]
    %v219 = vld [vmem:[#allocation7 + $0x328] sm:$0xff]
    %v220 = vld [vmem:[#allocation7 + $0x330] sm:$0xff]
    %v221 = vld [vmem:[#allocation7 + $0x338] sm:$0xff]
    %v222 = vld [vmem:[#allocation7 + $0x340] sm:$0xff]
    %v223 = vld [vmem:[#allocation7 + $0x348] sm:$0xff]
    %v224 = vld [vmem:[#allocation7 + $0x350] sm:$0xff]
    %v225 = vld [vmem:[#allocation7 + $0x358] sm:$0xff]
    %v226 = vld [vmem:[#allocation7 + $0x360] sm:$0xff]
    %v227 = vld [vmem:[#allocation7 + $0x368] sm:$0xff]
    %v228 = vld [vmem:[#allocation7 + $0x370] sm:$0xff]
    %v229 = vld [vmem:[#allocation7 + $0x378] sm:$0xff]
    %v230 = vld [vmem:[#allocation7 + $0x380] sm:$0xff]
    %v231 = vld [vmem:[#allocation7 + $0x388] sm:$0xff]
    %v232 = vld [vmem:[#allocation7 + $0x390] sm:$0xff]
    %v233 = vld [vmem:[#allocation7 + $0x398] sm:$0xff]
    %v234 = vld [vmem:[#allocation7 + $0x3a0] sm:$0xff]
    %v235 = vld [vmem:[#allocation7 + $0x3a8] sm:$0xff]
    %v236 = vld [vmem:[#allocation7 + $0x3b0] sm:$0xff]
    %v237 = vld [vmem:[#allocation7 + $0x3b8] sm:$0xff]
    %v238 = vld [vmem:[#allocation7 + $0x3c0] sm:$0xff]
    %v239 = vld [vmem:[#allocation7 + $0x3c8] sm:$0xff]
    %v240 = vld [vmem:[#allocation7 + $0x3d0] sm:$0xff]
    %v241 = vld [vmem:[#allocation7 + $0x3d8] sm:$0xff]
    %v242 = vld [vmem:[#allocation7 + $0x3e0] sm:$0xff]
    %v243 = vld [vmem:[#allocation7 + $0x3e8] sm:$0xff]
    %v244 = vld [vmem:[#allocation7 + $0x3f0] sm:$0xff]
    %v245 = vld [vmem:[#allocation7 + $0x3f8] sm:$0xff]
    %v246 = vld [vmem:[#allocation7 + $0x400] sm:$0xff]
    %v247 = vld [vmem:[#allocation7 + $0x408] sm:$0xff]
    %v248 = vld [vmem:[#allocation7 + $0x410] sm:$0xff]
    %v249 = vld [vmem:[#allocation7 + $0x418] sm:$0xff]
    %v250 = vld [vmem:[#allocation7 + $0x420] sm:$0xff]
    %v251 = vld [vmem:[#allocation7 + $0x428] sm:$0xff]
    %v252 = vld [vmem:[#allocation7 + $0x430] sm:$0xff]
    %v253 = vld [vmem:[#allocation7 + $0x438] sm:$0xff]
    %v254 = vld [vmem:[#allocation7 + $0x440] sm:$0xff]
    %v255 = vld [vmem:[#allocation7 + $0x448] sm:$0xff]
    %v256 = vld [vmem:[#allocation7 + $0x450] sm:$0xff]
    %v257 = vld [vmem:[#allocation7 + $0x458] sm:$0xff]
    %v258 = vld [vmem:[#allocation7 + $0x460] sm:$0xff]
    %v259 = vld [vmem:[#allocation7 + $0x468] sm:$0xff]
    %v260 = vld [vmem:[#allocation7 + $0x470] sm:$0xff]
    %v261 = vld [vmem:[#allocation7 + $0x478] sm:$0xff]
    %v262 = vld [vmem:[#allocation7 + $0x480] sm:$0xff]
    %v263 = vld [vmem:[#allocation7 + $0x488] sm:$0xff]
    %v264 = vld [vmem:[#allocation7 + $0x490] sm:$0xff]
    %v265 = vld [vmem:[#allocation7 + $0x498] sm:$0xff]
    %v266 = vld [vmem:[#allocation7 + $0x4a0] sm:$0xff]
    %v267 = vld [vmem:[#allocation7 + $0x4a8] sm:$0xff]
    %v268 = vld [vmem:[#allocation7 + $0x4b0] sm:$0xff]
    %v269 = vld [vmem:[#allocation7 + $0x4b8] sm:$0xff]
    %v270 = vld [vmem:[#allocation7 + $0x4c0] sm:$0xff]
    %v271 = vld [vmem:[#allocation7 + $0x4c8] sm:$0xff]
    %v272 = vld [vmem:[#allocation7 + $0x4d0] sm:$0xff]
    %v273 = vld [vmem:[#allocation7 + $0x4d8] sm:$0xff]
    %v274 = vld [vmem:[#allocation7 + $0x4e0] sm:$0xff]
    %v275 = vld [vmem:[#allocation7 + $0x4e8] sm:$0xff]
    %v276 = vld [vmem:[#allocation7 + $0x4f0] sm:$0xff]
    %v277 = vld [vmem:[#allocation7 + $0x4f8] sm:$0xff]
    %v278 = vld [vmem:[#allocation7 + $0x500] sm:$0xff]
    %v279 = vld [vmem:[#allocation7 + $0x508] sm:$0xff]
    %v280 = vld [vmem:[#allocation7 + $0x510] sm:$0xff]
    %v281 = vld [vmem:[#allocation7 + $0x518] sm:$0xff]
    %v282 = vld [vmem:[#allocation7 + $0x520] sm:$0xff]
    %v283 = vld [vmem:[#allocation7 + $0x528] sm:$0xff]
    %v284 = vld [vmem:[#allocation7 + $0x530] sm:$0xff]
    %v285 = vld [vmem:[#allocation7 + $0x538] sm:$0xff]
    %v286 = vld [vmem:[#allocation7 + $0x540] sm:$0xff]
    %v287 = vld [vmem:[#allocation7 + $0x548] sm:$0xff]
    %v288 = vld [vmem:[#allocation7 + $0x550] sm:$0xff]
    %v289 = vld [vmem:[#allocation7 + $0x558] sm:$0xff]
    %v290 = vld [vmem:[#allocation7 + $0x560] sm:$0xff]
    %v291 = vld [vmem:[#allocation7 + $0x568] sm:$0xff]
    %v292 = vld [vmem:[#allocation7 + $0x570] sm:$0xff]
    %v293 = vld [vmem:[#allocation7 + $0x578] sm:$0xff]
    %v294 = vld [vmem:[#allocation7 + $0x580] sm:$0xff]
    %v295 = vld [vmem:[#allocation7 + $0x588] sm:$0xff]
    %v296 = vld [vmem:[#allocation7 + $0x590] sm:$0xff]
    %v297 = vld [vmem:[#allocation7 + $0x598] sm:$0xff]
    %v298 = vld [vmem:[#allocation7 + $0x5a0] sm:$0xff]
    %v299 = vld [vmem:[#allocation7 + $0x5a8] sm:$0xff]
    %v300 = vld [vmem:[#allocation7 + $0x5b0] sm:$0xff]
    %v301 = vld [vmem:[#allocation7 + $0x5b8] sm:$0xff]
    %v302 = vld [vmem:[#allocation7 + $0x5c0] sm:$0xff]
    %v303 = vld [vmem:[#allocation7 + $0x5c8] sm:$0xff]
    %v304 = vld [vmem:[#allocation7 + $0x5d0] sm:$0xff]
    %v305 = vld [vmem:[#allocation7 + $0x5d8] sm:$0xff]
    %v306 = vld [vmem:[#allocation7 + $0x5e0] sm:$0xff]
    %v307 = vld [vmem:[#allocation7 + $0x5e8] sm:$0xff]
    %v308 = vld [vmem:[#allocation7 + $0x5f0] sm:$0xff]
    %v309 = vld [vmem:[#allocation7 + $0x5f8] sm:$0xff]
    %v310 = vld [vmem:[#allocation7 + $0x600] sm:$0xff]
    %v311 = vld [vmem:[#allocation7 + $0x608] sm:$0xff]
    %v312 = vld [vmem:[#allocation7 + $0x610] sm:$0xff]
    %v313 = vld [vmem:[#allocation7 + $0x618] sm:$0xff]
    %v314 = vld [vmem:[#allocation7 + $0x620] sm:$0xff]
    %v315 = vld [vmem:[#allocation7 + $0x628] sm:$0xff]
    %v316 = vld [vmem:[#allocation7 + $0x630] sm:$0xff]
    %v317 = vld [vmem:[#allocation7 + $0x638] sm:$0xff]
    %v318 = vld [vmem:[#allocation7 + $0x640] sm:$0xff]
    %v319 = vld [vmem:[#allocation7 + $0x648] sm:$0xff]
    %v320 = vld [vmem:[#allocation7 + $0x650] sm:$0xff]
    %v321 = vld [vmem:[#allocation7 + $0x658] sm:$0xff]
    %v322 = vld [vmem:[#allocation7 + $0x660] sm:$0xff]
    %v323 = vld [vmem:[#allocation7 + $0x668] sm:$0xff]
    %v324 = vld [vmem:[#allocation7 + $0x670] sm:$0xff]
    %v325 = vld [vmem:[#allocation7 + $0x678] sm:$0xff]
    %v326 = vld [vmem:[#allocation7 + $0x680] sm:$0xff]
    %v327 = vld [vmem:[#allocation7 + $0x688] sm:$0xff]
    %v328 = vld [vmem:[#allocation7 + $0x690] sm:$0xff]
    %v329 = vld [vmem:[#allocation7 + $0x698] sm:$0xff]
    %v330 = vld [vmem:[#allocation7 + $0x6a0] sm:$0xff]
    %v331 = vld [vmem:[#allocation7 + $0x6a8] sm:$0xff]
    %v332 = vld [vmem:[#allocation7 + $0x6b0] sm:$0xff]
    %v333 = vld [vmem:[#allocation7 + $0x6b8] sm:$0xff]
    %v334 = vld [vmem:[#allocation7 + $0x6c0] sm:$0xff]
    %v335 = vld [vmem:[#allocation7 + $0x6c8] sm:$0xff]
    %v336 = vld [vmem:[#allocation7 + $0x6d0] sm:$0xff]
    %v337 = vld [vmem:[#allocation7 + $0x6d8] sm:$0xff]
    %v338 = vld [vmem:[#allocation7 + $0x6e0] sm:$0xff]
    %v339 = vld [vmem:[#allocation7 + $0x6e8] sm:$0xff]
    %v340 = vld [vmem:[#allocation7 + $0x6f0] sm:$0xff]
    %v341 = vld [vmem:[#allocation7 + $0x6f8] sm:$0xff]
    %v342 = vld [vmem:[#allocation7 + $0x700] sm:$0xff]
    %v343 = vld [vmem:[#allocation7 + $0x708] sm:$0xff]
    %v344 = vld [vmem:[#allocation7 + $0x710] sm:$0xff]
    %v345 = vld [vmem:[#allocation7 + $0x718] sm:$0xff]
    %v346 = vld [vmem:[#allocation7 + $0x720] sm:$0xff]
    %v347 = vld [vmem:[#allocation7 + $0x728] sm:$0xff]
    %v348 = vld [vmem:[#allocation7 + $0x730] sm:$0xff]
    %v349 = vld [vmem:[#allocation7 + $0x738] sm:$0xff]
    %v350 = vld [vmem:[#allocation7 + $0x740] sm:$0xff]
    %v351 = vld [vmem:[#allocation7 + $0x748] sm:$0xff]
    %v352 = vld [vmem:[#allocation7 + $0x750] sm:$0xff]
    %v353 = vld [vmem:[#allocation7 + $0x758] sm:$0xff]
    %v354 = vld [vmem:[#allocation7 + $0x760] sm:$0xff]
    %v355 = vld [vmem:[#allocation7 + $0x768] sm:$0xff]
    %v356 = vld [vmem:[#allocation7 + $0x770] sm:$0xff]
    %v357 = vld [vmem:[#allocation7 + $0x778] sm:$0xff]
    %v358 = vld [vmem:[#allocation7 + $0x780] sm:$0xff]
    %v359 = vld [vmem:[#allocation7 + $0x788] sm:$0xff]
    %v360 = vld [vmem:[#allocation7 + $0x790] sm:$0xff]
    %v361 = vld [vmem:[#allocation7 + $0x798] sm:$0xff]
    %v362 = vld [vmem:[#allocation7 + $0x7a0] sm:$0xff]
    %v363 = vld [vmem:[#allocation7 + $0x7a8] sm:$0xff]
    %v364 = vld [vmem:[#allocation7 + $0x7b0] sm:$0xff]
    %v365 = vld [vmem:[#allocation7 + $0x7b8] sm:$0xff]
    %v366 = vld [vmem:[#allocation7 + $0x7c0] sm:$0xff]
    %v367 = vld [vmem:[#allocation7 + $0x7c8] sm:$0xff]
    %v368 = vld [vmem:[#allocation7 + $0x7d0] sm:$0xff]
    %v369 = vld [vmem:[#allocation7 + $0x7d8] sm:$0xff]
    %v370 = vld [vmem:[#allocation7 + $0x7e0] sm:$0xff]
    %v371 = vld [vmem:[#allocation7 + $0x7e8] sm:$0xff]
    %v372 = vld [vmem:[#allocation7 + $0x7f0] sm:$0xff]
    %v373 = vld [vmem:[#allocation7 + $0x7f8] sm:$0xff]
    %v374 = vld [vmem:[#allocation7 + $0x800] sm:$0xff]
    %v375 = vld [vmem:[#allocation7 + $0x808] sm:$0xff]
    %v376 = vld [vmem:[#allocation7 + $0x810] sm:$0xff]
    %v377 = vld [vmem:[#allocation7 + $0x818] sm:$0xff]
    %v378 = vld [vmem:[#allocation7 + $0x820] sm:$0xff]
    %v379 = vld [vmem:[#allocation7 + $0x828] sm:$0xff]
    %v380 = vld [vmem:[#allocation7 + $0x830] sm:$0xff]
    %v381 = vld [vmem:[#allocation7 + $0x838] sm:$0xff]
    %v382 = vld [vmem:[#allocation7 + $0x840] sm:$0xff]
    %v383 = vld [vmem:[#allocation7 + $0x848] sm:$0xff]
    %v384 = vld [vmem:[#allocation7 + $0x850] sm:$0xff]
    %v385 = vld [vmem:[#allocation7 + $0x858] sm:$0xff]
    %v386 = vld [vmem:[#allocation7 + $0x860] sm:$0xff]
    %v387 = vld [vmem:[#allocation7 + $0x868] sm:$0xff]
    %v388 = vld [vmem:[#allocation7 + $0x870] sm:$0xff]
    %v389 = vld [vmem:[#allocation7 + $0x878] sm:$0xff]
    %v390 = vld [vmem:[#allocation7 + $0x880] sm:$0xff]
    %v391 = vld [vmem:[#allocation7 + $0x888] sm:$0xff]
    %v392 = vld [vmem:[#allocation7 + $0x890] sm:$0xff]
    %v393 = vld [vmem:[#allocation7 + $0x898] sm:$0xff]
    %v394 = vld [vmem:[#allocation7 + $0x8a0] sm:$0xff]
    %v395 = vld [vmem:[#allocation7 + $0x8a8] sm:$0xff]
    %v396 = vld [vmem:[#allocation7 + $0x8b0] sm:$0xff]
    %v397 = vld [vmem:[#allocation7 + $0x8b8] sm:$0xff]
    %v398 = vld [vmem:[#allocation7 + $0x8c0] sm:$0xff]
    %v399 = vld [vmem:[#allocation7 + $0x8c8] sm:$0xff]
    %v400 = vld [vmem:[#allocation7 + $0x8d0] sm:$0xff]
    %v401 = vld [vmem:[#allocation7 + $0x8d8] sm:$0xff]
    %v402 = vld [vmem:[#allocation7 + $0x8e0] sm:$0xff]
    %v403 = vld [vmem:[#allocation7 + $0x8e8] sm:$0xff]
    %v404 = vld [vmem:[#allocation7 + $0x8f0] sm:$0xff]
    %v405 = vld [vmem:[#allocation7 + $0x8f8] sm:$0xff]
    %v406 = vld [vmem:[#allocation7 + $0x900] sm:$0xff]
    %v407 = vld [vmem:[#allocation7 + $0x908] sm:$0xff]
    %v408 = vld [vmem:[#allocation7 + $0x910] sm:$0xff]
    %v409 = vld [vmem:[#allocation7 + $0x918] sm:$0xff]
    %v410 = vld [vmem:[#allocation7 + $0x920] sm:$0xff]
    %v411 = vld [vmem:[#allocation7 + $0x928] sm:$0xff]
    %v412 = vld [vmem:[#allocation7 + $0x930] sm:$0xff]
    %v413 = vld [vmem:[#allocation7 + $0x938] sm:$0xff]
    %v414 = vld [vmem:[#allocation7 + $0x940] sm:$0xff]
    %v415 = vld [vmem:[#allocation7 + $0x948] sm:$0xff]
    %v416 = vld [vmem:[#allocation7 + $0x950] sm:$0xff]
    %v417 = vld [vmem:[#allocation7 + $0x958] sm:$0xff]
    %v418 = vld [vmem:[#allocation7 + $0x960] sm:$0xff]
    %v419 = vld [vmem:[#allocation7 + $0x968] sm:$0xff]
    %v420 = vld [vmem:[#allocation7 + $0x970] sm:$0xff]
    %v421 = vld [vmem:[#allocation7 + $0x978] sm:$0xff]
    %v422 = vld [vmem:[#allocation7 + $0x980] sm:$0xff]
    %v423 = vld [vmem:[#allocation7 + $0x988] sm:$0xff]
    %v424 = vld [vmem:[#allocation7 + $0x990] sm:$0xff]
    %v425 = vld [vmem:[#allocation7 + $0x998] sm:$0xff]
    %v426 = vld [vmem:[#allocation7 + $0x9a0] sm:$0xff]
    %v427 = vld [vmem:[#allocation7 + $0x9a8] sm:$0xff]
    %v428 = vld [vmem:[#allocation7 + $0x9b0] sm:$0xff]
    %v429 = vld [vmem:[#allocation7 + $0x9b8] sm:$0xff]
    %v430 = vld [vmem:[#allocation7 + $0x9c0] sm:$0xff]
    %v431 = vld [vmem:[#allocation7 + $0x9c8] sm:$0xff]
    %v432 = vld [vmem:[#allocation7 + $0x9d0] sm:$0xff]
    %v433 = vld [vmem:[#allocation7 + $0x9d8] sm:$0xff]
    %v434 = vld [vmem:[#allocation7 + $0x9e0] sm:$0xff]
    %v435 = vld [vmem:[#allocation7 + $0x9e8] sm:$0xff]
    %v436 = vld [vmem:[#allocation7 + $0x9f0] sm:$0xff]
    %v437 = vld [vmem:[#allocation7 + $0x9f8] sm:$0xff]
    %v438 = vld [vmem:[#allocation7 + $0xa00] sm:$0xff]
    %v439 = vld [vmem:[#allocation7 + $0xa08] sm:$0xff]
    %v440 = vld [vmem:[#allocation7 + $0xa10] sm:$0xff]
    %v441 = vld [vmem:[#allocation7 + $0xa18] sm:$0xff]
    %v442 = vld [vmem:[#allocation7 + $0xa20] sm:$0xff]
    %v443 = vld [vmem:[#allocation7 + $0xa28] sm:$0xff]
    %v444 = vld [vmem:[#allocation7 + $0xa30] sm:$0xff]
    %v445 = vld [vmem:[#allocation7 + $0xa38] sm:$0xff]
    %v446 = vld [vmem:[#allocation7 + $0xa40] sm:$0xff]
    %v447 = vld [vmem:[#allocation7 + $0xa48] sm:$0xff]
    %v448 = vld [vmem:[#allocation7 + $0xa50] sm:$0xff]
    %v449 = vld [vmem:[#allocation7 + $0xa58] sm:$0xff]
    %v450 = vld [vmem:[#allocation7 + $0xa60] sm:$0xff]
    %v451 = vld [vmem:[#allocation7 + $0xa68] sm:$0xff]
    %v452 = vld [vmem:[#allocation7 + $0xa70] sm:$0xff]
    %v453 = vld [vmem:[#allocation7 + $0xa78] sm:$0xff]
    %v454 = vld [vmem:[#allocation7 + $0xa80] sm:$0xff]
    %v455 = vld [vmem:[#allocation7 + $0xa88] sm:$0xff]
    %v456 = vld [vmem:[#allocation7 + $0xa90] sm:$0xff]
    %v457 = vld [vmem:[#allocation7 + $0xa98] sm:$0xff]
    %v458 = vld [vmem:[#allocation7 + $0xaa0] sm:$0xff]
    %v459 = vld [vmem:[#allocation7 + $0xaa8] sm:$0xff]
    %v460 = vld [vmem:[#allocation7 + $0xab0] sm:$0xff]
    %v461 = vld [vmem:[#allocation7 + $0xab8] sm:$0xff]
    %v462 = vld [vmem:[#allocation7 + $0xac0] sm:$0xff]
    %v463 = vld [vmem:[#allocation7 + $0xac8] sm:$0xff]
    %v464 = vld [vmem:[#allocation7 + $0xad0] sm:$0xff]
    %v465 = vld [vmem:[#allocation7 + $0xad8] sm:$0xff]
    %v466 = vld [vmem:[#allocation7 + $0xae0] sm:$0xff]
    %v467 = vld [vmem:[#allocation7 + $0xae8] sm:$0xff]
    %v468 = vld [vmem:[#allocation7 + $0xaf0] sm:$0xff]
    %v469 = vld [vmem:[#allocation7 + $0xaf8] sm:$0xff]
    %v470 = vld [vmem:[#allocation7 + $0xb00] sm:$0xff]
    %v471 = vld [vmem:[#allocation7 + $0xb08] sm:$0xff]
    %v472 = vld [vmem:[#allocation7 + $0xb10] sm:$0xff]
    %v473 = vld [vmem:[#allocation7 + $0xb18] sm:$0xff]
    %v474 = vld [vmem:[#allocation7 + $0xb20] sm:$0xff]
    %v475 = vld [vmem:[#allocation7 + $0xb28] sm:$0xff]
    %v476 = vld [vmem:[#allocation7 + $0xb30] sm:$0xff]
    %v477 = vld [vmem:[#allocation7 + $0xb38] sm:$0xff]
    %v478 = vld [vmem:[#allocation7 + $0xb40] sm:$0xff]
    %v479 = vld [vmem:[#allocation7 + $0xb48] sm:$0xff]
    %v480 = vld [vmem:[#allocation7 + $0xb50] sm:$0xff]
    %v481 = vld [vmem:[#allocation7 + $0xb58] sm:$0xff]
    %v482 = vld [vmem:[#allocation7 + $0xb60] sm:$0xff]
    %v483 = vld [vmem:[#allocation7 + $0xb68] sm:$0xff]
    %v484 = vld [vmem:[#allocation7 + $0xb70] sm:$0xff]
    %v485 = vld [vmem:[#allocation7 + $0xb78] sm:$0xff]
    %v486 = vld [vmem:[#allocation7 + $0xb80] sm:$0xff]
    %v487 = vld [vmem:[#allocation7 + $0xb88] sm:$0xff]
    %v488 = vld [vmem:[#allocation7 + $0xb90] sm:$0xff]
    %v489 = vld [vmem:[#allocation7 + $0xb98] sm:$0xff]
    %v490 = vld [vmem:[#allocation7 + $0xba0] sm:$0xff]
    %v491 = vld [vmem:[#allocation7 + $0xba8] sm:$0xff]
    %v492 = vld [vmem:[#allocation7 + $0xbb0] sm:$0xff]
    %v493 = vld [vmem:[#allocation7 + $0xbb8] sm:$0xff]
    %v494 = vld [vmem:[#allocation7 + $0xbc0] sm:$0xff]
    %v495 = vld [vmem:[#allocation7 + $0xbc8] sm:$0xff]
    %v496 = vld [vmem:[#allocation7 + $0xbd0] sm:$0xff]
    %v497 = vld [vmem:[#allocation7 + $0xbd8] sm:$0xff]
    %v498 = vld [vmem:[#allocation7 + $0xbe0] sm:$0xff]
    %v499 = vld [vmem:[#allocation7 + $0xbe8] sm:$0xff]
    %v500 = vld [vmem:[#allocation7 + $0xbf0] sm:$0xff]
    %v501 = vld [vmem:[#allocation7 + $0xbf8] sm:$0xff]
    %v502 = vld [vmem:[#allocation7 + $0xc00] sm:$0xff]
    %v503 = vld [vmem:[#allocation7 + $0xc08] sm:$0xff]
    %v504 = vld [vmem:[#allocation7 + $0xc10] sm:$0xff]
    %v505 = vld [vmem:[#allocation7 + $0xc18] sm:$0xff]
    %v506 = vld [vmem:[#allocation7 + $0xc20] sm:$0xff]
    %v507 = vld [vmem:[#allocation7 + $0xc28] sm:$0xff]
    %v508 = vld [vmem:[#allocation7 + $0xc30] sm:$0xff]
    %v509 = vld [vmem:[#allocation7 + $0xc38] sm:$0xff]
    %v510 = vld [vmem:[#allocation7 + $0xc40] sm:$0xff]
    %v511 = vld [vmem:[#allocation7 + $0xc48] sm:$0xff]
    %v512 = vld [vmem:[#allocation7 + $0xc50] sm:$0xff]
    %v513 = vld [vmem:[#allocation7 + $0xc58] sm:$0xff]
    %v514 = vld [vmem:[#allocation7 + $0xc60] sm:$0xff]
    %v515 = vld [vmem:[#allocation7 + $0xc68] sm:$0xff]
    %v516 = vld [vmem:[#allocation7 + $0xc70] sm:$0xff]
    %v517 = vld [vmem:[#allocation7 + $0xc78] sm:$0xff]
    %v518 = vld [vmem:[#allocation7 + $0xc80] sm:$0xff]
    %v519 = vld [vmem:[#allocation7 + $0xc88] sm:$0xff]
    %v520 = vld [vmem:[#allocation7 + $0xc90] sm:$0xff]
    %v521 = vld [vmem:[#allocation7 + $0xc98] sm:$0xff]
    %v522 = vld [vmem:[#allocation7 + $0xca0] sm:$0xff]
    %v523 = vld [vmem:[#allocation7 + $0xca8] sm:$0xff]
    %v524 = vld [vmem:[#allocation7 + $0xcb0] sm:$0xff]
    %v525 = vld [vmem:[#allocation7 + $0xcb8] sm:$0xff]
    %v526 = vld [vmem:[#allocation7 + $0xcc0] sm:$0xff]
    %v527 = vld [vmem:[#allocation7 + $0xcc8] sm:$0xff]
    %v528 = vld [vmem:[#allocation7 + $0xcd0] sm:$0xff]
    %v529 = vld [vmem:[#allocation7 + $0xcd8] sm:$0xff]
    %v530 = vld [vmem:[#allocation7 + $0xce0] sm:$0xff]
    %v531 = vld [vmem:[#allocation7 + $0xce8] sm:$0xff]
    %v532 = vld [vmem:[#allocation7 + $0xcf0] sm:$0xff]
    %v533 = vld [vmem:[#allocation7 + $0xcf8] sm:$0xff]
    %v534 = vld [vmem:[#allocation7 + $0xd00] sm:$0xff]
    %v535 = vld [vmem:[#allocation7 + $0xd08] sm:$0xff]
    %v536 = vld [vmem:[#allocation7 + $0xd10] sm:$0xff]
    %v537 = vld [vmem:[#allocation7 + $0xd18] sm:$0xff]
    %v538 = vld [vmem:[#allocation7 + $0xd20] sm:$0xff]
    %v539 = vld [vmem:[#allocation7 + $0xd28] sm:$0xff]
    %v540 = vld [vmem:[#allocation7 + $0xd30] sm:$0xff]
    %v541 = vld [vmem:[#allocation7 + $0xd38] sm:$0xff]
    %v542 = vld [vmem:[#allocation7 + $0xd40] sm:$0xff]
    %v543 = vld [vmem:[#allocation7 + $0xd48] sm:$0xff]
    %v544 = vld [vmem:[#allocation7 + $0xd50] sm:$0xff]
    %v545 = vld [vmem:[#allocation7 + $0xd58] sm:$0xff]
    %v546 = vld [vmem:[#allocation7 + $0xd60] sm:$0xff]
    %v547 = vld [vmem:[#allocation7 + $0xd68] sm:$0xff]
    %v548 = vld [vmem:[#allocation7 + $0xd70] sm:$0xff]
    %v549 = vld [vmem:[#allocation7 + $0xd78] sm:$0xff]
    %v550 = vld [vmem:[#allocation7 + $0xd80] sm:$0xff]
    %v551 = vld [vmem:[#allocation7 + $0xd88] sm:$0xff]
    %v552 = vld [vmem:[#allocation7 + $0xd90] sm:$0xff]
    %v553 = vld [vmem:[#allocation7 + $0xd98] sm:$0xff]
    %v554 = vld [vmem:[#allocation7 + $0xda0] sm:$0xff]
    %v555 = vld [vmem:[#allocation7 + $0xda8] sm:$0xff]
    %v556 = vld [vmem:[#allocation7 + $0xdb0] sm:$0xff]
    %v557 = vld [vmem:[#allocation7 + $0xdb8] sm:$0xff]
    %v558 = vld [vmem:[#allocation7 + $0xdc0] sm:$0xff]
    %v559 = vld [vmem:[#allocation7 + $0xdc8] sm:$0xff]
    %v560 = vld [vmem:[#allocation7 + $0xdd0] sm:$0xff]
    %v561 = vld [vmem:[#allocation7 + $0xdd8] sm:$0xff]
    %v562 = vld [vmem:[#allocation7 + $0xde0] sm:$0xff]
    %v563 = vld [vmem:[#allocation7 + $0xde8] sm:$0xff]
    %v564 = vld [vmem:[#allocation7 + $0xdf0] sm:$0xff]
    %v565 = vld [vmem:[#allocation7 + $0xdf8] sm:$0xff]
    %v566 = vld [vmem:[#allocation7 + $0xe00] sm:$0xff]
    %v567 = vld [vmem:[#allocation7 + $0xe08] sm:$0xff]
    %v568 = vld [vmem:[#allocation7 + $0xe10] sm:$0xff]
    %v569 = vld [vmem:[#allocation7 + $0xe18] sm:$0xff]
    %v570 = vld [vmem:[#allocation7 + $0xe20] sm:$0xff]
    %v571 = vld [vmem:[#allocation7 + $0xe28] sm:$0xff]
    %v572 = vld [vmem:[#allocation7 + $0xe30] sm:$0xff]
    %v573 = vld [vmem:[#allocation7 + $0xe38] sm:$0xff]
    %v574 = vld [vmem:[#allocation7 + $0xe40] sm:$0xff]
    %v575 = vld [vmem:[#allocation7 + $0xe48] sm:$0xff]
    %v576 = vld [vmem:[#allocation7 + $0xe50] sm:$0xff]
    %v577 = vld [vmem:[#allocation7 + $0xe58] sm:$0xff]
    %v578 = vld [vmem:[#allocation7 + $0xe60] sm:$0xff]
    %v579 = vld [vmem:[#allocation7 + $0xe68] sm:$0xff]
    %v580 = vld [vmem:[#allocation7 + $0xe70] sm:$0xff]
    %v581 = vld [vmem:[#allocation7 + $0xe78] sm:$0xff]
    %v582 = vld [vmem:[#allocation7 + $0xe80] sm:$0xff]
    %v583 = vld [vmem:[#allocation7 + $0xe88] sm:$0xff]
    %v584 = vld [vmem:[#allocation7 + $0xe90] sm:$0xff]
    %v585 = vld [vmem:[#allocation7 + $0xe98] sm:$0xff]
    %v586 = vld [vmem:[#allocation7 + $0xea0] sm:$0xff]
    %v587 = vld [vmem:[#allocation7 + $0xea8] sm:$0xff]
    %v588 = vld [vmem:[#allocation7 + $0xeb0] sm:$0xff]
    %v589 = vld [vmem:[#allocation7 + $0xeb8] sm:$0xff]
    %v590 = vld [vmem:[#allocation7 + $0xec0] sm:$0xff]
    %v591 = vld [vmem:[#allocation7 + $0xec8] sm:$0xff]
    %v592 = vld [vmem:[#allocation7 + $0xed0] sm:$0xff]
    %v593 = vld [vmem:[#allocation7 + $0xed8] sm:$0xff]
    %v594 = vld [vmem:[#allocation7 + $0xee0] sm:$0xff]
    %v595 = vld [vmem:[#allocation7 + $0xee8] sm:$0xff]
    %v596 = vld [vmem:[#allocation7 + $0xef0] sm:$0xff]
    %v597 = vld [vmem:[#allocation7 + $0xef8] sm:$0xff]
    %v598 = vld [vmem:[#allocation7 + $0xf00] sm:$0xff]
    %v599 = vld [vmem:[#allocation7 + $0xf08] sm:$0xff]
    %v600 = vld [vmem:[#allocation7 + $0xf10] sm:$0xff]
    %v601 = vld [vmem:[#allocation7 + $0xf18] sm:$0xff]
    %v602 = vld [vmem:[#allocation7 + $0xf20] sm:$0xff]
    %v603 = vld [vmem:[#allocation7 + $0xf28] sm:$0xff]
    %v604 = vld [vmem:[#allocation7 + $0xf30] sm:$0xff]
    %v605 = vld [vmem:[#allocation7 + $0xf38] sm:$0xff]
    %v606 = vld [vmem:[#allocation7 + $0xf40] sm:$0xff]
    %v607 = vld [vmem:[#allocation7 + $0xf48] sm:$0xff]
    %v608 = vld [vmem:[#allocation7 + $0xf50] sm:$0xff]
    %v609 = vld [vmem:[#allocation7 + $0xf58] sm:$0xff]
    %v610 = vld [vmem:[#allocation7 + $0xf60] sm:$0xff]
    %v611 = vld [vmem:[#allocation7 + $0xf68] sm:$0xff]
    %v612 = vld [vmem:[#allocation7 + $0xf70] sm:$0xff]
    %v613 = vld [vmem:[#allocation7 + $0xf78] sm:$0xff]
    %v614 = vld [vmem:[#allocation7 + $0xf80] sm:$0xff]
    %v615 = vld [vmem:[#allocation7 + $0xf88] sm:$0xff]
    %v616 = vld [vmem:[#allocation7 + $0xf90] sm:$0xff]
    %v617 = vld [vmem:[#allocation7 + $0xf98] sm:$0xff]
    %v618 = vld [vmem:[#allocation7 + $0xfa0] sm:$0xff]
    %v619 = vld [vmem:[#allocation7 + $0xfa8] sm:$0xff]
    %v620 = vld [vmem:[#allocation7 + $0xfb0] sm:$0xff]
    %v621 = vld [vmem:[#allocation7 + $0xfb8] sm:$0xff]
    %v622 = vld [vmem:[#allocation7 + $0xfc0] sm:$0xff]
    %v623 = vld [vmem:[#allocation7 + $0xfc8] sm:$0xff]
    %v624 = vld [vmem:[#allocation7 + $0xfd0] sm:$0xff]
    %v625 = vld [vmem:[#allocation7 + $0xfd8] sm:$0xff]
    %v626 = vld [vmem:[#allocation7 + $0xfe0] sm:$0xff]
    %v627 = vld [vmem:[#allocation7 + $0xfe8] sm:$0xff]
    %v628 = vld [vmem:[#allocation7 + $0xff0] sm:$0xff]
    %v629 = vld [vmem:[#allocation7 + $0xff8] sm:$0xff]
    %v630 = vld [vmem:[#allocation7 + $0x1000] sm:$0xff]
    %v631 = vld [vmem:[#allocation7 + $0x1008] sm:$0xff]
    %v632 = vld [vmem:[#allocation7 + $0x1010] sm:$0xff]
    %v633 = vld [vmem:[#allocation7 + $0x1018] sm:$0xff]
    %v634 = vld [vmem:[#allocation7 + $0x1020] sm:$0xff]
    %v635 = vld [vmem:[#allocation7 + $0x1028] sm:$0xff]
    %v636 = vld [vmem:[#allocation7 + $0x1030] sm:$0xff]
    %v637 = vld [vmem:[#allocation7 + $0x1038] sm:$0xff]
    %v638 = vld [vmem:[#allocation7 + $0x1040] sm:$0xff]
    %v639 = vld [vmem:[#allocation7 + $0x1048] sm:$0xff]
    %v640 = vld [vmem:[#allocation7 + $0x1050] sm:$0xff]
    %v641 = vld [vmem:[#allocation7 + $0x1058] sm:$0xff]
    %v642 = vld [vmem:[#allocation7 + $0x1060] sm:$0xff]
    %v643 = vld [vmem:[#allocation7 + $0x1068] sm:$0xff]
    %v644 = vld [vmem:[#allocation7 + $0x1070] sm:$0xff]
    %v645 = vld [vmem:[#allocation7 + $0x1078] sm:$0xff]
    %v646 = vld [vmem:[#allocation7 + $0x1080] sm:$0xff]
    %v647 = vld [vmem:[#allocation7 + $0x1088] sm:$0xff]
    %v648 = vld [vmem:[#allocation7 + $0x1090] sm:$0xff]
    %v649 = vld [vmem:[#allocation7 + $0x1098] sm:$0xff]
    %v650 = vld [vmem:[#allocation7 + $0x10a0] sm:$0xff]
    %v651 = vld [vmem:[#allocation7 + $0x10a8] sm:$0xff]
    %v652 = vld [vmem:[#allocation7 + $0x10b0] sm:$0xff]
    %v653 = vld [vmem:[#allocation7 + $0x10b8] sm:$0xff]
    %v654 = vld [vmem:[#allocation7 + $0x10c0] sm:$0xff]
    %v655 = vld [vmem:[#allocation7 + $0x10c8] sm:$0xff]
    %v656 = vld [vmem:[#allocation7 + $0x10d0] sm:$0xff]
    %v657 = vld [vmem:[#allocation7 + $0x10d8] sm:$0xff]
    %v658 = vld [vmem:[#allocation7 + $0x10e0] sm:$0xff]
    %v659 = vld [vmem:[#allocation7 + $0x10e8] sm:$0xff]
    %v660 = vld [vmem:[#allocation7 + $0x10f0] sm:$0xff]
    %v661 = vld [vmem:[#allocation7 + $0x10f8] sm:$0xff]
    %v662 = vld [vmem:[#allocation7 + $0x1100] sm:$0xff]
    %v663 = vld [vmem:[#allocation7 + $0x1108] sm:$0xff]
    %v664 = vld [vmem:[#allocation7 + $0x1110] sm:$0xff]
    %v665 = vld [vmem:[#allocation7 + $0x1118] sm:$0xff]
    %v666 = vld [vmem:[#allocation7 + $0x1120] sm:$0xff]
    %v667 = vld [vmem:[#allocation7 + $0x1128] sm:$0xff]
    %v668 = vld [vmem:[#allocation7 + $0x1130] sm:$0xff]
    %v669 = vld [vmem:[#allocation7 + $0x1138] sm:$0xff]
    %v670 = vld [vmem:[#allocation7 + $0x1140] sm:$0xff]
    %v671 = vld [vmem:[#allocation7 + $0x1148] sm:$0xff]
    %v672 = vld [vmem:[#allocation7 + $0x1150] sm:$0xff]
    %v673 = vld [vmem:[#allocation7 + $0x1158] sm:$0xff]
    %v674 = vld [vmem:[#allocation7 + $0x1160] sm:$0xff]
    %v675 = vld [vmem:[#allocation7 + $0x1168] sm:$0xff]
    %v676 = vld [vmem:[#allocation7 + $0x1170] sm:$0xff]
    %v677 = vld [vmem:[#allocation7 + $0x1178] sm:$0xff]
    %v678 = vld [vmem:[#allocation7 + $0x1180] sm:$0xff]
    %v679 = vld [vmem:[#allocation7 + $0x1188] sm:$0xff]
    %v680 = vld [vmem:[#allocation7 + $0x1190] sm:$0xff]
    %v681 = vld [vmem:[#allocation7 + $0x1198] sm:$0xff]
    %v682 = vld [vmem:[#allocation7 + $0x11a0] sm:$0xff]
    %v683 = vld [vmem:[#allocation7 + $0x11a8] sm:$0xff]
    %v684 = vld [vmem:[#allocation7 + $0x11b0] sm:$0xff]
    %v685 = vld [vmem:[#allocation7 + $0x11b8] sm:$0xff]
    %v686 = vld [vmem:[#allocation7 + $0x11c0] sm:$0xff]
    %v687 = vld [vmem:[#allocation7 + $0x11c8] sm:$0xff]
    %v688 = vld [vmem:[#allocation7 + $0x11d0] sm:$0xff]
    %v689 = vld [vmem:[#allocation7 + $0x11d8] sm:$0xff]
    %v690 = vld [vmem:[#allocation7 + $0x11e0] sm:$0xff]
    %v691 = vld [vmem:[#allocation7 + $0x11e8] sm:$0xff]
    %v692 = vld [vmem:[#allocation7 + $0x11f0] sm:$0xff]
    %v693 = vld [vmem:[#allocation7 + $0x11f8] sm:$0xff]
    %v694 = vld [vmem:[#allocation7 + $0x1200] sm:$0xff]
    %v695 = vld [vmem:[#allocation7 + $0x1208] sm:$0xff]
    %v696 = vld [vmem:[#allocation7 + $0x1210] sm:$0xff]
    %v697 = vld [vmem:[#allocation7 + $0x1218] sm:$0xff]
    %v698 = vld [vmem:[#allocation7 + $0x1220] sm:$0xff]
    %v699 = vld [vmem:[#allocation7 + $0x1228] sm:$0xff]
    %v700 = vld [vmem:[#allocation7 + $0x1230] sm:$0xff]
    %v701 = vld [vmem:[#allocation7 + $0x1238] sm:$0xff]
    %v702 = vld [vmem:[#allocation7 + $0x1240] sm:$0xff]
    %v703 = vld [vmem:[#allocation7 + $0x1248] sm:$0xff]
    %v704 = vld [vmem:[#allocation7 + $0x1250] sm:$0xff]
    %v705 = vld [vmem:[#allocation7 + $0x1258] sm:$0xff]
    %v706 = vld [vmem:[#allocation7 + $0x1260] sm:$0xff]
    %v707 = vld [vmem:[#allocation7 + $0x1268] sm:$0xff]
    %v708 = vld [vmem:[#allocation7 + $0x1270] sm:$0xff]
    %v709 = vld [vmem:[#allocation7 + $0x1278] sm:$0xff]
    %v710 = vld [vmem:[#allocation7 + $0x1280] sm:$0xff]
    %v711 = vld [vmem:[#allocation7 + $0x1288] sm:$0xff]
    %v712 = vld [vmem:[#allocation7 + $0x1290] sm:$0xff]
    %v713 = vld [vmem:[#allocation7 + $0x1298] sm:$0xff]
    %v714 = vld [vmem:[#allocation7 + $0x12a0] sm:$0xff]
    %v715 = vld [vmem:[#allocation7 + $0x12a8] sm:$0xff]
    %v716 = vld [vmem:[#allocation7 + $0x12b0] sm:$0xff]
    %v717 = vld [vmem:[#allocation7 + $0x12b8] sm:$0xff]
    %v718 = vld [vmem:[#allocation7 + $0x12c0] sm:$0xff]
    %v719 = vld [vmem:[#allocation7 + $0x12c8] sm:$0xff]
    %v720 = vld [vmem:[#allocation7 + $0x12d0] sm:$0xff]
    %v721 = vld [vmem:[#allocation7 + $0x12d8] sm:$0xff]
    %v722 = vld [vmem:[#allocation7 + $0x12e0] sm:$0xff]
    %v723 = vld [vmem:[#allocation7 + $0x12e8] sm:$0xff]
    %v724 = vld [vmem:[#allocation7 + $0x12f0] sm:$0xff]
    %v725 = vld [vmem:[#allocation7 + $0x12f8] sm:$0xff]
    %v726 = vld [vmem:[#allocation7 + $0x1300] sm:$0xff]
    %v727 = vld [vmem:[#allocation7 + $0x1308] sm:$0xff]
    %v728 = vld [vmem:[#allocation7 + $0x1310] sm:$0xff]
    %v729 = vld [vmem:[#allocation7 + $0x1318] sm:$0xff]
    %v730 = vld [vmem:[#allocation7 + $0x1320] sm:$0xff]
    %v731 = vld [vmem:[#allocation7 + $0x1328] sm:$0xff]
    %v732 = vld [vmem:[#allocation7 + $0x1330] sm:$0xff]
    %v733 = vld [vmem:[#allocation7 + $0x1338] sm:$0xff]
    %v734 = vld [vmem:[#allocation7 + $0x1340] sm:$0xff]
    %v735 = vld [vmem:[#allocation7 + $0x1348] sm:$0xff]
    %v736 = vld [vmem:[#allocation7 + $0x1350] sm:$0xff]
    %v737 = vld [vmem:[#allocation7 + $0x1358] sm:$0xff]
    %v738 = vld [vmem:[#allocation7 + $0x1360] sm:$0xff]
    %v739 = vld [vmem:[#allocation7 + $0x1368] sm:$0xff]
    %v740 = vld [vmem:[#allocation7 + $0x1370] sm:$0xff]
    %v741 = vld [vmem:[#allocation7 + $0x1378] sm:$0xff]
    %v742 = vld [vmem:[#allocation7 + $0x1380] sm:$0xff]
    %v743 = vld [vmem:[#allocation7 + $0x1388] sm:$0xff]
    %v744 = vld [vmem:[#allocation7 + $0x1390] sm:$0xff]
    %v745 = vld [vmem:[#allocation7 + $0x1398] sm:$0xff]
    %v746 = vld [vmem:[#allocation7 + $0x13a0] sm:$0xff]
    %v747 = vld [vmem:[#allocation7 + $0x13a8] sm:$0xff]
    %v748 = vld [vmem:[#allocation7 + $0x13b0] sm:$0xff]
    %v749 = vld [vmem:[#allocation7 + $0x13b8] sm:$0xff]
    %v750 = vld [vmem:[#allocation7 + $0x13c0] sm:$0xff]
    %v751 = vld [vmem:[#allocation7 + $0x13c8] sm:$0xff]
    %v752 = vld [vmem:[#allocation7 + $0x13d0] sm:$0xff]
    %v753 = vld [vmem:[#allocation7 + $0x13d8] sm:$0xff]
    %v754 = vld [vmem:[#allocation7 + $0x13e0] sm:$0xff]
    %v755 = vld [vmem:[#allocation7 + $0x13e8] sm:$0xff]
    %v756 = vld [vmem:[#allocation7 + $0x13f0] sm:$0xff]
    %v757 = vld [vmem:[#allocation7 + $0x13f8] sm:$0xff]
    %v758 = vld [vmem:[#allocation7 + $0x1400] sm:$0xff]
    %v759 = vld [vmem:[#allocation7 + $0x1408] sm:$0xff]
    %v760 = vld [vmem:[#allocation7 + $0x1410] sm:$0xff]
    %v761 = vld [vmem:[#allocation7 + $0x1418] sm:$0xff]
    %v762 = vld [vmem:[#allocation7 + $0x1420] sm:$0xff]
    %v763 = vld [vmem:[#allocation7 + $0x1428] sm:$0xff]
    %v764 = vld [vmem:[#allocation7 + $0x1430] sm:$0xff]
    %v765 = vld [vmem:[#allocation7 + $0x1438] sm:$0xff]
    %v766 = vld [vmem:[#allocation7 + $0x1440] sm:$0xff]
    %v767 = vld [vmem:[#allocation7 + $0x1448] sm:$0xff]
    %v768 = vld [vmem:[#allocation7 + $0x1450] sm:$0xff]
    %v769 = vld [vmem:[#allocation7 + $0x1458] sm:$0xff]
    %v770 = vld [vmem:[#allocation7 + $0x1460] sm:$0xff]
    %v771 = vld [vmem:[#allocation7 + $0x1468] sm:$0xff]
    %v772 = vld [vmem:[#allocation7 + $0x1470] sm:$0xff]
    %v773 = vld [vmem:[#allocation7 + $0x1478] sm:$0xff]
    %v774 = vld [vmem:[#allocation7 + $0x1480] sm:$0xff]
    %v775 = vld [vmem:[#allocation7 + $0x1488] sm:$0xff]
    %v776 = vld [vmem:[#allocation7 + $0x1490] sm:$0xff]
    %v777 = vld [vmem:[#allocation7 + $0x1498] sm:$0xff]
    %v778 = vld [vmem:[#allocation7 + $0x14a0] sm:$0xff]
    %v779 = vld [vmem:[#allocation7 + $0x14a8] sm:$0xff]
    %v780 = vld [vmem:[#allocation7 + $0x14b0] sm:$0xff]
    %v781 = vld [vmem:[#allocation7 + $0x14b8] sm:$0xff]
    %v782 = vld [vmem:[#allocation7 + $0x14c0] sm:$0xff]
    %v783 = vld [vmem:[#allocation7 + $0x14c8] sm:$0xff]
    %v784 = vld [vmem:[#allocation7 + $0x14d0] sm:$0xff]
    %v785 = vld [vmem:[#allocation7 + $0x14d8] sm:$0xff]
    %v786 = vld [vmem:[#allocation7 + $0x14e0] sm:$0xff]
    %v787 = vld [vmem:[#allocation7 + $0x14e8] sm:$0xff]
    %v788 = vld [vmem:[#allocation7 + $0x14f0] sm:$0xff]
    %v789 = vld [vmem:[#allocation7 + $0x14f8] sm:$0xff]
    %v790 = vld [vmem:[#allocation7 + $0x1500] sm:$0xff]
    %v791 = vld [vmem:[#allocation7 + $0x1508] sm:$0xff]
    %v792 = vld [vmem:[#allocation7 + $0x1510] sm:$0xff]
    %v793 = vld [vmem:[#allocation7 + $0x1518] sm:$0xff]
    %v794 = vld [vmem:[#allocation7 + $0x1520] sm:$0xff]
    %v795 = vld [vmem:[#allocation7 + $0x1528] sm:$0xff]
    %v796 = vld [vmem:[#allocation7 + $0x1530] sm:$0xff]
    %v797 = vld [vmem:[#allocation7 + $0x1538] sm:$0xff]
    %v798 = vld [vmem:[#allocation7 + $0x1540] sm:$0xff]
    %v799 = vld [vmem:[#allocation7 + $0x1548] sm:$0xff]
    %v800 = vld [vmem:[#allocation7 + $0x1550] sm:$0xff]
    %v801 = vld [vmem:[#allocation7 + $0x1558] sm:$0xff]
    %v802 = vld [vmem:[#allocation7 + $0x1560] sm:$0xff]
    %v803 = vld [vmem:[#allocation7 + $0x1568] sm:$0xff]
    %v804 = vld [vmem:[#allocation7 + $0x1570] sm:$0xff]
    %v805 = vld [vmem:[#allocation7 + $0x1578] sm:$0xff]
    %v806 = vld [vmem:[#allocation7 + $0x1580] sm:$0xff]
    %v807 = vld [vmem:[#allocation7 + $0x1588] sm:$0xff]
    %v808 = vld [vmem:[#allocation7 + $0x1590] sm:$0xff]
    %v809 = vld [vmem:[#allocation7 + $0x1598] sm:$0xff]
    %v810 = vld [vmem:[#allocation7 + $0x15a0] sm:$0xff]
    %v811 = vld [vmem:[#allocation7 + $0x15a8] sm:$0xff]
    %v812 = vld [vmem:[#allocation7 + $0x15b0] sm:$0xff]
    %v813 = vld [vmem:[#allocation7 + $0x15b8] sm:$0xff]
    %v814 = vld [vmem:[#allocation7 + $0x15c0] sm:$0xff]
    %v815 = vld [vmem:[#allocation7 + $0x15c8] sm:$0xff]
    %v816 = vld [vmem:[#allocation7 + $0x15d0] sm:$0xff]
    %v817 = vld [vmem:[#allocation7 + $0x15d8] sm:$0xff]
    %v818 = vld [vmem:[#allocation7 + $0x15e0] sm:$0xff]
    %v819 = vld [vmem:[#allocation7 + $0x15e8] sm:$0xff]
    %v820 = vld [vmem:[#allocation7 + $0x15f0] sm:$0xff]
    %v821 = vld [vmem:[#allocation7 + $0x15f8] sm:$0xff]
    %v822 = vld [vmem:[#allocation7 + $0x1600] sm:$0xff]
    %v823 = vld [vmem:[#allocation7 + $0x1608] sm:$0xff]
    %v824 = vld [vmem:[#allocation7 + $0x1610] sm:$0xff]
    %v825 = vld [vmem:[#allocation7 + $0x1618] sm:$0xff]
    %v826 = vld [vmem:[#allocation7 + $0x1620] sm:$0xff]
    %v827 = vld [vmem:[#allocation7 + $0x1628] sm:$0xff]
    %v828 = vld [vmem:[#allocation7 + $0x1630] sm:$0xff]
    %v829 = vld [vmem:[#allocation7 + $0x1638] sm:$0xff]
    %v830 = vld [vmem:[#allocation7 + $0x1640] sm:$0xff]
    %v831 = vld [vmem:[#allocation7 + $0x1648] sm:$0xff]
    %v832 = vld [vmem:[#allocation7 + $0x1650] sm:$0xff]
    %v833 = vld [vmem:[#allocation7 + $0x1658] sm:$0xff]
    %v834 = vld [vmem:[#allocation7 + $0x1660] sm:$0xff]
    %v835 = vld [vmem:[#allocation7 + $0x1668] sm:$0xff]
    %v836 = vld [vmem:[#allocation7 + $0x1670] sm:$0xff]
    %v837 = vld [vmem:[#allocation7 + $0x1678] sm:$0xff]
    %v838 = vld [vmem:[#allocation7 + $0x1680] sm:$0xff]
    %v839 = vld [vmem:[#allocation7 + $0x1688] sm:$0xff]
    %v840 = vld [vmem:[#allocation7 + $0x1690] sm:$0xff]
    %v841 = vld [vmem:[#allocation7 + $0x1698] sm:$0xff]
    %v842 = vld [vmem:[#allocation7 + $0x16a0] sm:$0xff]
    %v843 = vld [vmem:[#allocation7 + $0x16a8] sm:$0xff]
    %v844 = vld [vmem:[#allocation7 + $0x16b0] sm:$0xff]
    %v845 = vld [vmem:[#allocation7 + $0x16b8] sm:$0xff]
    %v846 = vld [vmem:[#allocation7 + $0x16c0] sm:$0xff]
    %v847 = vld [vmem:[#allocation7 + $0x16c8] sm:$0xff]
    %v848 = vld [vmem:[#allocation7 + $0x16d0] sm:$0xff]
    %v849 = vld [vmem:[#allocation7 + $0x16d8] sm:$0xff]
    %v850 = vld [vmem:[#allocation7 + $0x16e0] sm:$0xff]
    %v851 = vld [vmem:[#allocation7 + $0x16e8] sm:$0xff]
    %v852 = vld [vmem:[#allocation7 + $0x16f0] sm:$0xff]
    %v853 = vld [vmem:[#allocation7 + $0x16f8] sm:$0xff]
    %v854 = vld [vmem:[#allocation7 + $0x1700] sm:$0xff]
    %v855 = vld [vmem:[#allocation7 + $0x1708] sm:$0xff]
    %v856 = vld [vmem:[#allocation7 + $0x1710] sm:$0xff]
    %v857 = vld [vmem:[#allocation7 + $0x1718] sm:$0xff]
    %v858 = vld [vmem:[#allocation7 + $0x1720] sm:$0xff]
    %v859 = vld [vmem:[#allocation7 + $0x1728] sm:$0xff]
    %v860 = vld [vmem:[#allocation7 + $0x1730] sm:$0xff]
    %v861 = vld [vmem:[#allocation7 + $0x1738] sm:$0xff]
    %v862 = vld [vmem:[#allocation7 + $0x1740] sm:$0xff]
    %v863 = vld [vmem:[#allocation7 + $0x1748] sm:$0xff]
    %v864 = vld [vmem:[#allocation7 + $0x1750] sm:$0xff]
    %v865 = vld [vmem:[#allocation7 + $0x1758] sm:$0xff]
    %v866 = vld [vmem:[#allocation7 + $0x1760] sm:$0xff]
    %v867 = vld [vmem:[#allocation7 + $0x1768] sm:$0xff]
    %v868 = vld [vmem:[#allocation7 + $0x1770] sm:$0xff]
    %v869 = vld [vmem:[#allocation7 + $0x1778] sm:$0xff]
    %v870 = vld [vmem:[#allocation7 + $0x1780] sm:$0xff]
    %v871 = vld [vmem:[#allocation7 + $0x1788] sm:$0xff]
    %v872 = vld [vmem:[#allocation7 + $0x1790] sm:$0xff]
    %v873 = vld [vmem:[#allocation7 + $0x1798] sm:$0xff]
    %v874 = vld [vmem:[#allocation7 + $0x17a0] sm:$0xff]
    %v875 = vld [vmem:[#allocation7 + $0x17a8] sm:$0xff]
    %v876 = vld [vmem:[#allocation7 + $0x17b0] sm:$0xff]
    %v877 = vld [vmem:[#allocation7 + $0x17b8] sm:$0xff]
    %v878 = vld [vmem:[#allocation7 + $0x17c0] sm:$0xff]
    %v879 = vld [vmem:[#allocation7 + $0x17c8] sm:$0xff]
    %v880 = vld [vmem:[#allocation7 + $0x17d0] sm:$0xff]
    %v881 = vld [vmem:[#allocation7 + $0x17d8] sm:$0xff]
    %v882 = vld [vmem:[#allocation7 + $0x17e0] sm:$0xff]
    %v883 = vld [vmem:[#allocation7 + $0x17e8] sm:$0xff]
    %v884 = vld [vmem:[#allocation7 + $0x17f0] sm:$0xff]
    %v885 = vld [vmem:[#allocation7 + $0x17f8] sm:$0xff]
    %v886 = vld [vmem:[#allocation7 + $0x1800] sm:$0xff]
    %v887 = vld [vmem:[#allocation7 + $0x1808] sm:$0xff]
    %v888 = vld [vmem:[#allocation7 + $0x1810] sm:$0xff]
    %v889 = vld [vmem:[#allocation7 + $0x1818] sm:$0xff]
    %v890 = vld [vmem:[#allocation7 + $0x1820] sm:$0xff]
    %v891 = vld [vmem:[#allocation7 + $0x1828] sm:$0xff]
    %v892 = vld [vmem:[#allocation7 + $0x1830] sm:$0xff]
    %v893 = vld [vmem:[#allocation7 + $0x1838] sm:$0xff]
    %v894 = vld [vmem:[#allocation7 + $0x1840] sm:$0xff]
    %v895 = vld [vmem:[#allocation7 + $0x1848] sm:$0xff]
    %v896 = vld [vmem:[#allocation7 + $0x1850] sm:$0xff]
    %v897 = vld [vmem:[#allocation7 + $0x1858] sm:$0xff]
    %v898 = vld [vmem:[#allocation7 + $0x1860] sm:$0xff]
    %v899 = vld [vmem:[#allocation7 + $0x1868] sm:$0xff]
    %v900 = vld [vmem:[#allocation7 + $0x1870] sm:$0xff]
    %v901 = vld [vmem:[#allocation7 + $0x1878] sm:$0xff]
    %v902 = vld [vmem:[#allocation7 + $0x1880] sm:$0xff]
    %v903 = vld [vmem:[#allocation7 + $0x1888] sm:$0xff]
    %v904 = vld [vmem:[#allocation7 + $0x1890] sm:$0xff]
    %v905 = vld [vmem:[#allocation7 + $0x1898] sm:$0xff]
    %v906 = vld [vmem:[#allocation7 + $0x18a0] sm:$0xff]
    %v907 = vld [vmem:[#allocation7 + $0x18a8] sm:$0xff]
    %v908 = vld [vmem:[#allocation7 + $0x18b0] sm:$0xff]
    %v909 = vld [vmem:[#allocation7 + $0x18b8] sm:$0xff]
    %v910 = vld [vmem:[#allocation7 + $0x18c0] sm:$0xff]
    %v911 = vld [vmem:[#allocation7 + $0x18c8] sm:$0xff]
    %v912 = vld [vmem:[#allocation7 + $0x18d0] sm:$0xff]
    %v913 = vld [vmem:[#allocation7 + $0x18d8] sm:$0xff]
    %v914 = vld [vmem:[#allocation7 + $0x18e0] sm:$0xff]
    %v915 = vld [vmem:[#allocation7 + $0x18e8] sm:$0xff]
    %v916 = vld [vmem:[#allocation7 + $0x18f0] sm:$0xff]
    %v917 = vld [vmem:[#allocation7 + $0x18f8] sm:$0xff]
    %v918 = vld [vmem:[#allocation7 + $0x1900] sm:$0xff]
    %v919 = vld [vmem:[#allocation7 + $0x1908] sm:$0xff]
    %v920 = vld [vmem:[#allocation7 + $0x1910] sm:$0xff]
    %v921 = vld [vmem:[#allocation7 + $0x1918] sm:$0xff]
    %v922 = vld [vmem:[#allocation7 + $0x1920] sm:$0xff]
    %v923 = vld [vmem:[#allocation7 + $0x1928] sm:$0xff]
    %v924 = vld [vmem:[#allocation7 + $0x1930] sm:$0xff]
    %v925 = vld [vmem:[#allocation7 + $0x1938] sm:$0xff]
    %v926 = vld [vmem:[#allocation7 + $0x1940] sm:$0xff]
    %v927 = vld [vmem:[#allocation7 + $0x1948] sm:$0xff]
    %v928 = vld [vmem:[#allocation7 + $0x1950] sm:$0xff]
    %v929 = vld [vmem:[#allocation7 + $0x1958] sm:$0xff]
    %v930 = vld [vmem:[#allocation7 + $0x1960] sm:$0xff]
    %v931 = vld [vmem:[#allocation7 + $0x1968] sm:$0xff]
    %v932 = vld [vmem:[#allocation7 + $0x1970] sm:$0xff]
    %v933 = vld [vmem:[#allocation7 + $0x1978] sm:$0xff]
    %v934 = vld [vmem:[#allocation7 + $0x1980] sm:$0xff]
    %v935 = vld [vmem:[#allocation7 + $0x1988] sm:$0xff]
    %v936 = vld [vmem:[#allocation7 + $0x1990] sm:$0xff]
    %v937 = vld [vmem:[#allocation7 + $0x1998] sm:$0xff]
    %v938 = vld [vmem:[#allocation7 + $0x19a0] sm:$0xff]
    %v939 = vld [vmem:[#allocation7 + $0x19a8] sm:$0xff]
    %v940 = vld [vmem:[#allocation7 + $0x19b0] sm:$0xff]
    %v941 = vld [vmem:[#allocation7 + $0x19b8] sm:$0xff]
    %v942 = vld [vmem:[#allocation7 + $0x19c0] sm:$0xff]
    %v943 = vld [vmem:[#allocation7 + $0x19c8] sm:$0xff]
    %v944 = vld [vmem:[#allocation7 + $0x19d0] sm:$0xff]
    %v945 = vld [vmem:[#allocation7 + $0x19d8] sm:$0xff]
    %v946 = vld [vmem:[#allocation7 + $0x19e0] sm:$0xff]
    %v947 = vld [vmem:[#allocation7 + $0x19e8] sm:$0xff]
    %v948 = vld [vmem:[#allocation7 + $0x19f0] sm:$0xff]
    %v949 = vld [vmem:[#allocation7 + $0x19f8] sm:$0xff]
    %v950 = vld [vmem:[#allocation7 + $0x1a00] sm:$0xff]
    %v951 = vld [vmem:[#allocation7 + $0x1a08] sm:$0xff]
    %v952 = vld [vmem:[#allocation7 + $0x1a10] sm:$0xff]
    %v953 = vld [vmem:[#allocation7 + $0x1a18] sm:$0xff]
    %v954 = vld [vmem:[#allocation7 + $0x1a20] sm:$0xff]
    %v955 = vld [vmem:[#allocation7 + $0x1a28] sm:$0xff]
    %v956 = vld [vmem:[#allocation7 + $0x1a30] sm:$0xff]
    %v957 = vld [vmem:[#allocation7 + $0x1a38] sm:$0xff]
    %v958 = vld [vmem:[#allocation7 + $0x1a40] sm:$0xff]
    %v959 = vld [vmem:[#allocation7 + $0x1a48] sm:$0xff]
    %v960 = vld [vmem:[#allocation7 + $0x1a50] sm:$0xff]
    %v961 = vld [vmem:[#allocation7 + $0x1a58] sm:$0xff]
    %v962 = vld [vmem:[#allocation7 + $0x1a60] sm:$0xff]
    %v963 = vld [vmem:[#allocation7 + $0x1a68] sm:$0xff]
    %v964 = vld [vmem:[#allocation7 + $0x1a70] sm:$0xff]
    %v965 = vld [vmem:[#allocation7 + $0x1a78] sm:$0xff]
    %v966 = vld [vmem:[#allocation7 + $0x1a80] sm:$0xff]
    %v967 = vld [vmem:[#allocation7 + $0x1a88] sm:$0xff]
    %v968 = vld [vmem:[#allocation7 + $0x1a90] sm:$0xff]
    %v969 = vld [vmem:[#allocation7 + $0x1a98] sm:$0xff]
    %v970 = vld [vmem:[#allocation7 + $0x1aa0] sm:$0xff]
    %v971 = vld [vmem:[#allocation7 + $0x1aa8] sm:$0xff]
    %v972 = vld [vmem:[#allocation7 + $0x1ab0] sm:$0xff]
    %v973 = vld [vmem:[#allocation7 + $0x1ab8] sm:$0xff]
    %v974 = vld [vmem:[#allocation7 + $0x1ac0] sm:$0xff]
    %v975 = vld [vmem:[#allocation7 + $0x1ac8] sm:$0xff]
    %v976 = vld [vmem:[#allocation7 + $0x1ad0] sm:$0xff]
    %v977 = vld [vmem:[#allocation7 + $0x1ad8] sm:$0xff]
    %v978 = vld [vmem:[#allocation7 + $0x1ae0] sm:$0xff]
    %v979 = vld [vmem:[#allocation7 + $0x1ae8] sm:$0xff]
    %v980 = vld [vmem:[#allocation7 + $0x1af0] sm:$0xff]
    %v981 = vld [vmem:[#allocation7 + $0x1af8] sm:$0xff]
    %v982 = vld [vmem:[#allocation7 + $0x1b00] sm:$0xff]
    %v983 = vld [vmem:[#allocation7 + $0x1b08] sm:$0xff]
    %v984 = vld [vmem:[#allocation7 + $0x1b10] sm:$0xff]
    %v985 = vld [vmem:[#allocation7 + $0x1b18] sm:$0xff]
    %v986 = vld [vmem:[#allocation7 + $0x1b20] sm:$0xff]
    %v987 = vld [vmem:[#allocation7 + $0x1b28] sm:$0xff]
    %v988 = vld [vmem:[#allocation7 + $0x1b30] sm:$0xff]
    %v989 = vld [vmem:[#allocation7 + $0x1b38] sm:$0xff]
    %v990 = vld [vmem:[#allocation7 + $0x1b40] sm:$0xff]
    %v991 = vld [vmem:[#allocation7 + $0x1b48] sm:$0xff]
    %v992 = vld [vmem:[#allocation7 + $0x1b50] sm:$0xff]
    %v993 = vld [vmem:[#allocation7 + $0x1b58] sm:$0xff]
    %v994 = vld [vmem:[#allocation7 + $0x1b60] sm:$0xff]
    %v995 = vld [vmem:[#allocation7 + $0x1b68] sm:$0xff]
    %v996 = vld [vmem:[#allocation7 + $0x1b70] sm:$0xff]
    %v997 = vld [vmem:[#allocation7 + $0x1b78] sm:$0xff]
    %v998 = vld [vmem:[#allocation7 + $0x1b80] sm:$0xff]
    %v999 = vld [vmem:[#allocation7 + $0x1b88] sm:$0xff]
    %v1000 = vld [vmem:[#allocation7 + $0x1b90] sm:$0xff]
    %v1001 = vld [vmem:[#allocation7 + $0x1b98] sm:$0xff]
    %v1002 = vld [vmem:[#allocation7 + $0x1ba0] sm:$0xff]
    %v1003 = vld [vmem:[#allocation7 + $0x1ba8] sm:$0xff]
    %v1004 = vld [vmem:[#allocation7 + $0x1bb0] sm:$0xff]
    %v1005 = vld [vmem:[#allocation7 + $0x1bb8] sm:$0xff]
    %v1006 = vld [vmem:[#allocation7 + $0x1bc0] sm:$0xff]
    %v1007 = vld [vmem:[#allocation7 + $0x1bc8] sm:$0xff]
    %v1008 = vld [vmem:[#allocation7 + $0x1bd0] sm:$0xff]
    %v1009 = vld [vmem:[#allocation7 + $0x1bd8] sm:$0xff]
    %v1010 = vld [vmem:[#allocation7 + $0x1be0] sm:$0xff]
    %v1011 = vld [vmem:[#allocation7 + $0x1be8] sm:$0xff]
    %v1012 = vld [vmem:[#allocation7 + $0x1bf0] sm:$0xff]
    %v1013 = vld [vmem:[#allocation7 + $0x1bf8] sm:$0xff]
    %v1014 = vld [vmem:[#allocation7 + $0x1c00] sm:$0xff]
    %v1015 = vld [vmem:[#allocation7 + $0x1c08] sm:$0xff]
    %v1016 = vld [vmem:[#allocation7 + $0x1c10] sm:$0xff]
    %v1017 = vld [vmem:[#allocation7 + $0x1c18] sm:$0xff]
    %v1018 = vld [vmem:[#allocation7 + $0x1c20] sm:$0xff]
    %v1019 = vld [vmem:[#allocation7 + $0x1c28] sm:$0xff]
    %v1020 = vld [vmem:[#allocation7 + $0x1c30] sm:$0xff]
    %v1021 = vld [vmem:[#allocation7 + $0x1c38] sm:$0xff]
    %v1022 = vld [vmem:[#allocation7 + $0x1c40] sm:$0xff]
    %v1023 = vld [vmem:[#allocation7 + $0x1c48] sm:$0xff]
    %v1024 = vld [vmem:[#allocation7 + $0x1c50] sm:$0xff]
    %v1025 = vld [vmem:[#allocation7 + $0x1c58] sm:$0xff]
    %v1026 = vld [vmem:[#allocation7 + $0x1c60] sm:$0xff]
    %v1027 = vld [vmem:[#allocation7 + $0x1c68] sm:$0xff]
    %v1028 = vld [vmem:[#allocation7 + $0x1c70] sm:$0xff]
    %v1029 = vld [vmem:[#allocation7 + $0x1c78] sm:$0xff]
    %v1030 = vld [vmem:[#allocation7 + $0x1c80] sm:$0xff]
    %v1031 = vld [vmem:[#allocation7 + $0x1c88] sm:$0xff]
    %v1032 = vld [vmem:[#allocation7 + $0x1c90] sm:$0xff]
    %v1033 = vld [vmem:[#allocation7 + $0x1c98] sm:$0xff]
    %v1034 = vld [vmem:[#allocation7 + $0x1ca0] sm:$0xff]
    %v1035 = vld [vmem:[#allocation7 + $0x1ca8] sm:$0xff]
    %v1036 = vld [vmem:[#allocation7 + $0x1cb0] sm:$0xff]
    %v1037 = vld [vmem:[#allocation7 + $0x1cb8] sm:$0xff]
    %v1038 = vld [vmem:[#allocation7 + $0x1cc0] sm:$0xff]
    %v1039 = vld [vmem:[#allocation7 + $0x1cc8] sm:$0xff]
    %v1040 = vld [vmem:[#allocation7 + $0x1cd0] sm:$0xff]
    %v1041 = vld [vmem:[#allocation7 + $0x1cd8] sm:$0xff]
    %v1042 = vld [vmem:[#allocation7 + $0x1ce0] sm:$0xff]
    %v1043 = vld [vmem:[#allocation7 + $0x1ce8] sm:$0xff]
    %v1044 = vld [vmem:[#allocation7 + $0x1cf0] sm:$0xff]
    %v1045 = vld [vmem:[#allocation7 + $0x1cf8] sm:$0xff]
    %v1046 = vld [vmem:[#allocation7 + $0x1d00] sm:$0xff]
    %v1047 = vld [vmem:[#allocation7 + $0x1d08] sm:$0xff]
    %v1048 = vld [vmem:[#allocation7 + $0x1d10] sm:$0xff]
    %v1049 = vld [vmem:[#allocation7 + $0x1d18] sm:$0xff]
    %v1050 = vld [vmem:[#allocation7 + $0x1d20] sm:$0xff]
    %v1051 = vld [vmem:[#allocation7 + $0x1d28] sm:$0xff]
    %v1052 = vld [vmem:[#allocation7 + $0x1d30] sm:$0xff]
    %v1053 = vld [vmem:[#allocation7 + $0x1d38] sm:$0xff]
    %v1054 = vld [vmem:[#allocation7 + $0x1d40] sm:$0xff]
    %v1055 = vld [vmem:[#allocation7 + $0x1d48] sm:$0xff]
    %v1056 = vld [vmem:[#allocation7 + $0x1d50] sm:$0xff]
    %v1057 = vld [vmem:[#allocation7 + $0x1d58] sm:$0xff]
    %v1058 = vld [vmem:[#allocation7 + $0x1d60] sm:$0xff]
    %v1059 = vld [vmem:[#allocation7 + $0x1d68] sm:$0xff]
    %v1060 = vld [vmem:[#allocation7 + $0x1d70] sm:$0xff]
    %v1061 = vld [vmem:[#allocation7 + $0x1d78] sm:$0xff]
    %v1062 = vld [vmem:[#allocation7 + $0x1d80] sm:$0xff]
    %v1063 = vld [vmem:[#allocation7 + $0x1d88] sm:$0xff]
    %v1064 = vld [vmem:[#allocation7 + $0x1d90] sm:$0xff]
    %v1065 = vld [vmem:[#allocation7 + $0x1d98] sm:$0xff]
    %v1066 = vld [vmem:[#allocation7 + $0x1da0] sm:$0xff]
    %v1067 = vld [vmem:[#allocation7 + $0x1da8] sm:$0xff]
    %v1068 = vld [vmem:[#allocation7 + $0x1db0] sm:$0xff]
    %v1069 = vld [vmem:[#allocation7 + $0x1db8] sm:$0xff]
    %v1070 = vld [vmem:[#allocation7 + $0x1dc0] sm:$0xff]
    %v1071 = vld [vmem:[#allocation7 + $0x1dc8] sm:$0xff]
    %v1072 = vld [vmem:[#allocation7 + $0x1dd0] sm:$0xff]
    %v1073 = vld [vmem:[#allocation7 + $0x1dd8] sm:$0xff]
    %v1074 = vld [vmem:[#allocation7 + $0x1de0] sm:$0xff]
    %v1075 = vld [vmem:[#allocation7 + $0x1de8] sm:$0xff]
    %v1076 = vld [vmem:[#allocation7 + $0x1df0] sm:$0xff]
    %v1077 = vld [vmem:[#allocation7 + $0x1df8] sm:$0xff]
    %v1078 = vld [vmem:[#allocation7 + $0x1e00] sm:$0xff]
    %v1079 = vld [vmem:[#allocation7 + $0x1e08] sm:$0xff]
    %v1080 = vld [vmem:[#allocation7 + $0x1e10] sm:$0xff]
    %v1081 = vld [vmem:[#allocation7 + $0x1e18] sm:$0xff]
    %v1082 = vld [vmem:[#allocation7 + $0x1e20] sm:$0xff]
    %v1083 = vld [vmem:[#allocation7 + $0x1e28] sm:$0xff]
    %v1084 = vld [vmem:[#allocation7 + $0x1e30] sm:$0xff]
    %v1085 = vld [vmem:[#allocation7 + $0x1e38] sm:$0xff]
    %v1086 = vld [vmem:[#allocation7 + $0x1e40] sm:$0xff]
    %v1087 = vld [vmem:[#allocation7 + $0x1e48] sm:$0xff]
    %v1088 = vld [vmem:[#allocation7 + $0x1e50] sm:$0xff]
    %v1089 = vld [vmem:[#allocation7 + $0x1e58] sm:$0xff]
    %v1090 = vld [vmem:[#allocation7 + $0x1e60] sm:$0xff]
    %v1091 = vld [vmem:[#allocation7 + $0x1e68] sm:$0xff]
    %v1092 = vld [vmem:[#allocation7 + $0x1e70] sm:$0xff]
    %v1093 = vld [vmem:[#allocation7 + $0x1e78] sm:$0xff]
    %v1094 = vld [vmem:[#allocation7 + $0x1e80] sm:$0xff]
    %v1095 = vld [vmem:[#allocation7 + $0x1e88] sm:$0xff]
    %v1096 = vld [vmem:[#allocation7 + $0x1e90] sm:$0xff]
    %v1097 = vld [vmem:[#allocation7 + $0x1e98] sm:$0xff]
    %v1098 = vld [vmem:[#allocation7 + $0x1ea0] sm:$0xff]
    %v1099 = vld [vmem:[#allocation7 + $0x1ea8] sm:$0xff]
    %v1100 = vld [vmem:[#allocation7 + $0x1eb0] sm:$0xff]
    %v1101 = vld [vmem:[#allocation7 + $0x1eb8] sm:$0xff]
    %v1102 = vld [vmem:[#allocation7 + $0x1ec0] sm:$0xff]
    %v1103 = vld [vmem:[#allocation7 + $0x1ec8] sm:$0xff]
    %v1104 = vld [vmem:[#allocation7 + $0x1ed0] sm:$0xff]
    %v1105 = vld [vmem:[#allocation7 + $0x1ed8] sm:$0xff]
    %v1106 = vld [vmem:[#allocation7 + $0x1ee0] sm:$0xff]
    %v1107 = vld [vmem:[#allocation7 + $0x1ee8] sm:$0xff]
    %v1108 = vld [vmem:[#allocation7 + $0x1ef0] sm:$0xff]
    %v1109 = vld [vmem:[#allocation7 + $0x1ef8] sm:$0xff]
    %v1110 = vld [vmem:[#allocation7 + $0x1f00] sm:$0xff]
    %v1111 = vld [vmem:[#allocation7 + $0x1f08] sm:$0xff]
    %v1112 = vld [vmem:[#allocation7 + $0x1f10] sm:$0xff]
    %v1113 = vld [vmem:[#allocation7 + $0x1f18] sm:$0xff]
    %v1114 = vld [vmem:[#allocation7 + $0x1f20] sm:$0xff]
    %v1115 = vld [vmem:[#allocation7 + $0x1f28] sm:$0xff]
    %v1116 = vld [vmem:[#allocation7 + $0x1f30] sm:$0xff]
    %v1117 = vld [vmem:[#allocation7 + $0x1f38] sm:$0xff]
    %v1618 = vunpack.c.l.b16 %v618
    %v1619 = vunpack.c.h.b16 %v618
    %v1620 = vunpack.c.l.b16 %v619
    %v1621 = vunpack.c.h.b16 %v619
    %v1622 = vunpack.c.l.b16 %v620
    %v1623 = vunpack.c.h.b16 %v620
    %v1624 = vunpack.c.l.b16 %v621
    %v1625 = vunpack.c.h.b16 %v621
    %v1626 = vunpack.c.l.b16 %v622
    %v1627 = vunpack.c.h.b16 %v622
    %v1628 = vunpack.c.l.b16 %v623
    %v1629 = vunpack.c.h.b16 %v623
    %v1630 = vunpack.c.l.b16 %v624
    %v1631 = vunpack.c.h.b16 %v624
    %v1632 = vunpack.c.l.b16 %v625
    %v1633 = vunpack.c.h.b16 %v625
    %v1634 = vunpack.c.l.b16 %v626
    %v1635 = vunpack.c.h.b16 %v626
    %v1636 = vunpack.c.l.b16 %v627
    %v1637 = vunpack.c.h.b16 %v627
    %v1638 = vunpack.c.l.b16 %v628
    %v1639 = vunpack.c.h.b16 %v628
    %v1640 = vunpack.c.l.b16 %v629
    %v1641 = vunpack.c.h.b16 %v629
    %v1642 = vunpack.c.l.b16 %v630
    %v1643 = vunpack.c.h.b16 %v630
    %v1644 = vunpack.c.l.b16 %v631
    %v1645 = vunpack.c.h.b16 %v631
    %v1646 = vunpack.c.l.b16 %v632
    %v1647 = vunpack.c.h.b16 %v632
    %v1648 = vunpack.c.l.b16 %v633
    %v1649 = vunpack.c.h.b16 %v633
    %v1650 = vunpack.c.l.b16 %v634
    %v1651 = vunpack.c.h.b16 %v634
    %v1652 = vunpack.c.l.b16 %v635
    %v1653 = vunpack.c.h.b16 %v635
    %v1654 = vunpack.c.l.b16 %v636
    %v1655 = vunpack.c.h.b16 %v636
    %v1656 = vunpack.c.l.b16 %v637
    %v1657 = vunpack.c.h.b16 %v637
    %v1658 = vunpack.c.l.b16 %v638
    %v1659 = vunpack.c.h.b16 %v638
    %v1660 = vunpack.c.l.b16 %v639
    %v1661 = vunpack.c.h.b16 %v639
    %v1662 = vunpack.c.l.b16 %v640
    %v1663 = vunpack.c.h.b16 %v640
    %v1664 = vunpack.c.l.b16 %v641
    %v1665 = vunpack.c.h.b16 %v641
    %v1666 = vunpack.c.l.b16 %v642
    %v1667 = vunpack.c.h.b16 %v642
    %v1668 = vunpack.c.l.b16 %v643
    %v1669 = vunpack.c.h.b16 %v643
    %v1670 = vunpack.c.l.b16 %v644
    %v1671 = vunpack.c.h.b16 %v644
    %v1672 = vunpack.c.l.b16 %v645
    %v1673 = vunpack.c.h.b16 %v645
    %v1674 = vunpack.c.l.b16 %v646
    %v1675 = vunpack.c.h.b16 %v646
    %v1676 = vunpack.c.l.b16 %v647
    %v1677 = vunpack.c.h.b16 %v647
    %v1678 = vunpack.c.l.b16 %v648
    %v1679 = vunpack.c.h.b16 %v648
    %v1680 = vunpack.c.l.b16 %v649
    %v1681 = vunpack.c.h.b16 %v649
    %v1682 = vunpack.c.l.b16 %v650
    %v1683 = vunpack.c.h.b16 %v650
    %v1684 = vunpack.c.l.b16 %v651
    %v1685 = vunpack.c.h.b16 %v651
    %v1686 = vunpack.c.l.b16 %v652
    %v1687 = vunpack.c.h.b16 %v652
    %v1688 = vunpack.c.l.b16 %v653
    %v1689 = vunpack.c.h.b16 %v653
    %v1690 = vunpack.c.l.b16 %v654
    %v1691 = vunpack.c.h.b16 %v654
    %v1692 = vunpack.c.l.b16 %v655
    %v1693 = vunpack.c.h.b16 %v655
    %v1694 = vunpack.c.l.b16 %v656
    %v1695 = vunpack.c.h.b16 %v656
    %v1696 = vunpack.c.l.b16 %v657
    %v1697 = vunpack.c.h.b16 %v657
    %v1698 = vunpack.c.l.b16 %v658
    %v1699 = vunpack.c.h.b16 %v658
    %v1700 = vunpack.c.l.b16 %v659
    %v1701 = vunpack.c.h.b16 %v659
    %v1702 = vunpack.c.l.b16 %v660
    %v1703 = vunpack.c.h.b16 %v660
    %v1704 = vunpack.c.l.b16 %v661
    %v1705 = vunpack.c.h.b16 %v661
    %v1706 = vunpack.c.l.b16 %v662
    %v1707 = vunpack.c.h.b16 %v662
    %v1708 = vunpack.c.l.b16 %v663
    %v1709 = vunpack.c.h.b16 %v663
    %v1710 = vunpack.c.l.b16 %v664
    %v1711 = vunpack.c.h.b16 %v664
    %v1712 = vunpack.c.l.b16 %v665
    %v1713 = vunpack.c.h.b16 %v665
    %v1714 = vunpack.c.l.b16 %v666
    %v1715 = vunpack.c.h.b16 %v666
    %v1716 = vunpack.c.l.b16 %v667
    %v1717 = vunpack.c.h.b16 %v667
    %v1718 = vunpack.c.l.b16 %v668
    %v1719 = vunpack.c.h.b16 %v668
    %v1720 = vunpack.c.l.b16 %v669
    %v1721 = vunpack.c.h.b16 %v669
    %v1722 = vunpack.c.l.b16 %v670
    %v1723 = vunpack.c.h.b16 %v670
    %v1724 = vunpack.c.l.b16 %v671
    %v1725 = vunpack.c.h.b16 %v671
    %v1726 = vunpack.c.l.b16 %v672
    %v1727 = vunpack.c.h.b16 %v672
    %v1728 = vunpack.c.l.b16 %v673
    %v1729 = vunpack.c.h.b16 %v673
    %v1730 = vunpack.c.l.b16 %v674
    %v1731 = vunpack.c.h.b16 %v674
    %v1732 = vunpack.c.l.b16 %v675
    %v1733 = vunpack.c.h.b16 %v675
    %v1734 = vunpack.c.l.b16 %v676
    %v1735 = vunpack.c.h.b16 %v676
    %v1736 = vunpack.c.l.b16 %v677
    %v1737 = vunpack.c.h.b16 %v677
    %v1738 = vunpack.c.l.b16 %v678
    %v1739 = vunpack.c.h.b16 %v678
    %v1740 = vunpack.c.l.b16 %v679
    %v1741 = vunpack.c.h.b16 %v679
    %v1742 = vunpack.c.l.b16 %v680
    %v1743 = vunpack.c.h.b16 %v680
    %v1744 = vunpack.c.l.b16 %v681
    %v1745 = vunpack.c.h.b16 %v681
    %v1746 = vunpack.c.l.b16 %v682
    %v1747 = vunpack.c.h.b16 %v682
    %v1748 = vunpack.c.l.b16 %v683
    %v1749 = vunpack.c.h.b16 %v683
    %v1750 = vunpack.c.l.b16 %v684
    %v1751 = vunpack.c.h.b16 %v684
    %v1752 = vunpack.c.l.b16 %v685
    %v1753 = vunpack.c.h.b16 %v685
    %v1754 = vunpack.c.l.b16 %v686
    %v1755 = vunpack.c.h.b16 %v686
    %v1756 = vunpack.c.l.b16 %v687
    %v1757 = vunpack.c.h.b16 %v687
    %v1758 = vunpack.c.l.b16 %v688
    %v1759 = vunpack.c.h.b16 %v688
    %v1760 = vunpack.c.l.b16 %v689
    %v1761 = vunpack.c.h.b16 %v689
    %v1762 = vunpack.c.l.b16 %v690
    %v1763 = vunpack.c.h.b16 %v690
    %v1764 = vunpack.c.l.b16 %v691
    %v1765 = vunpack.c.h.b16 %v691
    %v1766 = vunpack.c.l.b16 %v692
    %v1767 = vunpack.c.h.b16 %v692
    %v1768 = vunpack.c.l.b16 %v693
    %v1769 = vunpack.c.h.b16 %v693
    %v1770 = vunpack.c.l.b16 %v694
    %v1771 = vunpack.c.h.b16 %v694
    %v1772 = vunpack.c.l.b16 %v695
    %v1773 = vunpack.c.h.b16 %v695
    %v1774 = vunpack.c.l.b16 %v696
    %v1775 = vunpack.c.h.b16 %v696
    %v1776 = vunpack.c.l.b16 %v697
    %v1777 = vunpack.c.h.b16 %v697
    %v1778 = vunpack.c.l.b16 %v698
    %v1779 = vunpack.c.h.b16 %v698
    %v1780 = vunpack.c.l.b16 %v699
    %v1781 = vunpack.c.h.b16 %v699
    %v1782 = vunpack.c.l.b16 %v700
    %v1783 = vunpack.c.h.b16 %v700
    %v1784 = vunpack.c.l.b16 %v701
    %v1785 = vunpack.c.h.b16 %v701
    %v1786 = vunpack.c.l.b16 %v702
    %v1787 = vunpack.c.h.b16 %v702
    %v1788 = vunpack.c.l.b16 %v703
    %v1789 = vunpack.c.h.b16 %v703
    %v1790 = vunpack.c.l.b16 %v704
    %v1791 = vunpack.c.h.b16 %v704
    %v1792 = vunpack.c.l.b16 %v705
    %v1793 = vunpack.c.h.b16 %v705
    %v1794 = vunpack.c.l.b16 %v706
    %v1795 = vunpack.c.h.b16 %v706
    %v1796 = vunpack.c.l.b16 %v707
    %v1797 = vunpack.c.h.b16 %v707
    %v1798 = vunpack.c.l.b16 %v708
    %v1799 = vunpack.c.h.b16 %v708
    %v1800 = vunpack.c.l.b16 %v709
    %v1801 = vunpack.c.h.b16 %v709
    %v1802 = vunpack.c.l.b16 %v710
    %v1803 = vunpack.c.h.b16 %v710
    %v1804 = vunpack.c.l.b16 %v711
    %v1805 = vunpack.c.h.b16 %v711
    %v1806 = vunpack.c.l.b16 %v712
    %v1807 = vunpack.c.h.b16 %v712
    %v1808 = vunpack.c.l.b16 %v713
    %v1809 = vunpack.c.h.b16 %v713
    %v1810 = vunpack.c.l.b16 %v714
    %v1811 = vunpack.c.h.b16 %v714
    %v1812 = vunpack.c.l.b16 %v715
    %v1813 = vunpack.c.h.b16 %v715
    %v1814 = vunpack.c.l.b16 %v716
    %v1815 = vunpack.c.h.b16 %v716
    %v1816 = vunpack.c.l.b16 %v717
    %v1817 = vunpack.c.h.b16 %v717
    %v1818 = vunpack.c.l.b16 %v718
    %v1819 = vunpack.c.h.b16 %v718
    %v1820 = vunpack.c.l.b16 %v719
    %v1821 = vunpack.c.h.b16 %v719
    %v1822 = vunpack.c.l.b16 %v720
    %v1823 = vunpack.c.h.b16 %v720
    %v1824 = vunpack.c.l.b16 %v721
    %v1825 = vunpack.c.h.b16 %v721
    %v1826 = vunpack.c.l.b16 %v722
    %v1827 = vunpack.c.h.b16 %v722
    %v1828 = vunpack.c.l.b16 %v723
    %v1829 = vunpack.c.h.b16 %v723
    %v1830 = vunpack.c.l.b16 %v724
    %v1831 = vunpack.c.h.b16 %v724
    %v1832 = vunpack.c.l.b16 %v725
    %v1833 = vunpack.c.h.b16 %v725
    %v1834 = vunpack.c.l.b16 %v726
    %v1835 = vunpack.c.h.b16 %v726
    %v1836 = vunpack.c.l.b16 %v727
    %v1837 = vunpack.c.h.b16 %v727
    %v1838 = vunpack.c.l.b16 %v728
    %v1839 = vunpack.c.h.b16 %v728
    %v1840 = vunpack.c.l.b16 %v729
    %v1841 = vunpack.c.h.b16 %v729
    %v1842 = vunpack.c.l.b16 %v730
    %v1843 = vunpack.c.h.b16 %v730
    %v1844 = vunpack.c.l.b16 %v731
    %v1845 = vunpack.c.h.b16 %v731
    %v1846 = vunpack.c.l.b16 %v732
    %v1847 = vunpack.c.h.b16 %v732
    %v1848 = vunpack.c.l.b16 %v733
    %v1849 = vunpack.c.h.b16 %v733
    %v1850 = vunpack.c.l.b16 %v734
    %v1851 = vunpack.c.h.b16 %v734
    %v1852 = vunpack.c.l.b16 %v735
    %v1853 = vunpack.c.h.b16 %v735
    %v1854 = vunpack.c.l.b16 %v736
    %v1855 = vunpack.c.h.b16 %v736
    %v1856 = vunpack.c.l.b16 %v737
    %v1857 = vunpack.c.h.b16 %v737
    %v1858 = vunpack.c.l.b16 %v738
    %v1859 = vunpack.c.h.b16 %v738
    %v1860 = vunpack.c.l.b16 %v739
    %v1861 = vunpack.c.h.b16 %v739
    %v1862 = vunpack.c.l.b16 %v740
    %v1863 = vunpack.c.h.b16 %v740
    %v1864 = vunpack.c.l.b16 %v741
    %v1865 = vunpack.c.h.b16 %v741
    %v1866 = vunpack.c.l.b16 %v742
    %v1867 = vunpack.c.h.b16 %v742
    %v1868 = vunpack.c.l.b16 %v743
    %v1869 = vunpack.c.h.b16 %v743
    %v1870 = vunpack.c.l.b16 %v744
    %v1871 = vunpack.c.h.b16 %v744
    %v1872 = vunpack.c.l.b16 %v745
    %v1873 = vunpack.c.h.b16 %v745
    %v1874 = vunpack.c.l.b16 %v746
    %v1875 = vunpack.c.h.b16 %v746
    %v1876 = vunpack.c.l.b16 %v747
    %v1877 = vunpack.c.h.b16 %v747
    %v1878 = vunpack.c.l.b16 %v748
    %v1879 = vunpack.c.h.b16 %v748
    %v1880 = vunpack.c.l.b16 %v749
    %v1881 = vunpack.c.h.b16 %v749
    %v1882 = vunpack.c.l.b16 %v750
    %v1883 = vunpack.c.h.b16 %v750
    %v1884 = vunpack.c.l.b16 %v751
    %v1885 = vunpack.c.h.b16 %v751
    %v1886 = vunpack.c.l.b16 %v752
    %v1887 = vunpack.c.h.b16 %v752
    %v1888 = vunpack.c.l.b16 %v753
    %v1889 = vunpack.c.h.b16 %v753
    %v1890 = vunpack.c.l.b16 %v754
    %v1891 = vunpack.c.h.b16 %v754
    %v1892 = vunpack.c.l.b16 %v755
    %v1893 = vunpack.c.h.b16 %v755
    %v1894 = vunpack.c.l.b16 %v756
    %v1895 = vunpack.c.h.b16 %v756
    %v1896 = vunpack.c.l.b16 %v757
    %v1897 = vunpack.c.h.b16 %v757
    %v1898 = vunpack.c.l.b16 %v758
    %v1899 = vunpack.c.h.b16 %v758
    %v1900 = vunpack.c.l.b16 %v759
    %v1901 = vunpack.c.h.b16 %v759
    %v1902 = vunpack.c.l.b16 %v760
    %v1903 = vunpack.c.h.b16 %v760
    %v1904 = vunpack.c.l.b16 %v761
    %v1905 = vunpack.c.h.b16 %v761
    %v1906 = vunpack.c.l.b16 %v762
    %v1907 = vunpack.c.h.b16 %v762
    %v1908 = vunpack.c.l.b16 %v763
    %v1909 = vunpack.c.h.b16 %v763
    %v1910 = vunpack.c.l.b16 %v764
    %v1911 = vunpack.c.h.b16 %v764
    %v1912 = vunpack.c.l.b16 %v765
    %v1913 = vunpack.c.h.b16 %v765
    %v1914 = vunpack.c.l.b16 %v766
    %v1915 = vunpack.c.h.b16 %v766
    %v1916 = vunpack.c.l.b16 %v767
    %v1917 = vunpack.c.h.b16 %v767
    %v1918 = vunpack.c.l.b16 %v768
    %v1919 = vunpack.c.h.b16 %v768
    %v1920 = vunpack.c.l.b16 %v769
    %v1921 = vunpack.c.h.b16 %v769
    %v1922 = vunpack.c.l.b16 %v770
    %v1923 = vunpack.c.h.b16 %v770
    %v1924 = vunpack.c.l.b16 %v771
    %v1925 = vunpack.c.h.b16 %v771
    %v1926 = vunpack.c.l.b16 %v772
    %v1927 = vunpack.c.h.b16 %v772
    %v1928 = vunpack.c.l.b16 %v773
    %v1929 = vunpack.c.h.b16 %v773
    %v1930 = vunpack.c.l.b16 %v774
    %v1931 = vunpack.c.h.b16 %v774
    %v1932 = vunpack.c.l.b16 %v775
    %v1933 = vunpack.c.h.b16 %v775
    %v1934 = vunpack.c.l.b16 %v776
    %v1935 = vunpack.c.h.b16 %v776
    %v1936 = vunpack.c.l.b16 %v777
    %v1937 = vunpack.c.h.b16 %v777
    %v1938 = vunpack.c.l.b16 %v778
    %v1939 = vunpack.c.h.b16 %v778
    %v1940 = vunpack.c.l.b16 %v779
    %v1941 = vunpack.c.h.b16 %v779
    %v1942 = vunpack.c.l.b16 %v780
    %v1943 = vunpack.c.h.b16 %v780
    %v1944 = vunpack.c.l.b16 %v781
    %v1945 = vunpack.c.h.b16 %v781
    %v1946 = vunpack.c.l.b16 %v782
    %v1947 = vunpack.c.h.b16 %v782
    %v1948 = vunpack.c.l.b16 %v783
    %v1949 = vunpack.c.h.b16 %v783
    %v1950 = vunpack.c.l.b16 %v784
    %v1951 = vunpack.c.h.b16 %v784
    %v1952 = vunpack.c.l.b16 %v785
    %v1953 = vunpack.c.h.b16 %v785
    %v1954 = vunpack.c.l.b16 %v786
    %v1955 = vunpack.c.h.b16 %v786
    %v1956 = vunpack.c.l.b16 %v787
    %v1957 = vunpack.c.h.b16 %v787
    %v1958 = vunpack.c.l.b16 %v788
    %v1959 = vunpack.c.h.b16 %v788
    %v1960 = vunpack.c.l.b16 %v789
    %v1961 = vunpack.c.h.b16 %v789
    %v1962 = vunpack.c.l.b16 %v790
    %v1963 = vunpack.c.h.b16 %v790
    %v1964 = vunpack.c.l.b16 %v791
    %v1965 = vunpack.c.h.b16 %v791
    %v1966 = vunpack.c.l.b16 %v792
    %v1967 = vunpack.c.h.b16 %v792
    %v1968 = vunpack.c.l.b16 %v793
    %v1969 = vunpack.c.h.b16 %v793
    %v1970 = vunpack.c.l.b16 %v794
    %v1971 = vunpack.c.h.b16 %v794
    %v1972 = vunpack.c.l.b16 %v795
    %v1973 = vunpack.c.h.b16 %v795
    %v1974 = vunpack.c.l.b16 %v796
    %v1975 = vunpack.c.h.b16 %v796
    %v1976 = vunpack.c.l.b16 %v797
    %v1977 = vunpack.c.h.b16 %v797
    %v1978 = vunpack.c.l.b16 %v798
    %v1979 = vunpack.c.h.b16 %v798
    %v1980 = vunpack.c.l.b16 %v799
    %v1981 = vunpack.c.h.b16 %v799
    %v1982 = vunpack.c.l.b16 %v800
    %v1983 = vunpack.c.h.b16 %v800
    %v1984 = vunpack.c.l.b16 %v801
    %v1985 = vunpack.c.h.b16 %v801
    %v1986 = vunpack.c.l.b16 %v802
    %v1987 = vunpack.c.h.b16 %v802
    %v1988 = vunpack.c.l.b16 %v803
    %v1989 = vunpack.c.h.b16 %v803
    %v1990 = vunpack.c.l.b16 %v804
    %v1991 = vunpack.c.h.b16 %v804
    %v1992 = vunpack.c.l.b16 %v805
    %v1993 = vunpack.c.h.b16 %v805
    %v1994 = vunpack.c.l.b16 %v806
    %v1995 = vunpack.c.h.b16 %v806
    %v1996 = vunpack.c.l.b16 %v807
    %v1997 = vunpack.c.h.b16 %v807
    %v1998 = vunpack.c.l.b16 %v808
    %v1999 = vunpack.c.h.b16 %v808
    %v2000 = vunpack.c.l.b16 %v809
    %v2001 = vunpack.c.h.b16 %v809
    %v2002 = vunpack.c.l.b16 %v810
    %v2003 = vunpack.c.h.b16 %v810
    %v2004 = vunpack.c.l.b16 %v811
    %v2005 = vunpack.c.h.b16 %v811
    %v2006 = vunpack.c.l.b16 %v812
    %v2007 = vunpack.c.h.b16 %v812
    %v2008 = vunpack.c.l.b16 %v813
    %v2009 = vunpack.c.h.b16 %v813
    %v2010 = vunpack.c.l.b16 %v814
    %v2011 = vunpack.c.h.b16 %v814
    %v2012 = vunpack.c.l.b16 %v815
    %v2013 = vunpack.c.h.b16 %v815
    %v2014 = vunpack.c.l.b16 %v816
    %v2015 = vunpack.c.h.b16 %v816
    %v2016 = vunpack.c.l.b16 %v817
    %v2017 = vunpack.c.h.b16 %v817
    %v2018 = vunpack.c.l.b16 %v818
    %v2019 = vunpack.c.h.b16 %v818
    %v2020 = vunpack.c.l.b16 %v819
    %v2021 = vunpack.c.h.b16 %v819
    %v2022 = vunpack.c.l.b16 %v820
    %v2023 = vunpack.c.h.b16 %v820
    %v2024 = vunpack.c.l.b16 %v821
    %v2025 = vunpack.c.h.b16 %v821
    %v2026 = vunpack.c.l.b16 %v822
    %v2027 = vunpack.c.h.b16 %v822
    %v2028 = vunpack.c.l.b16 %v823
    %v2029 = vunpack.c.h.b16 %v823
    %v2030 = vunpack.c.l.b16 %v824
    %v2031 = vunpack.c.h.b16 %v824
    %v2032 = vunpack.c.l.b16 %v825
    %v2033 = vunpack.c.h.b16 %v825
    %v2034 = vunpack.c.l.b16 %v826
    %v2035 = vunpack.c.h.b16 %v826
    %v2036 = vunpack.c.l.b16 %v827
    %v2037 = vunpack.c.h.b16 %v827
    %v2038 = vunpack.c.l.b16 %v828
    %v2039 = vunpack.c.h.b16 %v828
    %v2040 = vunpack.c.l.b16 %v829
    %v2041 = vunpack.c.h.b16 %v829
    %v2042 = vunpack.c.l.b16 %v830
    %v2043 = vunpack.c.h.b16 %v830
    %v2044 = vunpack.c.l.b16 %v831
    %v2045 = vunpack.c.h.b16 %v831
    %v2046 = vunpack.c.l.b16 %v832
    %v2047 = vunpack.c.h.b16 %v832
    %v2048 = vunpack.c.l.b16 %v833
    %v2049 = vunpack.c.h.b16 %v833
    %v2050 = vunpack.c.l.b16 %v834
    %v2051 = vunpack.c.h.b16 %v834
    %v2052 = vunpack.c.l.b16 %v835
    %v2053 = vunpack.c.h.b16 %v835
    %v2054 = vunpack.c.l.b16 %v836
    %v2055 = vunpack.c.h.b16 %v836
    %v2056 = vunpack.c.l.b16 %v837
    %v2057 = vunpack.c.h.b16 %v837
    %v2058 = vunpack.c.l.b16 %v838
    %v2059 = vunpack.c.h.b16 %v838
    %v2060 = vunpack.c.l.b16 %v839
    %v2061 = vunpack.c.h.b16 %v839
    %v2062 = vunpack.c.l.b16 %v840
    %v2063 = vunpack.c.h.b16 %v840
    %v2064 = vunpack.c.l.b16 %v841
    %v2065 = vunpack.c.h.b16 %v841
    %v2066 = vunpack.c.l.b16 %v842
    %v2067 = vunpack.c.h.b16 %v842
    %v2068 = vunpack.c.l.b16 %v843
    %v2069 = vunpack.c.h.b16 %v843
    %v2070 = vunpack.c.l.b16 %v844
    %v2071 = vunpack.c.h.b16 %v844
    %v2072 = vunpack.c.l.b16 %v845
    %v2073 = vunpack.c.h.b16 %v845
    %v2074 = vunpack.c.l.b16 %v846
    %v2075 = vunpack.c.h.b16 %v846
    %v2076 = vunpack.c.l.b16 %v847
    %v2077 = vunpack.c.h.b16 %v847
    %v2078 = vunpack.c.l.b16 %v848
    %v2079 = vunpack.c.h.b16 %v848
    %v2080 = vunpack.c.l.b16 %v849
    %v2081 = vunpack.c.h.b16 %v849
    %v2082 = vunpack.c.l.b16 %v850
    %v2083 = vunpack.c.h.b16 %v850
    %v2084 = vunpack.c.l.b16 %v851
    %v2085 = vunpack.c.h.b16 %v851
    %v2086 = vunpack.c.l.b16 %v852
    %v2087 = vunpack.c.h.b16 %v852
    %v2088 = vunpack.c.l.b16 %v853
    %v2089 = vunpack.c.h.b16 %v853
    %v2090 = vunpack.c.l.b16 %v854
    %v2091 = vunpack.c.h.b16 %v854
    %v2092 = vunpack.c.l.b16 %v855
    %v2093 = vunpack.c.h.b16 %v855
    %v2094 = vunpack.c.l.b16 %v856
    %v2095 = vunpack.c.h.b16 %v856
    %v2096 = vunpack.c.l.b16 %v857
    %v2097 = vunpack.c.h.b16 %v857
    %v2098 = vunpack.c.l.b16 %v858
    %v2099 = vunpack.c.h.b16 %v858
    %v2100 = vunpack.c.l.b16 %v859
    %v2101 = vunpack.c.h.b16 %v859
    %v2102 = vunpack.c.l.b16 %v860
    %v2103 = vunpack.c.h.b16 %v860
    %v2104 = vunpack.c.l.b16 %v861
    %v2105 = vunpack.c.h.b16 %v861
    %v2106 = vunpack.c.l.b16 %v862
    %v2107 = vunpack.c.h.b16 %v862
    %v2108 = vunpack.c.l.b16 %v863
    %v2109 = vunpack.c.h.b16 %v863
    %v2110 = vunpack.c.l.b16 %v864
    %v2111 = vunpack.c.h.b16 %v864
    %v2112 = vunpack.c.l.b16 %v865
    %v2113 = vunpack.c.h.b16 %v865
    %v2114 = vunpack.c.l.b16 %v866
    %v2115 = vunpack.c.h.b16 %v866
    %v2116 = vunpack.c.l.b16 %v867
    %v2117 = vunpack.c.h.b16 %v867
    %v2118 = vunpack.c.l.b16 %v868
    %v2119 = vunpack.c.h.b16 %v868
    %v2120 = vunpack.c.l.b16 %v869
    %v2121 = vunpack.c.h.b16 %v869
    %v2122 = vunpack.c.l.b16 %v870
    %v2123 = vunpack.c.h.b16 %v870
    %v2124 = vunpack.c.l.b16 %v871
    %v2125 = vunpack.c.h.b16 %v871
    %v2126 = vunpack.c.l.b16 %v872
    %v2127 = vunpack.c.h.b16 %v872
    %v2128 = vunpack.c.l.b16 %v873
    %v2129 = vunpack.c.h.b16 %v873
    %v2130 = vunpack.c.l.b16 %v874
    %v2131 = vunpack.c.h.b16 %v874
    %v2132 = vunpack.c.l.b16 %v875
    %v2133 = vunpack.c.h.b16 %v875
    %v2134 = vunpack.c.l.b16 %v876
    %v2135 = vunpack.c.h.b16 %v876
    %v2136 = vunpack.c.l.b16 %v877
    %v2137 = vunpack.c.h.b16 %v877
    %v2138 = vunpack.c.l.b16 %v878
    %v2139 = vunpack.c.h.b16 %v878
    %v2140 = vunpack.c.l.b16 %v879
    %v2141 = vunpack.c.h.b16 %v879
    %v2142 = vunpack.c.l.b16 %v880
    %v2143 = vunpack.c.h.b16 %v880
    %v2144 = vunpack.c.l.b16 %v881
    %v2145 = vunpack.c.h.b16 %v881
    %v2146 = vunpack.c.l.b16 %v882
    %v2147 = vunpack.c.h.b16 %v882
    %v2148 = vunpack.c.l.b16 %v883
    %v2149 = vunpack.c.h.b16 %v883
    %v2150 = vunpack.c.l.b16 %v884
    %v2151 = vunpack.c.h.b16 %v884
    %v2152 = vunpack.c.l.b16 %v885
    %v2153 = vunpack.c.h.b16 %v885
    %v2154 = vunpack.c.l.b16 %v886
    %v2155 = vunpack.c.h.b16 %v886
    %v2156 = vunpack.c.l.b16 %v887
    %v2157 = vunpack.c.h.b16 %v887
    %v2158 = vunpack.c.l.b16 %v888
    %v2159 = vunpack.c.h.b16 %v888
    %v2160 = vunpack.c.l.b16 %v889
    %v2161 = vunpack.c.h.b16 %v889
    %v2162 = vunpack.c.l.b16 %v890
    %v2163 = vunpack.c.h.b16 %v890
    %v2164 = vunpack.c.l.b16 %v891
    %v2165 = vunpack.c.h.b16 %v891
    %v2166 = vunpack.c.l.b16 %v892
    %v2167 = vunpack.c.h.b16 %v892
    %v2168 = vunpack.c.l.b16 %v893
    %v2169 = vunpack.c.h.b16 %v893
    %v2170 = vunpack.c.l.b16 %v894
    %v2171 = vunpack.c.h.b16 %v894
    %v2172 = vunpack.c.l.b16 %v895
    %v2173 = vunpack.c.h.b16 %v895
    %v2174 = vunpack.c.l.b16 %v896
    %v2175 = vunpack.c.h.b16 %v896
    %v2176 = vunpack.c.l.b16 %v897
    %v2177 = vunpack.c.h.b16 %v897
    %v2178 = vunpack.c.l.b16 %v898
    %v2179 = vunpack.c.h.b16 %v898
    %v2180 = vunpack.c.l.b16 %v899
    %v2181 = vunpack.c.h.b16 %v899
    %v2182 = vunpack.c.l.b16 %v900
    %v2183 = vunpack.c.h.b16 %v900
    %v2184 = vunpack.c.l.b16 %v901
    %v2185 = vunpack.c.h.b16 %v901
    %v2186 = vunpack.c.l.b16 %v902
    %v2187 = vunpack.c.h.b16 %v902
    %v2188 = vunpack.c.l.b16 %v903
    %v2189 = vunpack.c.h.b16 %v903
    %v2190 = vunpack.c.l.b16 %v904
    %v2191 = vunpack.c.h.b16 %v904
    %v2192 = vunpack.c.l.b16 %v905
    %v2193 = vunpack.c.h.b16 %v905
    %v2194 = vunpack.c.l.b16 %v906
    %v2195 = vunpack.c.h.b16 %v906
    %v2196 = vunpack.c.l.b16 %v907
    %v2197 = vunpack.c.h.b16 %v907
    %v2198 = vunpack.c.l.b16 %v908
    %v2199 = vunpack.c.h.b16 %v908
    %v2200 = vunpack.c.l.b16 %v909
    %v2201 = vunpack.c.h.b16 %v909
    %v2202 = vunpack.c.l.b16 %v910
    %v2203 = vunpack.c.h.b16 %v910
    %v2204 = vunpack.c.l.b16 %v911
    %v2205 = vunpack.c.h.b16 %v911
    %v2206 = vunpack.c.l.b16 %v912
    %v2207 = vunpack.c.h.b16 %v912
    %v2208 = vunpack.c.l.b16 %v913
    %v2209 = vunpack.c.h.b16 %v913
    %v2210 = vunpack.c.l.b16 %v914
    %v2211 = vunpack.c.h.b16 %v914
    %v2212 = vunpack.c.l.b16 %v915
    %v2213 = vunpack.c.h.b16 %v915
    %v2214 = vunpack.c.l.b16 %v916
    %v2215 = vunpack.c.h.b16 %v916
    %v2216 = vunpack.c.l.b16 %v917
    %v2217 = vunpack.c.h.b16 %v917
    %v2218 = vunpack.c.l.b16 %v918
    %v2219 = vunpack.c.h.b16 %v918
    %v2220 = vunpack.c.l.b16 %v919
    %v2221 = vunpack.c.h.b16 %v919
    %v2222 = vunpack.c.l.b16 %v920
    %v2223 = vunpack.c.h.b16 %v920
    %v2224 = vunpack.c.l.b16 %v921
    %v2225 = vunpack.c.h.b16 %v921
    %v2226 = vunpack.c.l.b16 %v922
    %v2227 = vunpack.c.h.b16 %v922
    %v2228 = vunpack.c.l.b16 %v923
    %v2229 = vunpack.c.h.b16 %v923
    %v2230 = vunpack.c.l.b16 %v924
    %v2231 = vunpack.c.h.b16 %v924
    %v2232 = vunpack.c.l.b16 %v925
    %v2233 = vunpack.c.h.b16 %v925
    %v2234 = vunpack.c.l.b16 %v926
    %v2235 = vunpack.c.h.b16 %v926
    %v2236 = vunpack.c.l.b16 %v927
    %v2237 = vunpack.c.h.b16 %v927
    %v2238 = vunpack.c.l.b16 %v928
    %v2239 = vunpack.c.h.b16 %v928
    %v2240 = vunpack.c.l.b16 %v929
    %v2241 = vunpack.c.h.b16 %v929
    %v2242 = vunpack.c.l.b16 %v930
    %v2243 = vunpack.c.h.b16 %v930
    %v2244 = vunpack.c.l.b16 %v931
    %v2245 = vunpack.c.h.b16 %v931
    %v2246 = vunpack.c.l.b16 %v932
    %v2247 = vunpack.c.h.b16 %v932
    %v2248 = vunpack.c.l.b16 %v933
    %v2249 = vunpack.c.h.b16 %v933
    %v2250 = vunpack.c.l.b16 %v934
    %v2251 = vunpack.c.h.b16 %v934
    %v2252 = vunpack.c.l.b16 %v935
    %v2253 = vunpack.c.h.b16 %v935
    %v2254 = vunpack.c.l.b16 %v936
    %v2255 = vunpack.c.h.b16 %v936
    %v2256 = vunpack.c.l.b16 %v937
    %v2257 = vunpack.c.h.b16 %v937
    %v2258 = vunpack.c.l.b16 %v938
    %v2259 = vunpack.c.h.b16 %v938
    %v2260 = vunpack.c.l.b16 %v939
    %v2261 = vunpack.c.h.b16 %v939
    %v2262 = vunpack.c.l.b16 %v940
    %v2263 = vunpack.c.h.b16 %v940
    %v2264 = vunpack.c.l.b16 %v941
    %v2265 = vunpack.c.h.b16 %v941
    %v2266 = vunpack.c.l.b16 %v942
    %v2267 = vunpack.c.h.b16 %v942
    %v2268 = vunpack.c.l.b16 %v943
    %v2269 = vunpack.c.h.b16 %v943
    %v2270 = vunpack.c.l.b16 %v944
    %v2271 = vunpack.c.h.b16 %v944
    %v2272 = vunpack.c.l.b16 %v945
    %v2273 = vunpack.c.h.b16 %v945
    %v2274 = vunpack.c.l.b16 %v946
    %v2275 = vunpack.c.h.b16 %v946
    %v2276 = vunpack.c.l.b16 %v947
    %v2277 = vunpack.c.h.b16 %v947
    %v2278 = vunpack.c.l.b16 %v948
    %v2279 = vunpack.c.h.b16 %v948
    %v2280 = vunpack.c.l.b16 %v949
    %v2281 = vunpack.c.h.b16 %v949
    %v2282 = vunpack.c.l.b16 %v950
    %v2283 = vunpack.c.h.b16 %v950
    %v2284 = vunpack.c.l.b16 %v951
    %v2285 = vunpack.c.h.b16 %v951
    %v2286 = vunpack.c.l.b16 %v952
    %v2287 = vunpack.c.h.b16 %v952
    %v2288 = vunpack.c.l.b16 %v953
    %v2289 = vunpack.c.h.b16 %v953
    %v2290 = vunpack.c.l.b16 %v954
    %v2291 = vunpack.c.h.b16 %v954
    %v2292 = vunpack.c.l.b16 %v955
    %v2293 = vunpack.c.h.b16 %v955
    %v2294 = vunpack.c.l.b16 %v956
    %v2295 = vunpack.c.h.b16 %v956
    %v2296 = vunpack.c.l.b16 %v957
    %v2297 = vunpack.c.h.b16 %v957
    %v2298 = vunpack.c.l.b16 %v958
    %v2299 = vunpack.c.h.b16 %v958
    %v2300 = vunpack.c.l.b16 %v959
    %v2301 = vunpack.c.h.b16 %v959
    %v2302 = vunpack.c.l.b16 %v960
    %v2303 = vunpack.c.h.b16 %v960
    %v2304 = vunpack.c.l.b16 %v961
    %v2305 = vunpack.c.h.b16 %v961
    %v2306 = vunpack.c.l.b16 %v962
    %v2307 = vunpack.c.h.b16 %v962
    %v2308 = vunpack.c.l.b16 %v963
    %v2309 = vunpack.c.h.b16 %v963
    %v2310 = vunpack.c.l.b16 %v964
    %v2311 = vunpack.c.h.b16 %v964
    %v2312 = vunpack.c.l.b16 %v965
    %v2313 = vunpack.c.h.b16 %v965
    %v2314 = vunpack.c.l.b16 %v966
    %v2315 = vunpack.c.h.b16 %v966
    %v2316 = vunpack.c.l.b16 %v967
    %v2317 = vunpack.c.h.b16 %v967
    %v2318 = vunpack.c.l.b16 %v968
    %v2319 = vunpack.c.h.b16 %v968
    %v2320 = vunpack.c.l.b16 %v969
    %v2321 = vunpack.c.h.b16 %v969
    %v2322 = vunpack.c.l.b16 %v970
    %v2323 = vunpack.c.h.b16 %v970
    %v2324 = vunpack.c.l.b16 %v971
    %v2325 = vunpack.c.h.b16 %v971
    %v2326 = vunpack.c.l.b16 %v972
    %v2327 = vunpack.c.h.b16 %v972
    %v2328 = vunpack.c.l.b16 %v973
    %v2329 = vunpack.c.h.b16 %v973
    %v2330 = vunpack.c.l.b16 %v974
    %v2331 = vunpack.c.h.b16 %v974
    %v2332 = vunpack.c.l.b16 %v975
    %v2333 = vunpack.c.h.b16 %v975
    %v2334 = vunpack.c.l.b16 %v976
    %v2335 = vunpack.c.h.b16 %v976
    %v2336 = vunpack.c.l.b16 %v977
    %v2337 = vunpack.c.h.b16 %v977
    %v2338 = vunpack.c.l.b16 %v978
    %v2339 = vunpack.c.h.b16 %v978
    %v2340 = vunpack.c.l.b16 %v979
    %v2341 = vunpack.c.h.b16 %v979
    %v2342 = vunpack.c.l.b16 %v980
    %v2343 = vunpack.c.h.b16 %v980
    %v2344 = vunpack.c.l.b16 %v981
    %v2345 = vunpack.c.h.b16 %v981
    %v2346 = vunpack.c.l.b16 %v982
    %v2347 = vunpack.c.h.b16 %v982
    %v2348 = vunpack.c.l.b16 %v983
    %v2349 = vunpack.c.h.b16 %v983
    %v2350 = vunpack.c.l.b16 %v984
    %v2351 = vunpack.c.h.b16 %v984
    %v2352 = vunpack.c.l.b16 %v985
    %v2353 = vunpack.c.h.b16 %v985
    %v2354 = vunpack.c.l.b16 %v986
    %v2355 = vunpack.c.h.b16 %v986
    %v2356 = vunpack.c.l.b16 %v987
    %v2357 = vunpack.c.h.b16 %v987
    %v2358 = vunpack.c.l.b16 %v988
    %v2359 = vunpack.c.h.b16 %v988
    %v2360 = vunpack.c.l.b16 %v989
    %v2361 = vunpack.c.h.b16 %v989
    %v2362 = vunpack.c.l.b16 %v990
    %v2363 = vunpack.c.h.b16 %v990
    %v2364 = vunpack.c.l.b16 %v991
    %v2365 = vunpack.c.h.b16 %v991
    %v2366 = vunpack.c.l.b16 %v992
    %v2367 = vunpack.c.h.b16 %v992
    %v2368 = vunpack.c.l.b16 %v993
    %v2369 = vunpack.c.h.b16 %v993
    %v2370 = vunpack.c.l.b16 %v994
    %v2371 = vunpack.c.h.b16 %v994
    %v2372 = vunpack.c.l.b16 %v995
    %v2373 = vunpack.c.h.b16 %v995
    %v2374 = vunpack.c.l.b16 %v996
    %v2375 = vunpack.c.h.b16 %v996
    %v2376 = vunpack.c.l.b16 %v997
    %v2377 = vunpack.c.h.b16 %v997
    %v2378 = vunpack.c.l.b16 %v998
    %v2379 = vunpack.c.h.b16 %v998
    %v2380 = vunpack.c.l.b16 %v999
    %v2381 = vunpack.c.h.b16 %v999
    %v2382 = vunpack.c.l.b16 %v1000
    %v2383 = vunpack.c.h.b16 %v1000
    %v2384 = vunpack.c.l.b16 %v1001
    %v2385 = vunpack.c.h.b16 %v1001
    %v2386 = vunpack.c.l.b16 %v1002
    %v2387 = vunpack.c.h.b16 %v1002
    %v2388 = vunpack.c.l.b16 %v1003
    %v2389 = vunpack.c.h.b16 %v1003
    %v2390 = vunpack.c.l.b16 %v1004
    %v2391 = vunpack.c.h.b16 %v1004
    %v2392 = vunpack.c.l.b16 %v1005
    %v2393 = vunpack.c.h.b16 %v1005
    %v2394 = vunpack.c.l.b16 %v1006
    %v2395 = vunpack.c.h.b16 %v1006
    %v2396 = vunpack.c.l.b16 %v1007
    %v2397 = vunpack.c.h.b16 %v1007
    %v2398 = vunpack.c.l.b16 %v1008
    %v2399 = vunpack.c.h.b16 %v1008
    %v2400 = vunpack.c.l.b16 %v1009
    %v2401 = vunpack.c.h.b16 %v1009
    %v2402 = vunpack.c.l.b16 %v1010
    %v2403 = vunpack.c.h.b16 %v1010
    %v2404 = vunpack.c.l.b16 %v1011
    %v2405 = vunpack.c.h.b16 %v1011
    %v2406 = vunpack.c.l.b16 %v1012
    %v2407 = vunpack.c.h.b16 %v1012
    %v2408 = vunpack.c.l.b16 %v1013
    %v2409 = vunpack.c.h.b16 %v1013
    %v2410 = vunpack.c.l.b16 %v1014
    %v2411 = vunpack.c.h.b16 %v1014
    %v2412 = vunpack.c.l.b16 %v1015
    %v2413 = vunpack.c.h.b16 %v1015
    %v2414 = vunpack.c.l.b16 %v1016
    %v2415 = vunpack.c.h.b16 %v1016
    %v2416 = vunpack.c.l.b16 %v1017
    %v2417 = vunpack.c.h.b16 %v1017
    %v2418 = vunpack.c.l.b16 %v1018
    %v2419 = vunpack.c.h.b16 %v1018
    %v2420 = vunpack.c.l.b16 %v1019
    %v2421 = vunpack.c.h.b16 %v1019
    %v2422 = vunpack.c.l.b16 %v1020
    %v2423 = vunpack.c.h.b16 %v1020
    %v2424 = vunpack.c.l.b16 %v1021
    %v2425 = vunpack.c.h.b16 %v1021
    %v2426 = vunpack.c.l.b16 %v1022
    %v2427 = vunpack.c.h.b16 %v1022
    %v2428 = vunpack.c.l.b16 %v1023
    %v2429 = vunpack.c.h.b16 %v1023
    %v2430 = vunpack.c.l.b16 %v1024
    %v2431 = vunpack.c.h.b16 %v1024
    %v2432 = vunpack.c.l.b16 %v1025
    %v2433 = vunpack.c.h.b16 %v1025
    %v2434 = vunpack.c.l.b16 %v1026
    %v2435 = vunpack.c.h.b16 %v1026
    %v2436 = vunpack.c.l.b16 %v1027
    %v2437 = vunpack.c.h.b16 %v1027
    %v2438 = vunpack.c.l.b16 %v1028
    %v2439 = vunpack.c.h.b16 %v1028
    %v2440 = vunpack.c.l.b16 %v1029
    %v2441 = vunpack.c.h.b16 %v1029
    %v2442 = vunpack.c.l.b16 %v1030
    %v2443 = vunpack.c.h.b16 %v1030
    %v2444 = vunpack.c.l.b16 %v1031
    %v2445 = vunpack.c.h.b16 %v1031
    %v2446 = vunpack.c.l.b16 %v1032
    %v2447 = vunpack.c.h.b16 %v1032
    %v2448 = vunpack.c.l.b16 %v1033
    %v2449 = vunpack.c.h.b16 %v1033
    %v2450 = vunpack.c.l.b16 %v1034
    %v2451 = vunpack.c.h.b16 %v1034
    %v2452 = vunpack.c.l.b16 %v1035
    %v2453 = vunpack.c.h.b16 %v1035
    %v2454 = vunpack.c.l.b16 %v1036
    %v2455 = vunpack.c.h.b16 %v1036
    %v2456 = vunpack.c.l.b16 %v1037
    %v2457 = vunpack.c.h.b16 %v1037
    %v2458 = vunpack.c.l.b16 %v1038
    %v2459 = vunpack.c.h.b16 %v1038
    %v2460 = vunpack.c.l.b16 %v1039
    %v2461 = vunpack.c.h.b16 %v1039
    %v2462 = vunpack.c.l.b16 %v1040
    %v2463 = vunpack.c.h.b16 %v1040
    %v2464 = vunpack.c.l.b16 %v1041
    %v2465 = vunpack.c.h.b16 %v1041
    %v2466 = vunpack.c.l.b16 %v1042
    %v2467 = vunpack.c.h.b16 %v1042
    %v2468 = vunpack.c.l.b16 %v1043
    %v2469 = vunpack.c.h.b16 %v1043
    %v2470 = vunpack.c.l.b16 %v1044
    %v2471 = vunpack.c.h.b16 %v1044
    %v2472 = vunpack.c.l.b16 %v1045
    %v2473 = vunpack.c.h.b16 %v1045
    %v2474 = vunpack.c.l.b16 %v1046
    %v2475 = vunpack.c.h.b16 %v1046
    %v2476 = vunpack.c.l.b16 %v1047
    %v2477 = vunpack.c.h.b16 %v1047
    %v2478 = vunpack.c.l.b16 %v1048
    %v2479 = vunpack.c.h.b16 %v1048
    %v2480 = vunpack.c.l.b16 %v1049
    %v2481 = vunpack.c.h.b16 %v1049
    %v2482 = vunpack.c.l.b16 %v1050
    %v2483 = vunpack.c.h.b16 %v1050
    %v2484 = vunpack.c.l.b16 %v1051
    %v2485 = vunpack.c.h.b16 %v1051
    %v2486 = vunpack.c.l.b16 %v1052
    %v2487 = vunpack.c.h.b16 %v1052
    %v2488 = vunpack.c.l.b16 %v1053
    %v2489 = vunpack.c.h.b16 %v1053
    %v2490 = vunpack.c.l.b16 %v1054
    %v2491 = vunpack.c.h.b16 %v1054
    %v2492 = vunpack.c.l.b16 %v1055
    %v2493 = vunpack.c.h.b16 %v1055
    %v2494 = vunpack.c.l.b16 %v1056
    %v2495 = vunpack.c.h.b16 %v1056
    %v2496 = vunpack.c.l.b16 %v1057
    %v2497 = vunpack.c.h.b16 %v1057
    %v2498 = vunpack.c.l.b16 %v1058
    %v2499 = vunpack.c.h.b16 %v1058
    %v2500 = vunpack.c.l.b16 %v1059
    %v2501 = vunpack.c.h.b16 %v1059
    %v2502 = vunpack.c.l.b16 %v1060
    %v2503 = vunpack.c.h.b16 %v1060
    %v2504 = vunpack.c.l.b16 %v1061
    %v2505 = vunpack.c.h.b16 %v1061
    %v2506 = vunpack.c.l.b16 %v1062
    %v2507 = vunpack.c.h.b16 %v1062
    %v2508 = vunpack.c.l.b16 %v1063
    %v2509 = vunpack.c.h.b16 %v1063
    %v2510 = vunpack.c.l.b16 %v1064
    %v2511 = vunpack.c.h.b16 %v1064
    %v2512 = vunpack.c.l.b16 %v1065
    %v2513 = vunpack.c.h.b16 %v1065
    %v2514 = vunpack.c.l.b16 %v1066
    %v2515 = vunpack.c.h.b16 %v1066
    %v2516 = vunpack.c.l.b16 %v1067
    %v2517 = vunpack.c.h.b16 %v1067
    %v2518 = vunpack.c.l.b16 %v1068
    %v2519 = vunpack.c.h.b16 %v1068
    %v2520 = vunpack.c.l.b16 %v1069
    %v2521 = vunpack.c.h.b16 %v1069
    %v2522 = vunpack.c.l.b16 %v1070
    %v2523 = vunpack.c.h.b16 %v1070
    %v2524 = vunpack.c.l.b16 %v1071
    %v2525 = vunpack.c.h.b16 %v1071
    %v2526 = vunpack.c.l.b16 %v1072
    %v2527 = vunpack.c.h.b16 %v1072
    %v2528 = vunpack.c.l.b16 %v1073
    %v2529 = vunpack.c.h.b16 %v1073
    %v2530 = vunpack.c.l.b16 %v1074
    %v2531 = vunpack.c.h.b16 %v1074
    %v2532 = vunpack.c.l.b16 %v1075
    %v2533 = vunpack.c.h.b16 %v1075
    %v2534 = vunpack.c.l.b16 %v1076
    %v2535 = vunpack.c.h.b16 %v1076
    %v2536 = vunpack.c.l.b16 %v1077
    %v2537 = vunpack.c.h.b16 %v1077
    %v2538 = vunpack.c.l.b16 %v1078
    %v2539 = vunpack.c.h.b16 %v1078
    %v2540 = vunpack.c.l.b16 %v1079
    %v2541 = vunpack.c.h.b16 %v1079
    %v2542 = vunpack.c.l.b16 %v1080
    %v2543 = vunpack.c.h.b16 %v1080
    %v2544 = vunpack.c.l.b16 %v1081
    %v2545 = vunpack.c.h.b16 %v1081
    %v2546 = vunpack.c.l.b16 %v1082
    %v2547 = vunpack.c.h.b16 %v1082
    %v2548 = vunpack.c.l.b16 %v1083
    %v2549 = vunpack.c.h.b16 %v1083
    %v2550 = vunpack.c.l.b16 %v1084
    %v2551 = vunpack.c.h.b16 %v1084
    %v2552 = vunpack.c.l.b16 %v1085
    %v2553 = vunpack.c.h.b16 %v1085
    %v2554 = vunpack.c.l.b16 %v1086
    %v2555 = vunpack.c.h.b16 %v1086
    %v2556 = vunpack.c.l.b16 %v1087
    %v2557 = vunpack.c.h.b16 %v1087
    %v2558 = vunpack.c.l.b16 %v1088
    %v2559 = vunpack.c.h.b16 %v1088
    %v2560 = vunpack.c.l.b16 %v1089
    %v2561 = vunpack.c.h.b16 %v1089
    %v2562 = vunpack.c.l.b16 %v1090
    %v2563 = vunpack.c.h.b16 %v1090
    %v2564 = vunpack.c.l.b16 %v1091
    %v2565 = vunpack.c.h.b16 %v1091
    %v2566 = vunpack.c.l.b16 %v1092
    %v2567 = vunpack.c.h.b16 %v1092
    %v2568 = vunpack.c.l.b16 %v1093
    %v2569 = vunpack.c.h.b16 %v1093
    %v2570 = vunpack.c.l.b16 %v1094
    %v2571 = vunpack.c.h.b16 %v1094
    %v2572 = vunpack.c.l.b16 %v1095
    %v2573 = vunpack.c.h.b16 %v1095
    %v2574 = vunpack.c.l.b16 %v1096
    %v2575 = vunpack.c.h.b16 %v1096
    %v2576 = vunpack.c.l.b16 %v1097
    %v2577 = vunpack.c.h.b16 %v1097
    %v2578 = vunpack.c.l.b16 %v1098
    %v2579 = vunpack.c.h.b16 %v1098
    %v2580 = vunpack.c.l.b16 %v1099
    %v2581 = vunpack.c.h.b16 %v1099
    %v2582 = vunpack.c.l.b16 %v1100
    %v2583 = vunpack.c.h.b16 %v1100
    %v2584 = vunpack.c.l.b16 %v1101
    %v2585 = vunpack.c.h.b16 %v1101
    %v2586 = vunpack.c.l.b16 %v1102
    %v2587 = vunpack.c.h.b16 %v1102
    %v2588 = vunpack.c.l.b16 %v1103
    %v2589 = vunpack.c.h.b16 %v1103
    %v2590 = vunpack.c.l.b16 %v1104
    %v2591 = vunpack.c.h.b16 %v1104
    %v2592 = vunpack.c.l.b16 %v1105
    %v2593 = vunpack.c.h.b16 %v1105
    %v2594 = vunpack.c.l.b16 %v1106
    %v2595 = vunpack.c.h.b16 %v1106
    %v2596 = vunpack.c.l.b16 %v1107
    %v2597 = vunpack.c.h.b16 %v1107
    %v2598 = vunpack.c.l.b16 %v1108
    %v2599 = vunpack.c.h.b16 %v1108
    %v2600 = vunpack.c.l.b16 %v1109
    %v2601 = vunpack.c.h.b16 %v1109
    %v2602 = vunpack.c.l.b16 %v1110
    %v2603 = vunpack.c.h.b16 %v1110
    %v2604 = vunpack.c.l.b16 %v1111
    %v2605 = vunpack.c.h.b16 %v1111
    %v2606 = vunpack.c.l.b16 %v1112
    %v2607 = vunpack.c.h.b16 %v1112
    %v2608 = vunpack.c.l.b16 %v1113
    %v2609 = vunpack.c.h.b16 %v1113
    %v2610 = vunpack.c.l.b16 %v1114
    %v2611 = vunpack.c.h.b16 %v1114
    %v2612 = vunpack.c.l.b16 %v1115
    %v2613 = vunpack.c.h.b16 %v1115
    %v2614 = vunpack.c.l.b16 %v1116
    %v2615 = vunpack.c.h.b16 %v1116
    %v2616 = vunpack.c.l.b16 %v1117
    %v2617 = vunpack.c.h.b16 %v1117
    %v2618 = vpack.c.b16 %v1626, %v1618
    %v2619 = vpack.c.b16 %v1627, %v1619
    %v2620 = vpack.c.b16 %v1628, %v1620
    %v2621 = vpack.c.b16 %v1629, %v1621
    %v2622 = vpack.c.b16 %v1630, %v1622
    %v2623 = vpack.c.b16 %v1631, %v1623
    %v2624 = vpack.c.b16 %v1632, %v1624
    %v2625 = vpack.c.b16 %v1633, %v1625
    %v2626 = vpack.c.b16 %v1642, %v1634
    %v2627 = vpack.c.b16 %v1643, %v1635
    %v2628 = vpack.c.b16 %v1644, %v1636
    %v2629 = vpack.c.b16 %v1645, %v1637
    %v2630 = vpack.c.b16 %v1646, %v1638
    %v2631 = vpack.c.b16 %v1647, %v1639
    %v2632 = vpack.c.b16 %v1648, %v1640
    %v2633 = vpack.c.b16 %v1649, %v1641
    %v2634 = vpack.c.b16 %v1658, %v1650
    %v2635 = vpack.c.b16 %v1659, %v1651
    %v2636 = vpack.c.b16 %v1660, %v1652
    %v2637 = vpack.c.b16 %v1661, %v1653
    %v2638 = vpack.c.b16 %v1662, %v1654
    %v2639 = vpack.c.b16 %v1663, %v1655
    %v2640 = vpack.c.b16 %v1664, %v1656
    %v2641 = vpack.c.b16 %v1665, %v1657
    %v2642 = vpack.c.b16 %v1674, %v1666
    %v2643 = vpack.c.b16 %v1675, %v1667
    %v2644 = vpack.c.b16 %v1676, %v1668
    %v2645 = vpack.c.b16 %v1677, %v1669
    %v2646 = vpack.c.b16 %v1678, %v1670
    %v2647 = vpack.c.b16 %v1679, %v1671
    %v2648 = vpack.c.b16 %v1680, %v1672
    %v2649 = vpack.c.b16 %v1681, %v1673
    %v2650 = vpack.c.b16 %v1690, %v1682
    %v2651 = vpack.c.b16 %v1691, %v1683
    %v2652 = vpack.c.b16 %v1692, %v1684
    %v2653 = vpack.c.b16 %v1693, %v1685
    %v2654 = vpack.c.b16 %v1694, %v1686
    %v2655 = vpack.c.b16 %v1695, %v1687
    %v2656 = vpack.c.b16 %v1696, %v1688
    %v2657 = vpack.c.b16 %v1697, %v1689
    %v2658 = vpack.c.b16 %v1706, %v1698
    %v2659 = vpack.c.b16 %v1707, %v1699
    %v2660 = vpack.c.b16 %v1708, %v1700
    %v2661 = vpack.c.b16 %v1709, %v1701
    %v2662 = vpack.c.b16 %v1710, %v1702
    %v2663 = vpack.c.b16 %v1711, %v1703
    %v2664 = vpack.c.b16 %v1712, %v1704
    %v2665 = vpack.c.b16 %v1713, %v1705
    %v2666 = vpack.c.b16 %v1722, %v1714
    %v2667 = vpack.c.b16 %v1723, %v1715
    %v2668 = vpack.c.b16 %v1724, %v1716
    %v2669 = vpack.c.b16 %v1725, %v1717
    %v2670 = vpack.c.b16 %v1726, %v1718
    %v2671 = vpack.c.b16 %v1727, %v1719
    %v2672 = vpack.c.b16 %v1728, %v1720
    %v2673 = vpack.c.b16 %v1729, %v1721
    %v2674 = vpack.c.b16 %v1738, %v1730
    %v2675 = vpack.c.b16 %v1739, %v1731
    %v2676 = vpack.c.b16 %v1740, %v1732
    %v2677 = vpack.c.b16 %v1741, %v1733
    %v2678 = vpack.c.b16 %v1742, %v1734
    %v2679 = vpack.c.b16 %v1743, %v1735
    %v2680 = vpack.c.b16 %v1744, %v1736
    %v2681 = vpack.c.b16 %v1745, %v1737
    %v2682 = vpack.c.b16 %v1754, %v1746
    %v2683 = vpack.c.b16 %v1755, %v1747
    %v2684 = vpack.c.b16 %v1756, %v1748
    %v2685 = vpack.c.b16 %v1757, %v1749
    %v2686 = vpack.c.b16 %v1758, %v1750
    %v2687 = vpack.c.b16 %v1759, %v1751
    %v2688 = vpack.c.b16 %v1760, %v1752
    %v2689 = vpack.c.b16 %v1761, %v1753
    %v2690 = vpack.c.b16 %v1770, %v1762
    %v2691 = vpack.c.b16 %v1771, %v1763
    %v2692 = vpack.c.b16 %v1772, %v1764
    %v2693 = vpack.c.b16 %v1773, %v1765
    %v2694 = vpack.c.b16 %v1774, %v1766
    %v2695 = vpack.c.b16 %v1775, %v1767
    %v2696 = vpack.c.b16 %v1776, %v1768
    %v2697 = vpack.c.b16 %v1777, %v1769
    %v2698 = vpack.c.b16 %v1786, %v1778
    %v2699 = vpack.c.b16 %v1787, %v1779
    %v2700 = vpack.c.b16 %v1788, %v1780
    %v2701 = vpack.c.b16 %v1789, %v1781
    %v2702 = vpack.c.b16 %v1790, %v1782
    %v2703 = vpack.c.b16 %v1791, %v1783
    %v2704 = vpack.c.b16 %v1792, %v1784
    %v2705 = vpack.c.b16 %v1793, %v1785
    %v2706 = vpack.c.b16 %v1802, %v1794
    %v2707 = vpack.c.b16 %v1803, %v1795
    %v2708 = vpack.c.b16 %v1804, %v1796
    %v2709 = vpack.c.b16 %v1805, %v1797
    %v2710 = vpack.c.b16 %v1806, %v1798
    %v2711 = vpack.c.b16 %v1807, %v1799
    %v2712 = vpack.c.b16 %v1808, %v1800
    %v2713 = vpack.c.b16 %v1809, %v1801
    %v2714 = vpack.c.b16 %v1818, %v1810
    %v2715 = vpack.c.b16 %v1819, %v1811
    %v2716 = vpack.c.b16 %v1820, %v1812
    %v2717 = vpack.c.b16 %v1821, %v1813
    %v2718 = vpack.c.b16 %v1822, %v1814
    %v2719 = vpack.c.b16 %v1823, %v1815
    %v2720 = vpack.c.b16 %v1824, %v1816
    %v2721 = vpack.c.b16 %v1825, %v1817
    %v2722 = vpack.c.b16 %v1834, %v1826
    %v2723 = vpack.c.b16 %v1835, %v1827
    %v2724 = vpack.c.b16 %v1836, %v1828
    %v2725 = vpack.c.b16 %v1837, %v1829
    %v2726 = vpack.c.b16 %v1838, %v1830
    %v2727 = vpack.c.b16 %v1839, %v1831
    %v2728 = vpack.c.b16 %v1840, %v1832
    %v2729 = vpack.c.b16 %v1841, %v1833
    %v2730 = vpack.c.b16 %v1850, %v1842
    %v2731 = vpack.c.b16 %v1851, %v1843
    %v2732 = vpack.c.b16 %v1852, %v1844
    %v2733 = vpack.c.b16 %v1853, %v1845
    %v2734 = vpack.c.b16 %v1854, %v1846
    %v2735 = vpack.c.b16 %v1855, %v1847
    %v2736 = vpack.c.b16 %v1856, %v1848
    %v2737 = vpack.c.b16 %v1857, %v1849
    %v2738 = vpack.c.b16 %v1866, %v1858
    %v2739 = vpack.c.b16 %v1867, %v1859
    %v2740 = vpack.c.b16 %v1868, %v1860
    %v2741 = vpack.c.b16 %v1869, %v1861
    %v2742 = vpack.c.b16 %v1870, %v1862
    %v2743 = vpack.c.b16 %v1871, %v1863
    %v2744 = vpack.c.b16 %v1872, %v1864
    %v2745 = vpack.c.b16 %v1873, %v1865
    %v2746 = vpack.c.b16 %v1882, %v1874
    %v2747 = vpack.c.b16 %v1883, %v1875
    %v2748 = vpack.c.b16 %v1884, %v1876
    %v2749 = vpack.c.b16 %v1885, %v1877
    %v2750 = vpack.c.b16 %v1886, %v1878
    %v2751 = vpack.c.b16 %v1887, %v1879
    %v2752 = vpack.c.b16 %v1888, %v1880
    %v2753 = vpack.c.b16 %v1889, %v1881
    %v2754 = vpack.c.b16 %v1898, %v1890
    %v2755 = vpack.c.b16 %v1899, %v1891
    %v2756 = vpack.c.b16 %v1900, %v1892
    %v2757 = vpack.c.b16 %v1901, %v1893
    %v2758 = vpack.c.b16 %v1902, %v1894
    %v2759 = vpack.c.b16 %v1903, %v1895
    %v2760 = vpack.c.b16 %v1904, %v1896
    %v2761 = vpack.c.b16 %v1905, %v1897
    %v2762 = vpack.c.b16 %v1914, %v1906
    %v2763 = vpack.c.b16 %v1915, %v1907
    %v2764 = vpack.c.b16 %v1916, %v1908
    %v2765 = vpack.c.b16 %v1917, %v1909
    %v2766 = vpack.c.b16 %v1918, %v1910
    %v2767 = vpack.c.b16 %v1919, %v1911
    %v2768 = vpack.c.b16 %v1920, %v1912
    %v2769 = vpack.c.b16 %v1921, %v1913
    %v2770 = vpack.c.b16 %v1930, %v1922
    %v2771 = vpack.c.b16 %v1931, %v1923
    %v2772 = vpack.c.b16 %v1932, %v1924
    %v2773 = vpack.c.b16 %v1933, %v1925
    %v2774 = vpack.c.b16 %v1934, %v1926
    %v2775 = vpack.c.b16 %v1935, %v1927
    %v2776 = vpack.c.b16 %v1936, %v1928
    %v2777 = vpack.c.b16 %v1937, %v1929
    %v2778 = vpack.c.b16 %v1946, %v1938
    %v2779 = vpack.c.b16 %v1947, %v1939
    %v2780 = vpack.c.b16 %v1948, %v1940
    %v2781 = vpack.c.b16 %v1949, %v1941
    %v2782 = vpack.c.b16 %v1950, %v1942
    %v2783 = vpack.c.b16 %v1951, %v1943
    %v2784 = vpack.c.b16 %v1952, %v1944
    %v2785 = vpack.c.b16 %v1953, %v1945
    %v2786 = vpack.c.b16 %v1962, %v1954
    %v2787 = vpack.c.b16 %v1963, %v1955
    %v2788 = vpack.c.b16 %v1964, %v1956
    %v2789 = vpack.c.b16 %v1965, %v1957
    %v2790 = vpack.c.b16 %v1966, %v1958
    %v2791 = vpack.c.b16 %v1967, %v1959
    %v2792 = vpack.c.b16 %v1968, %v1960
    %v2793 = vpack.c.b16 %v1969, %v1961
    %v2794 = vpack.c.b16 %v1978, %v1970
    %v2795 = vpack.c.b16 %v1979, %v1971
    %v2796 = vpack.c.b16 %v1980, %v1972
    %v2797 = vpack.c.b16 %v1981, %v1973
    %v2798 = vpack.c.b16 %v1982, %v1974
    %v2799 = vpack.c.b16 %v1983, %v1975
    %v2800 = vpack.c.b16 %v1984, %v1976
    %v2801 = vpack.c.b16 %v1985, %v1977
    %v2802 = vpack.c.b16 %v1994, %v1986
    %v2803 = vpack.c.b16 %v1995, %v1987
    %v2804 = vpack.c.b16 %v1996, %v1988
    %v2805 = vpack.c.b16 %v1997, %v1989
    %v2806 = vpack.c.b16 %v1998, %v1990
    %v2807 = vpack.c.b16 %v1999, %v1991
    %v2808 = vpack.c.b16 %v2000, %v1992
    %v2809 = vpack.c.b16 %v2001, %v1993
    %v2810 = vpack.c.b16 %v2010, %v2002
    %v2811 = vpack.c.b16 %v2011, %v2003
    %v2812 = vpack.c.b16 %v2012, %v2004
    %v2813 = vpack.c.b16 %v2013, %v2005
    %v2814 = vpack.c.b16 %v2014, %v2006
    %v2815 = vpack.c.b16 %v2015, %v2007
    %v2816 = vpack.c.b16 %v2016, %v2008
    %v2817 = vpack.c.b16 %v2017, %v2009
    %v2818 = vpack.c.b16 %v2026, %v2018
    %v2819 = vpack.c.b16 %v2027, %v2019
    %v2820 = vpack.c.b16 %v2028, %v2020
    %v2821 = vpack.c.b16 %v2029, %v2021
    %v2822 = vpack.c.b16 %v2030, %v2022
    %v2823 = vpack.c.b16 %v2031, %v2023
    %v2824 = vpack.c.b16 %v2032, %v2024
    %v2825 = vpack.c.b16 %v2033, %v2025
    %v2826 = vpack.c.b16 %v2042, %v2034
    %v2827 = vpack.c.b16 %v2043, %v2035
    %v2828 = vpack.c.b16 %v2044, %v2036
    %v2829 = vpack.c.b16 %v2045, %v2037
    %v2830 = vpack.c.b16 %v2046, %v2038
    %v2831 = vpack.c.b16 %v2047, %v2039
    %v2832 = vpack.c.b16 %v2048, %v2040
    %v2833 = vpack.c.b16 %v2049, %v2041
    %v2834 = vpack.c.b16 %v2058, %v2050
    %v2835 = vpack.c.b16 %v2059, %v2051
    %v2836 = vpack.c.b16 %v2060, %v2052
    %v2837 = vpack.c.b16 %v2061, %v2053
    %v2838 = vpack.c.b16 %v2062, %v2054
    %v2839 = vpack.c.b16 %v2063, %v2055
    %v2840 = vpack.c.b16 %v2064, %v2056
    %v2841 = vpack.c.b16 %v2065, %v2057
    %v2842 = vpack.c.b16 %v2074, %v2066
    %v2843 = vpack.c.b16 %v2075, %v2067
    %v2844 = vpack.c.b16 %v2076, %v2068
    %v2845 = vpack.c.b16 %v2077, %v2069
    %v2846 = vpack.c.b16 %v2078, %v2070
    %v2847 = vpack.c.b16 %v2079, %v2071
    %v2848 = vpack.c.b16 %v2080, %v2072
    %v2849 = vpack.c.b16 %v2081, %v2073
    %v2850 = vpack.c.b16 %v2090, %v2082
    %v2851 = vpack.c.b16 %v2091, %v2083
    %v2852 = vpack.c.b16 %v2092, %v2084
    %v2853 = vpack.c.b16 %v2093, %v2085
    %v2854 = vpack.c.b16 %v2094, %v2086
    %v2855 = vpack.c.b16 %v2095, %v2087
    %v2856 = vpack.c.b16 %v2096, %v2088
    %v2857 = vpack.c.b16 %v2097, %v2089
    %v2858 = vpack.c.b16 %v2106, %v2098
    %v2859 = vpack.c.b16 %v2107, %v2099
    %v2860 = vpack.c.b16 %v2108, %v2100
    %v2861 = vpack.c.b16 %v2109, %v2101
    %v2862 = vpack.c.b16 %v2110, %v2102
    %v2863 = vpack.c.b16 %v2111, %v2103
    %v2864 = vpack.c.b16 %v2112, %v2104
    %v2865 = vpack.c.b16 %v2113, %v2105
    %v2866 = vpack.c.b16 %v2122, %v2114
    %v2867 = vpack.c.b16 %v2123, %v2115
    %v2868 = vpack.c.b16 %v2124, %v2116
    %v2869 = vpack.c.b16 %v2125, %v2117
    %v2870 = vpack.c.b16 %v2126, %v2118
    %v2871 = vpack.c.b16 %v2127, %v2119
    %v2872 = vpack.c.b16 %v2128, %v2120
    %v2873 = vpack.c.b16 %v2129, %v2121
    %v2874 = vpack.c.b16 %v2138, %v2130
    %v2875 = vpack.c.b16 %v2139, %v2131
    %v2876 = vpack.c.b16 %v2140, %v2132
    %v2877 = vpack.c.b16 %v2141, %v2133
    %v2878 = vpack.c.b16 %v2142, %v2134
    %v2879 = vpack.c.b16 %v2143, %v2135
    %v2880 = vpack.c.b16 %v2144, %v2136
    %v2881 = vpack.c.b16 %v2145, %v2137
    %v2882 = vpack.c.b16 %v2154, %v2146
    %v2883 = vpack.c.b16 %v2155, %v2147
    %v2884 = vpack.c.b16 %v2156, %v2148
    %v2885 = vpack.c.b16 %v2157, %v2149
    %v2886 = vpack.c.b16 %v2158, %v2150
    %v2887 = vpack.c.b16 %v2159, %v2151
    %v2888 = vpack.c.b16 %v2160, %v2152
    %v2889 = vpack.c.b16 %v2161, %v2153
    %v2890 = vpack.c.b16 %v2170, %v2162
    %v2891 = vpack.c.b16 %v2171, %v2163
    %v2892 = vpack.c.b16 %v2172, %v2164
    %v2893 = vpack.c.b16 %v2173, %v2165
    %v2894 = vpack.c.b16 %v2174, %v2166
    %v2895 = vpack.c.b16 %v2175, %v2167
    %v2896 = vpack.c.b16 %v2176, %v2168
    %v2897 = vpack.c.b16 %v2177, %v2169
    %v2898 = vpack.c.b16 %v2186, %v2178
    %v2899 = vpack.c.b16 %v2187, %v2179
    %v2900 = vpack.c.b16 %v2188, %v2180
    %v2901 = vpack.c.b16 %v2189, %v2181
    %v2902 = vpack.c.b16 %v2190, %v2182
    %v2903 = vpack.c.b16 %v2191, %v2183
    %v2904 = vpack.c.b16 %v2192, %v2184
    %v2905 = vpack.c.b16 %v2193, %v2185
    %v2906 = vpack.c.b16 %v2202, %v2194
    %v2907 = vpack.c.b16 %v2203, %v2195
    %v2908 = vpack.c.b16 %v2204, %v2196
    %v2909 = vpack.c.b16 %v2205, %v2197
    %v2910 = vpack.c.b16 %v2206, %v2198
    %v2911 = vpack.c.b16 %v2207, %v2199
    %v2912 = vpack.c.b16 %v2208, %v2200
    %v2913 = vpack.c.b16 %v2209, %v2201
    %v2914 = vpack.c.b16 %v2218, %v2210
    %v2915 = vpack.c.b16 %v2219, %v2211
    %v2916 = vpack.c.b16 %v2220, %v2212
    %v2917 = vpack.c.b16 %v2221, %v2213
    %v2918 = vpack.c.b16 %v2222, %v2214
    %v2919 = vpack.c.b16 %v2223, %v2215
    %v2920 = vpack.c.b16 %v2224, %v2216
    %v2921 = vpack.c.b16 %v2225, %v2217
    %v2922 = vpack.c.b16 %v2234, %v2226
    %v2923 = vpack.c.b16 %v2235, %v2227
    %v2924 = vpack.c.b16 %v2236, %v2228
    %v2925 = vpack.c.b16 %v2237, %v2229
    %v2926 = vpack.c.b16 %v2238, %v2230
    %v2927 = vpack.c.b16 %v2239, %v2231
    %v2928 = vpack.c.b16 %v2240, %v2232
    %v2929 = vpack.c.b16 %v2241, %v2233
    %v2930 = vpack.c.b16 %v2250, %v2242
    %v2931 = vpack.c.b16 %v2251, %v2243
    %v2932 = vpack.c.b16 %v2252, %v2244
    %v2933 = vpack.c.b16 %v2253, %v2245
    %v2934 = vpack.c.b16 %v2254, %v2246
    %v2935 = vpack.c.b16 %v2255, %v2247
    %v2936 = vpack.c.b16 %v2256, %v2248
    %v2937 = vpack.c.b16 %v2257, %v2249
    %v2938 = vpack.c.b16 %v2266, %v2258
    %v2939 = vpack.c.b16 %v2267, %v2259
    %v2940 = vpack.c.b16 %v2268, %v2260
    %v2941 = vpack.c.b16 %v2269, %v2261
    %v2942 = vpack.c.b16 %v2270, %v2262
    %v2943 = vpack.c.b16 %v2271, %v2263
    %v2944 = vpack.c.b16 %v2272, %v2264
    %v2945 = vpack.c.b16 %v2273, %v2265
    %v2946 = vpack.c.b16 %v2282, %v2274
    %v2947 = vpack.c.b16 %v2283, %v2275
    %v2948 = vpack.c.b16 %v2284, %v2276
    %v2949 = vpack.c.b16 %v2285, %v2277
    %v2950 = vpack.c.b16 %v2286, %v2278
    %v2951 = vpack.c.b16 %v2287, %v2279
    %v2952 = vpack.c.b16 %v2288, %v2280
    %v2953 = vpack.c.b16 %v2289, %v2281
    %v2954 = vpack.c.b16 %v2298, %v2290
    %v2955 = vpack.c.b16 %v2299, %v2291
    %v2956 = vpack.c.b16 %v2300, %v2292
    %v2957 = vpack.c.b16 %v2301, %v2293
    %v2958 = vpack.c.b16 %v2302, %v2294
    %v2959 = vpack.c.b16 %v2303, %v2295
    %v2960 = vpack.c.b16 %v2304, %v2296
    %v2961 = vpack.c.b16 %v2305, %v2297
    %v2962 = vpack.c.b16 %v2314, %v2306
    %v2963 = vpack.c.b16 %v2315, %v2307
    %v2964 = vpack.c.b16 %v2316, %v2308
    %v2965 = vpack.c.b16 %v2317, %v2309
    %v2966 = vpack.c.b16 %v2318, %v2310
    %v2967 = vpack.c.b16 %v2319, %v2311
    %v2968 = vpack.c.b16 %v2320, %v2312
    %v2969 = vpack.c.b16 %v2321, %v2313
    %v2970 = vpack.c.b16 %v2330, %v2322
    %v2971 = vpack.c.b16 %v2331, %v2323
    %v2972 = vpack.c.b16 %v2332, %v2324
    %v2973 = vpack.c.b16 %v2333, %v2325
    %v2974 = vpack.c.b16 %v2334, %v2326
    %v2975 = vpack.c.b16 %v2335, %v2327
    %v2976 = vpack.c.b16 %v2336, %v2328
    %v2977 = vpack.c.b16 %v2337, %v2329
    %v2978 = vpack.c.b16 %v2346, %v2338
    %v2979 = vpack.c.b16 %v2347, %v2339
    %v2980 = vpack.c.b16 %v2348, %v2340
    %v2981 = vpack.c.b16 %v2349, %v2341
    %v2982 = vpack.c.b16 %v2350, %v2342
    %v2983 = vpack.c.b16 %v2351, %v2343
    %v2984 = vpack.c.b16 %v2352, %v2344
    %v2985 = vpack.c.b16 %v2353, %v2345
    %v2986 = vpack.c.b16 %v2362, %v2354
    %v2987 = vpack.c.b16 %v2363, %v2355
    %v2988 = vpack.c.b16 %v2364, %v2356
    %v2989 = vpack.c.b16 %v2365, %v2357
    %v2990 = vpack.c.b16 %v2366, %v2358
    %v2991 = vpack.c.b16 %v2367, %v2359
    %v2992 = vpack.c.b16 %v2368, %v2360
    %v2993 = vpack.c.b16 %v2369, %v2361
    %v2994 = vpack.c.b16 %v2378, %v2370
    %v2995 = vpack.c.b16 %v2379, %v2371
    %v2996 = vpack.c.b16 %v2380, %v2372
    %v2997 = vpack.c.b16 %v2381, %v2373
    %v2998 = vpack.c.b16 %v2382, %v2374
    %v2999 = vpack.c.b16 %v2383, %v2375
    %v3000 = vpack.c.b16 %v2384, %v2376
    %v3001 = vpack.c.b16 %v2385, %v2377
    %v3002 = vpack.c.b16 %v2394, %v2386
    %v3003 = vpack.c.b16 %v2395, %v2387
    %v3004 = vpack.c.b16 %v2396, %v2388
    %v3005 = vpack.c.b16 %v2397, %v2389
    %v3006 = vpack.c.b16 %v2398, %v2390
    %v3007 = vpack.c.b16 %v2399, %v2391
    %v3008 = vpack.c.b16 %v2400, %v2392
    %v3009 = vpack.c.b16 %v2401, %v2393
    %v3010 = vpack.c.b16 %v2410, %v2402
    %v3011 = vpack.c.b16 %v2411, %v2403
    %v3012 = vpack.c.b16 %v2412, %v2404
    %v3013 = vpack.c.b16 %v2413, %v2405
    %v3014 = vpack.c.b16 %v2414, %v2406
    %v3015 = vpack.c.b16 %v2415, %v2407
    %v3016 = vpack.c.b16 %v2416, %v2408
    %v3017 = vpack.c.b16 %v2417, %v2409
    %v3018 = vpack.c.b16 %v2426, %v2418
    %v3019 = vpack.c.b16 %v2427, %v2419
    %v3020 = vpack.c.b16 %v2428, %v2420
    %v3021 = vpack.c.b16 %v2429, %v2421
    %v3022 = vpack.c.b16 %v2430, %v2422
    %v3023 = vpack.c.b16 %v2431, %v2423
    %v3024 = vpack.c.b16 %v2432, %v2424
    %v3025 = vpack.c.b16 %v2433, %v2425
    %v3026 = vpack.c.b16 %v2442, %v2434
    %v3027 = vpack.c.b16 %v2443, %v2435
    %v3028 = vpack.c.b16 %v2444, %v2436
    %v3029 = vpack.c.b16 %v2445, %v2437
    %v3030 = vpack.c.b16 %v2446, %v2438
    %v3031 = vpack.c.b16 %v2447, %v2439
    %v3032 = vpack.c.b16 %v2448, %v2440
    %v3033 = vpack.c.b16 %v2449, %v2441
    %v3034 = vpack.c.b16 %v2458, %v2450
    %v3035 = vpack.c.b16 %v2459, %v2451
    %v3036 = vpack.c.b16 %v2460, %v2452
    %v3037 = vpack.c.b16 %v2461, %v2453
    %v3038 = vpack.c.b16 %v2462, %v2454
    %v3039 = vpack.c.b16 %v2463, %v2455
    %v3040 = vpack.c.b16 %v2464, %v2456
    %v3041 = vpack.c.b16 %v2465, %v2457
    %v3042 = vpack.c.b16 %v2474, %v2466
    %v3043 = vpack.c.b16 %v2475, %v2467
    %v3044 = vpack.c.b16 %v2476, %v2468
    %v3045 = vpack.c.b16 %v2477, %v2469
    %v3046 = vpack.c.b16 %v2478, %v2470
    %v3047 = vpack.c.b16 %v2479, %v2471
    %v3048 = vpack.c.b16 %v2480, %v2472
    %v3049 = vpack.c.b16 %v2481, %v2473
    %v3050 = vpack.c.b16 %v2490, %v2482
    %v3051 = vpack.c.b16 %v2491, %v2483
    %v3052 = vpack.c.b16 %v2492, %v2484
    %v3053 = vpack.c.b16 %v2493, %v2485
    %v3054 = vpack.c.b16 %v2494, %v2486
    %v3055 = vpack.c.b16 %v2495, %v2487
    %v3056 = vpack.c.b16 %v2496, %v2488
    %v3057 = vpack.c.b16 %v2497, %v2489
    %v3058 = vpack.c.b16 %v2506, %v2498
    %v3059 = vpack.c.b16 %v2507, %v2499
    %v3060 = vpack.c.b16 %v2508, %v2500
    %v3061 = vpack.c.b16 %v2509, %v2501
    %v3062 = vpack.c.b16 %v2510, %v2502
    %v3063 = vpack.c.b16 %v2511, %v2503
    %v3064 = vpack.c.b16 %v2512, %v2504
    %v3065 = vpack.c.b16 %v2513, %v2505
    %v3066 = vpack.c.b16 %v2522, %v2514
    %v3067 = vpack.c.b16 %v2523, %v2515
    %v3068 = vpack.c.b16 %v2524, %v2516
    %v3069 = vpack.c.b16 %v2525, %v2517
    %v3070 = vpack.c.b16 %v2526, %v2518
    %v3071 = vpack.c.b16 %v2527, %v2519
    %v3072 = vpack.c.b16 %v2528, %v2520
    %v3073 = vpack.c.b16 %v2529, %v2521
    %v3074 = vpack.c.b16 %v2538, %v2530
    %v3075 = vpack.c.b16 %v2539, %v2531
    %v3076 = vpack.c.b16 %v2540, %v2532
    %v3077 = vpack.c.b16 %v2541, %v2533
    %v3078 = vpack.c.b16 %v2542, %v2534
    %v3079 = vpack.c.b16 %v2543, %v2535
    %v3080 = vpack.c.b16 %v2544, %v2536
    %v3081 = vpack.c.b16 %v2545, %v2537
    %v3082 = vpack.c.b16 %v2554, %v2546
    %v3083 = vpack.c.b16 %v2555, %v2547
    %v3084 = vpack.c.b16 %v2556, %v2548
    %v3085 = vpack.c.b16 %v2557, %v2549
    %v3086 = vpack.c.b16 %v2558, %v2550
    %v3087 = vpack.c.b16 %v2559, %v2551
    %v3088 = vpack.c.b16 %v2560, %v2552
    %v3089 = vpack.c.b16 %v2561, %v2553
    %v3090 = vpack.c.b16 %v2570, %v2562
    %v3091 = vpack.c.b16 %v2571, %v2563
    %v3092 = vpack.c.b16 %v2572, %v2564
    %v3093 = vpack.c.b16 %v2573, %v2565
    %v3094 = vpack.c.b16 %v2574, %v2566
    %v3095 = vpack.c.b16 %v2575, %v2567
    %v3096 = vpack.c.b16 %v2576, %v2568
    %v3097 = vpack.c.b16 %v2577, %v2569
    %v3098 = vpack.c.b16 %v2586, %v2578
    %v3099 = vpack.c.b16 %v2587, %v2579
    %v3100 = vpack.c.b16 %v2588, %v2580
    %v3101 = vpack.c.b16 %v2589, %v2581
    %v3102 = vpack.c.b16 %v2590, %v2582
    %v3103 = vpack.c.b16 %v2591, %v2583
    %v3104 = vpack.c.b16 %v2592, %v2584
    %v3105 = vpack.c.b16 %v2593, %v2585
    %v3106 = vpack.c.b16 %v2602, %v2594
    %v3107 = vpack.c.b16 %v2603, %v2595
    %v3108 = vpack.c.b16 %v2604, %v2596
    %v3109 = vpack.c.b16 %v2605, %v2597
    %v3110 = vpack.c.b16 %v2606, %v2598
    %v3111 = vpack.c.b16 %v2607, %v2599
    %v3112 = vpack.c.b16 %v2608, %v2600
    %v3113 = vpack.c.b16 %v2609, %v2601
    %v3114 = vpack.c.b16 %v2610, %v2610
    %v3115 = vpack.c.b16 %v2611, %v2611
    %v3116 = vpack.c.b16 %v2612, %v2612
    %v3117 = vpack.c.b16 %v2613, %v2613
    %v3118 = vpack.c.b16 %v2614, %v2614
    %v3119 = vpack.c.b16 %v2615, %v2615
    %v3120 = vpack.c.b16 %v2616, %v2616
    %v3121 = vpack.c.b16 %v2617, %v2617
    %vm3618 = vcmask 850944
    %v3620 = vsel %vm3618, %v117, 0
    %vm3622 = vcmask 1043456
    %v3624 = vsel %vm3622, %v3114, 0
    %v3627 = vsel %vm3622, %v3115, 0
    %v3630 = vsel %vm3622, %v3116, 0
    %v3633 = vsel %vm3622, %v3117, 0
    %v3636 = vsel %vm3622, %v3118, 0
    %v3639 = vsel %vm3622, %v3119, 0
    %v3642 = vsel %vm3622, %v3120, 0
    %v3645 = vsel %vm3622, %v3121, 0
    %3647 = vmatprep.subr.bf16.mxu0 %v2675
    %3648 = vmatpush1.bf16.msra.mxu0 %v2674
    %3649 = vmatprep.subr.bf16.mxu0 %v2667
    %3650 = vmatpush1.bf16.msra.mxu0 %v2666
    %3651 = vmatprep.subr.bf16.mxu0 %v2659
    %3652 = vmatpush1.bf16.msra.mxu0 %v2658
    %3653 = vmatprep.subr.bf16.mxu0 %v2651
    %3654 = vmatpush1.bf16.msra.mxu0 %v2650
    %3655 = vmatprep.subr.bf16.mxu0 %v2643
    %3656 = vmatpush1.bf16.msra.mxu0 %v2642
    %3657 = vmatprep.subr.bf16.mxu0 %v2635
    %3658 = vmatpush1.bf16.msra.mxu0 %v2634
    %3659 = vmatprep.subr.bf16.mxu0 %v2627
    %3660 = vmatpush1.bf16.msra.mxu0 %v2626
    %3661 = vmatprep.subr.bf16.mxu0 %v2619
    %3662 = vmatpush1.bf16.msra.mxu0 %v2618
    %3663 = vmatprep.subr.bf16.mxu0 %v2739
    %3664 = vmatpush2.bf16.msra.mxu0 %v2738
    %3665 = vmatprep.subr.bf16.mxu0 %v2731
    %3666 = vmatpush2.bf16.msra.mxu0 %v2730
    %3667 = vmatprep.subr.bf16.mxu0 %v2723
    %3668 = vmatpush2.bf16.msra.mxu0 %v2722
    %3669 = vmatprep.subr.bf16.mxu0 %v2715
    %3670 = vmatpush2.bf16.msra.mxu0 %v2714
    %3671 = vmatprep.subr.bf16.mxu0 %v2707
    %3672 = vmatpush2.bf16.msra.mxu0 %v2706
    %3673 = vmatprep.subr.bf16.mxu0 %v2699
    %3674 = vmatpush2.bf16.msra.mxu0 %v2698
    %3675 = vmatprep.subr.bf16.mxu0 %v2691
    %3676 = vmatpush2.bf16.msra.mxu0 %v2690
    %3677 = vmatprep.subr.bf16.mxu0 %v2683
    %3678 = vmatpush2.bf16.msra.mxu0 %v2682
    %3679 = vmatprep.mubr.bf16.mxu0 %v111
    %3680 = vmatmul.mubr.bf16.gmra.mxu0 %v110
    %v3681 = vpop.f32.mrf.mxu0
    %v3682 = vadd.f32 0.0, %v3681
    %v3683 = vpop.f32.mrf.mxu0
    %v3684 = vadd.f32 0.0, %v3683
    %v3685 = vpop.f32.mrf.mxu0
    %v3686 = vpop.f32.mrf.mxu0
    %3687 = vdwg.mxu0
    %3688 = vmatprep.subr.bf16.mxu0 %v2803
    %3689 = vmatpush1.bf16.msra.mxu0 %v2802
    %3690 = vmatprep.subr.bf16.mxu0 %v2795
    %3691 = vmatpush1.bf16.msra.mxu0 %v2794
    %3692 = vmatprep.subr.bf16.mxu0 %v2787
    %3693 = vmatpush1.bf16.msra.mxu0 %v2786
    %3694 = vmatprep.subr.bf16.mxu0 %v2779
    %3695 = vmatpush1.bf16.msra.mxu0 %v2778
    %3696 = vmatprep.subr.bf16.mxu0 %v2771
    %3697 = vmatpush1.bf16.msra.mxu0 %v2770
    %3698 = vmatprep.subr.bf16.mxu0 %v2763
    %3699 = vmatpush1.bf16.msra.mxu0 %v2762
    %3700 = vmatprep.subr.bf16.mxu0 %v2755
    %3701 = vmatpush1.bf16.msra.mxu0 %v2754
    %3702 = vmatprep.subr.bf16.mxu0 %v2747
    %3703 = vmatpush1.bf16.msra.mxu0 %v2746
    %3704 = vmatprep.subr.bf16.mxu0 %v2867
    %3705 = vmatpush2.bf16.msra.mxu0 %v2866
    %3706 = vmatprep.subr.bf16.mxu0 %v2859
    %3707 = vmatpush2.bf16.msra.mxu0 %v2858
    %3708 = vmatprep.subr.bf16.mxu0 %v2851
    %3709 = vmatpush2.bf16.msra.mxu0 %v2850
    %3710 = vmatprep.subr.bf16.mxu0 %v2843
    %3711 = vmatpush2.bf16.msra.mxu0 %v2842
    %3712 = vmatprep.subr.bf16.mxu0 %v2835
    %3713 = vmatpush2.bf16.msra.mxu0 %v2834
    %3714 = vmatprep.subr.bf16.mxu0 %v2827
    %3715 = vmatpush2.bf16.msra.mxu0 %v2826
    %3716 = vmatprep.subr.bf16.mxu0 %v2819
    %3717 = vmatpush2.bf16.msra.mxu0 %v2818
    %3718 = vmatprep.subr.bf16.mxu0 %v2811
    %3719 = vmatpush2.bf16.msra.mxu0 %v2810
    %3720 = vmatprep.mubr.bf16.mxu0 %v113
    %3721 = vmatmul.mubr.bf16.gmra.mxu0 %v112
    %v3722 = vpop.f32.mrf.mxu0
    %v3723 = vadd.f32 %v3682, %v3722
    %v3724 = vpop.f32.mrf.mxu0
    %v3725 = vadd.f32 %v3684, %v3724
    %v3726 = vpop.f32.mrf.mxu0
    %v3727 = vpop.f32.mrf.mxu0
    %3728 = vdwg.mxu0
    %3729 = vmatprep.subr.bf16.mxu0 %v2931
    %3730 = vmatpush1.bf16.msra.mxu0 %v2930
    %3731 = vmatprep.subr.bf16.mxu0 %v2923
    %3732 = vmatpush1.bf16.msra.mxu0 %v2922
    %3733 = vmatprep.subr.bf16.mxu0 %v2915
    %3734 = vmatpush1.bf16.msra.mxu0 %v2914
    %3735 = vmatprep.subr.bf16.mxu0 %v2907
    %3736 = vmatpush1.bf16.msra.mxu0 %v2906
    %3737 = vmatprep.subr.bf16.mxu0 %v2899
    %3738 = vmatpush1.bf16.msra.mxu0 %v2898
    %3739 = vmatprep.subr.bf16.mxu0 %v2891
    %3740 = vmatpush1.bf16.msra.mxu0 %v2890
    %3741 = vmatprep.subr.bf16.mxu0 %v2883
    %3742 = vmatpush1.bf16.msra.mxu0 %v2882
    %3743 = vmatprep.subr.bf16.mxu0 %v2875
    %3744 = vmatpush1.bf16.msra.mxu0 %v2874
    %3745 = vmatprep.subr.bf16.mxu0 %v2995
    %3746 = vmatpush2.bf16.msra.mxu0 %v2994
    %3747 = vmatprep.subr.bf16.mxu0 %v2987
    %3748 = vmatpush2.bf16.msra.mxu0 %v2986
    %3749 = vmatprep.subr.bf16.mxu0 %v2979
    %3750 = vmatpush2.bf16.msra.mxu0 %v2978
    %3751 = vmatprep.subr.bf16.mxu0 %v2971
    %3752 = vmatpush2.bf16.msra.mxu0 %v2970
    %3753 = vmatprep.subr.bf16.mxu0 %v2963
    %3754 = vmatpush2.bf16.msra.mxu0 %v2962
    %3755 = vmatprep.subr.bf16.mxu0 %v2955
    %3756 = vmatpush2.bf16.msra.mxu0 %v2954
    %3757 = vmatprep.subr.bf16.mxu0 %v2947
    %3758 = vmatpush2.bf16.msra.mxu0 %v2946
    %3759 = vmatprep.subr.bf16.mxu0 %v2939
    %3760 = vmatpush2.bf16.msra.mxu0 %v2938
    %3761 = vmatprep.mubr.bf16.mxu0 %v115
    %3762 = vmatmul.mubr.bf16.gmra.mxu0 %v114
    %v3763 = vpop.f32.mrf.mxu0
    %v3764 = vadd.f32 %v3723, %v3763
    %v3765 = vpop.f32.mrf.mxu0
    %v3766 = vadd.f32 %v3725, %v3765
    %v3767 = vpop.f32.mrf.mxu0
    %v3768 = vpop.f32.mrf.mxu0
    %3769 = vdwg.mxu0
    %3770 = vmatprep.subr.bf16.mxu0 %v3059
    %3771 = vmatpush1.bf16.msra.mxu0 %v3058
    %3772 = vmatprep.subr.bf16.mxu0 %v3051
    %3773 = vmatpush1.bf16.msra.mxu0 %v3050
    %3774 = vmatprep.subr.bf16.mxu0 %v3043
    %3775 = vmatpush1.bf16.msra.mxu0 %v3042
    %3776 = vmatprep.subr.bf16.mxu0 %v3035
    %3777 = vmatpush1.bf16.msra.mxu0 %v3034
    %3778 = vmatprep.subr.bf16.mxu0 %v3027
    %3779 = vmatpush1.bf16.msra.mxu0 %v3026
    %3780 = vmatprep.subr.bf16.mxu0 %v3019
    %3781 = vmatpush1.bf16.msra.mxu0 %v3018
    %3782 = vmatprep.subr.bf16.mxu0 %v3011
    %3783 = vmatpush1.bf16.msra.mxu0 %v3010
    %3784 = vmatprep.subr.bf16.mxu0 %v3003
    %3785 = vmatpush1.bf16.msra.mxu0 %v3002
    %3786 = vmatprep.subr.bf16.mxu0 0
    %3787 = vmatpush2.bf16.msra.mxu0 0
    %3788 = vmatprep.subr.bf16.mxu0 %v3627
    %3789 = vmatpush2.bf16.msra.mxu0 %v3624
    %3790 = vmatprep.subr.bf16.mxu0 %v3107
    %3791 = vmatpush2.bf16.msra.mxu0 %v3106
    %3792 = vmatprep.subr.bf16.mxu0 %v3099
    %3793 = vmatpush2.bf16.msra.mxu0 %v3098
    %3794 = vmatprep.subr.bf16.mxu0 %v3091
    %3795 = vmatpush2.bf16.msra.mxu0 %v3090
    %3796 = vmatprep.subr.bf16.mxu0 %v3083
    %3797 = vmatpush2.bf16.msra.mxu0 %v3082
    %3798 = vmatprep.subr.bf16.mxu0 %v3075
    %3799 = vmatpush2.bf16.msra.mxu0 %v3074
    %3800 = vmatprep.subr.bf16.mxu0 %v3067
    %3801 = vmatpush2.bf16.msra.mxu0 %v3066
    %3802 = vmatprep.mubr.bf16.mxu0 %v3620
    %3803 = vmatmul.mubr.bf16.gmra.mxu0 %v116
    %v3804 = vpop.f32.mrf.mxu0
    %v3805 = vadd.f32 %v3764, %v3804
    %v3806 = vpop.f32.mrf.mxu0
    %v3807 = vadd.f32 %v3766, %v3806
    %v3808 = vpop.f32.mrf.mxu0
    %v3809 = vpop.f32.mrf.mxu0
    %3810 = vdwg.mxu0
    %3811 = vmatprep.subr.bf16.mxu0 %v2677
    %3812 = vmatpush1.bf16.msra.mxu0 %v2676
    %3813 = vmatprep.subr.bf16.mxu0 %v2669
    %3814 = vmatpush1.bf16.msra.mxu0 %v2668
    %3815 = vmatprep.subr.bf16.mxu0 %v2661
    %3816 = vmatpush1.bf16.msra.mxu0 %v2660
    %3817 = vmatprep.subr.bf16.mxu0 %v2653
    %3818 = vmatpush1.bf16.msra.mxu0 %v2652
    %3819 = vmatprep.subr.bf16.mxu0 %v2645
    %3820 = vmatpush1.bf16.msra.mxu0 %v2644
    %3821 = vmatprep.subr.bf16.mxu0 %v2637
    %3822 = vmatpush1.bf16.msra.mxu0 %v2636
    %3823 = vmatprep.subr.bf16.mxu0 %v2629
    %3824 = vmatpush1.bf16.msra.mxu0 %v2628
    %3825 = vmatprep.subr.bf16.mxu0 %v2621
    %3826 = vmatpush1.bf16.msra.mxu0 %v2620
    %3827 = vmatprep.subr.bf16.mxu0 %v2741
    %3828 = vmatpush2.bf16.msra.mxu0 %v2740
    %3829 = vmatprep.subr.bf16.mxu0 %v2733
    %3830 = vmatpush2.bf16.msra.mxu0 %v2732
    %3831 = vmatprep.subr.bf16.mxu0 %v2725
    %3832 = vmatpush2.bf16.msra.mxu0 %v2724
    %3833 = vmatprep.subr.bf16.mxu0 %v2717
    %3834 = vmatpush2.bf16.msra.mxu0 %v2716
    %3835 = vmatprep.subr.bf16.mxu0 %v2709
    %3836 = vmatpush2.bf16.msra.mxu0 %v2708
    %3837 = vmatprep.subr.bf16.mxu0 %v2701
    %3838 = vmatpush2.bf16.msra.mxu0 %v2700
    %3839 = vmatprep.subr.bf16.mxu0 %v2693
    %3840 = vmatpush2.bf16.msra.mxu0 %v2692
    %3841 = vmatprep.subr.bf16.mxu0 %v2685
    %3842 = vmatpush2.bf16.msra.mxu0 %v2684
    %3843 = vmatprep.mubr.bf16.mxu0 %v111
    %3844 = vmatmul.mubr.bf16.gmra.mxu0 %v110
    %v3845 = vpop.f32.mrf.mxu0
    %v3846 = vadd.f32 0.0, %v3845
    %v3847 = vpop.f32.mrf.mxu0
    %v3848 = vadd.f32 0.0, %v3847
    %v3849 = vpop.f32.mrf.mxu0
    %v3850 = vpop.f32.mrf.mxu0
    %3851 = vdwg.mxu0
    %3852 = vmatprep.subr.bf16.mxu0 %v2805
    %3853 = vmatpush1.bf16.msra.mxu0 %v2804
    %3854 = vmatprep.subr.bf16.mxu0 %v2797
    %3855 = vmatpush1.bf16.msra.mxu0 %v2796
    %3856 = vmatprep.subr.bf16.mxu0 %v2789
    %3857 = vmatpush1.bf16.msra.mxu0 %v2788
    %3858 = vmatprep.subr.bf16.mxu0 %v2781
    %3859 = vmatpush1.bf16.msra.mxu0 %v2780
    %3860 = vmatprep.subr.bf16.mxu0 %v2773
    %3861 = vmatpush1.bf16.msra.mxu0 %v2772
    %3862 = vmatprep.subr.bf16.mxu0 %v2765
    %3863 = vmatpush1.bf16.msra.mxu0 %v2764
    %3864 = vmatprep.subr.bf16.mxu0 %v2757
    %3865 = vmatpush1.bf16.msra.mxu0 %v2756
    %3866 = vmatprep.subr.bf16.mxu0 %v2749
    %3867 = vmatpush1.bf16.msra.mxu0 %v2748
    %3868 = vmatprep.subr.bf16.mxu0 %v2869
    %3869 = vmatpush2.bf16.msra.mxu0 %v2868
    %3870 = vmatprep.subr.bf16.mxu0 %v2861
    %3871 = vmatpush2.bf16.msra.mxu0 %v2860
    %3872 = vmatprep.subr.bf16.mxu0 %v2853
    %3873 = vmatpush2.bf16.msra.mxu0 %v2852
    %3874 = vmatprep.subr.bf16.mxu0 %v2845
    %3875 = vmatpush2.bf16.msra.mxu0 %v2844
    %3876 = vmatprep.subr.bf16.mxu0 %v2837
    %3877 = vmatpush2.bf16.msra.mxu0 %v2836
    %3878 = vmatprep.subr.bf16.mxu0 %v2829
    %3879 = vmatpush2.bf16.msra.mxu0 %v2828
    %3880 = vmatprep.subr.bf16.mxu0 %v2821
    %3881 = vmatpush2.bf16.msra.mxu0 %v2820
    %3882 = vmatprep.subr.bf16.mxu0 %v2813
    %3883 = vmatpush2.bf16.msra.mxu0 %v2812
    %3884 = vmatprep.mubr.bf16.mxu0 %v113
    %3885 = vmatmul.mubr.bf16.gmra.mxu0 %v112
    %v3886 = vpop.f32.mrf.mxu0
    %v3887 = vadd.f32 %v3846, %v3886
    %v3888 = vpop.f32.mrf.mxu0
    %v3889 = vadd.f32 %v3848, %v3888
    %v3890 = vpop.f32.mrf.mxu0
    %v3891 = vpop.f32.mrf.mxu0
    %3892 = vdwg.mxu0
    %3893 = vmatprep.subr.bf16.mxu0 %v2933
    %3894 = vmatpush1.bf16.msra.mxu0 %v2932
    %3895 = vmatprep.subr.bf16.mxu0 %v2925
    %3896 = vmatpush1.bf16.msra.mxu0 %v2924
    %3897 = vmatprep.subr.bf16.mxu0 %v2917
    %3898 = vmatpush1.bf16.msra.mxu0 %v2916
    %3899 = vmatprep.subr.bf16.mxu0 %v2909
    %3900 = vmatpush1.bf16.msra.mxu0 %v2908
    %3901 = vmatprep.subr.bf16.mxu0 %v2901
    %3902 = vmatpush1.bf16.msra.mxu0 %v2900
    %3903 = vmatprep.subr.bf16.mxu0 %v2893
    %3904 = vmatpush1.bf16.msra.mxu0 %v2892
    %3905 = vmatprep.subr.bf16.mxu0 %v2885
    %3906 = vmatpush1.bf16.msra.mxu0 %v2884
    %3907 = vmatprep.subr.bf16.mxu0 %v2877
    %3908 = vmatpush1.bf16.msra.mxu0 %v2876
    %3909 = vmatprep.subr.bf16.mxu0 %v2997
    %3910 = vmatpush2.bf16.msra.mxu0 %v2996
    %3911 = vmatprep.subr.bf16.mxu0 %v2989
    %3912 = vmatpush2.bf16.msra.mxu0 %v2988
    %3913 = vmatprep.subr.bf16.mxu0 %v2981
    %3914 = vmatpush2.bf16.msra.mxu0 %v2980
    %3915 = vmatprep.subr.bf16.mxu0 %v2973
    %3916 = vmatpush2.bf16.msra.mxu0 %v2972
    %3917 = vmatprep.subr.bf16.mxu0 %v2965
    %3918 = vmatpush2.bf16.msra.mxu0 %v2964
    %3919 = vmatprep.subr.bf16.mxu0 %v2957
    %3920 = vmatpush2.bf16.msra.mxu0 %v2956
    %3921 = vmatprep.subr.bf16.mxu0 %v2949
    %3922 = vmatpush2.bf16.msra.mxu0 %v2948
    %3923 = vmatprep.subr.bf16.mxu0 %v2941
    %3924 = vmatpush2.bf16.msra.mxu0 %v2940
    %3925 = vmatprep.mubr.bf16.mxu0 %v115
    %3926 = vmatmul.mubr.bf16.gmra.mxu0 %v114
    %v3927 = vpop.f32.mrf.mxu0
    %v3928 = vadd.f32 %v3887, %v3927
    %v3929 = vpop.f32.mrf.mxu0
    %v3930 = vadd.f32 %v3889, %v3929
    %v3931 = vpop.f32.mrf.mxu0
    %v3932 = vpop.f32.mrf.mxu0
    %3933 = vdwg.mxu0
    %3934 = vmatprep.subr.bf16.mxu0 %v3061
    %3935 = vmatpush1.bf16.msra.mxu0 %v3060
    %3936 = vmatprep.subr.bf16.mxu0 %v3053
    %3937 = vmatpush1.bf16.msra.mxu0 %v3052
    %3938 = vmatprep.subr.bf16.mxu0 %v3045
    %3939 = vmatpush1.bf16.msra.mxu0 %v3044
    %3940 = vmatprep.subr.bf16.mxu0 %v3037
    %3941 = vmatpush1.bf16.msra.mxu0 %v3036
    %3942 = vmatprep.subr.bf16.mxu0 %v3029
    %3943 = vmatpush1.bf16.msra.mxu0 %v3028
    %3944 = vmatprep.subr.bf16.mxu0 %v3021
    %3945 = vmatpush1.bf16.msra.mxu0 %v3020
    %3946 = vmatprep.subr.bf16.mxu0 %v3013
    %3947 = vmatpush1.bf16.msra.mxu0 %v3012
    %3948 = vmatprep.subr.bf16.mxu0 %v3005
    %3949 = vmatpush1.bf16.msra.mxu0 %v3004
    %3950 = vmatprep.subr.bf16.mxu0 0
    %3951 = vmatpush2.bf16.msra.mxu0 0
    %3952 = vmatprep.subr.bf16.mxu0 %v3633
    %3953 = vmatpush2.bf16.msra.mxu0 %v3630
    %3954 = vmatprep.subr.bf16.mxu0 %v3109
    %3955 = vmatpush2.bf16.msra.mxu0 %v3108
    %3956 = vmatprep.subr.bf16.mxu0 %v3101
    %3957 = vmatpush2.bf16.msra.mxu0 %v3100
    %3958 = vmatprep.subr.bf16.mxu0 %v3093
    %3959 = vmatpush2.bf16.msra.mxu0 %v3092
    %3960 = vmatprep.subr.bf16.mxu0 %v3085
    %3961 = vmatpush2.bf16.msra.mxu0 %v3084
    %3962 = vmatprep.subr.bf16.mxu0 %v3077
    %3963 = vmatpush2.bf16.msra.mxu0 %v3076
    %3964 = vmatprep.subr.bf16.mxu0 %v3069
    %3965 = vmatpush2.bf16.msra.mxu0 %v3068
    %3966 = vmatprep.mubr.bf16.mxu0 %v3620
    %3967 = vmatmul.mubr.bf16.gmra.mxu0 %v116
    %v3968 = vpop.f32.mrf.mxu0
    %v3969 = vadd.f32 %v3928, %v3968
    %v3970 = vpop.f32.mrf.mxu0
    %v3971 = vadd.f32 %v3930, %v3970
    %v3972 = vpop.f32.mrf.mxu0
    %v3973 = vpop.f32.mrf.mxu0
    %3974 = vdwg.mxu0
    %3975 = vmatprep.subr.bf16.mxu0 %v2679
    %3976 = vmatpush1.bf16.msra.mxu0 %v2678
    %3977 = vmatprep.subr.bf16.mxu0 %v2671
    %3978 = vmatpush1.bf16.msra.mxu0 %v2670
    %3979 = vmatprep.subr.bf16.mxu0 %v2663
    %3980 = vmatpush1.bf16.msra.mxu0 %v2662
    %3981 = vmatprep.subr.bf16.mxu0 %v2655
    %3982 = vmatpush1.bf16.msra.mxu0 %v2654
    %3983 = vmatprep.subr.bf16.mxu0 %v2647
    %3984 = vmatpush1.bf16.msra.mxu0 %v2646
    %3985 = vmatprep.subr.bf16.mxu0 %v2639
    %3986 = vmatpush1.bf16.msra.mxu0 %v2638
    %3987 = vmatprep.subr.bf16.mxu0 %v2631
    %3988 = vmatpush1.bf16.msra.mxu0 %v2630
    %3989 = vmatprep.subr.bf16.mxu0 %v2623
    %3990 = vmatpush1.bf16.msra.mxu0 %v2622
    %3991 = vmatprep.subr.bf16.mxu0 %v2743
    %3992 = vmatpush2.bf16.msra.mxu0 %v2742
    %3993 = vmatprep.subr.bf16.mxu0 %v2735
    %3994 = vmatpush2.bf16.msra.mxu0 %v2734
    %3995 = vmatprep.subr.bf16.mxu0 %v2727
    %3996 = vmatpush2.bf16.msra.mxu0 %v2726
    %3997 = vmatprep.subr.bf16.mxu0 %v2719
    %3998 = vmatpush2.bf16.msra.mxu0 %v2718
    %3999 = vmatprep.subr.bf16.mxu0 %v2711
    %4000 = vmatpush2.bf16.msra.mxu0 %v2710
    %4001 = vmatprep.subr.bf16.mxu0 %v2703
    %4002 = vmatpush2.bf16.msra.mxu0 %v2702
    %4003 = vmatprep.subr.bf16.mxu0 %v2695
    %4004 = vmatpush2.bf16.msra.mxu0 %v2694
    %4005 = vmatprep.subr.bf16.mxu0 %v2687
    %4006 = vmatpush2.bf16.msra.mxu0 %v2686
    %4007 = vmatprep.mubr.bf16.mxu0 %v111
    %4008 = vmatmul.mubr.bf16.gmra.mxu0 %v110
    %v4009 = vpop.f32.mrf.mxu0
    %v4010 = vadd.f32 0.0, %v4009
    %v4011 = vpop.f32.mrf.mxu0
    %v4012 = vadd.f32 0.0, %v4011
    %v4013 = vpop.f32.mrf.mxu0
    %v4014 = vpop.f32.mrf.mxu0
    %4015 = vdwg.mxu0
    %4016 = vmatprep.subr.bf16.mxu0 %v2807
    %4017 = vmatpush1.bf16.msra.mxu0 %v2806
    %4018 = vmatprep.subr.bf16.mxu0 %v2799
    %4019 = vmatpush1.bf16.msra.mxu0 %v2798
    %4020 = vmatprep.subr.bf16.mxu0 %v2791
    %4021 = vmatpush1.bf16.msra.mxu0 %v2790
    %4022 = vmatprep.subr.bf16.mxu0 %v2783
    %4023 = vmatpush1.bf16.msra.mxu0 %v2782
    %4024 = vmatprep.subr.bf16.mxu0 %v2775
    %4025 = vmatpush1.bf16.msra.mxu0 %v2774
    %4026 = vmatprep.subr.bf16.mxu0 %v2767
    %4027 = vmatpush1.bf16.msra.mxu0 %v2766
    %4028 = vmatprep.subr.bf16.mxu0 %v2759
    %4029 = vmatpush1.bf16.msra.mxu0 %v2758
    %4030 = vmatprep.subr.bf16.mxu0 %v2751
    %4031 = vmatpush1.bf16.msra.mxu0 %v2750
    %4032 = vmatprep.subr.bf16.mxu0 %v2871
    %4033 = vmatpush2.bf16.msra.mxu0 %v2870
    %4034 = vmatprep.subr.bf16.mxu0 %v2863
    %4035 = vmatpush2.bf16.msra.mxu0 %v2862
    %4036 = vmatprep.subr.bf16.mxu0 %v2855
    %4037 = vmatpush2.bf16.msra.mxu0 %v2854
    %4038 = vmatprep.subr.bf16.mxu0 %v2847
    %4039 = vmatpush2.bf16.msra.mxu0 %v2846
    %4040 = vmatprep.subr.bf16.mxu0 %v2839
    %4041 = vmatpush2.bf16.msra.mxu0 %v2838
    %4042 = vmatprep.subr.bf16.mxu0 %v2831
    %4043 = vmatpush2.bf16.msra.mxu0 %v2830
    %4044 = vmatprep.subr.bf16.mxu0 %v2823
    %4045 = vmatpush2.bf16.msra.mxu0 %v2822
    %4046 = vmatprep.subr.bf16.mxu0 %v2815
    %4047 = vmatpush2.bf16.msra.mxu0 %v2814
    %4048 = vmatprep.mubr.bf16.mxu0 %v113
    %4049 = vmatmul.mubr.bf16.gmra.mxu0 %v112
    %v4050 = vpop.f32.mrf.mxu0
    %v4051 = vadd.f32 %v4010, %v4050
    %v4052 = vpop.f32.mrf.mxu0
    %v4053 = vadd.f32 %v4012, %v4052
    %v4054 = vpop.f32.mrf.mxu0
    %v4055 = vpop.f32.mrf.mxu0
    %4056 = vdwg.mxu0
    %4057 = vmatprep.subr.bf16.mxu0 %v2935
    %4058 = vmatpush1.bf16.msra.mxu0 %v2934
    %4059 = vmatprep.subr.bf16.mxu0 %v2927
    %4060 = vmatpush1.bf16.msra.mxu0 %v2926
    %4061 = vmatprep.subr.bf16.mxu0 %v2919
    %4062 = vmatpush1.bf16.msra.mxu0 %v2918
    %4063 = vmatprep.subr.bf16.mxu0 %v2911
    %4064 = vmatpush1.bf16.msra.mxu0 %v2910
    %4065 = vmatprep.subr.bf16.mxu0 %v2903
    %4066 = vmatpush1.bf16.msra.mxu0 %v2902
    %4067 = vmatprep.subr.bf16.mxu0 %v2895
    %4068 = vmatpush1.bf16.msra.mxu0 %v2894
    %4069 = vmatprep.subr.bf16.mxu0 %v2887
    %4070 = vmatpush1.bf16.msra.mxu0 %v2886
    %4071 = vmatprep.subr.bf16.mxu0 %v2879
    %4072 = vmatpush1.bf16.msra.mxu0 %v2878
    %4073 = vmatprep.subr.bf16.mxu0 %v2999
    %4074 = vmatpush2.bf16.msra.mxu0 %v2998
    %4075 = vmatprep.subr.bf16.mxu0 %v2991
    %4076 = vmatpush2.bf16.msra.mxu0 %v2990
    %4077 = vmatprep.subr.bf16.mxu0 %v2983
    %4078 = vmatpush2.bf16.msra.mxu0 %v2982
    %4079 = vmatprep.subr.bf16.mxu0 %v2975
    %4080 = vmatpush2.bf16.msra.mxu0 %v2974
    %4081 = vmatprep.subr.bf16.mxu0 %v2967
    %4082 = vmatpush2.bf16.msra.mxu0 %v2966
    %4083 = vmatprep.subr.bf16.mxu0 %v2959
    %4084 = vmatpush2.bf16.msra.mxu0 %v2958
    %4085 = vmatprep.subr.bf16.mxu0 %v2951
    %4086 = vmatpush2.bf16.msra.mxu0 %v2950
    %4087 = vmatprep.subr.bf16.mxu0 %v2943
    %4088 = vmatpush2.bf16.msra.mxu0 %v2942
    %4089 = vmatprep.mubr.bf16.mxu0 %v115
    %4090 = vmatmul.mubr.bf16.gmra.mxu0 %v114
    %v4091 = vpop.f32.mrf.mxu0
    %v4092 = vadd.f32 %v4051, %v4091
    %v4093 = vpop.f32.mrf.mxu0
    %v4094 = vadd.f32 %v4053, %v4093
    %v4095 = vpop.f32.mrf.mxu0
    %v4096 = vpop.f32.mrf.mxu0
    %4097 = vdwg.mxu0
    %4098 = vmatprep.subr.bf16.mxu0 %v3063
    %4099 = vmatpush1.bf16.msra.mxu0 %v3062
    %4100 = vmatprep.subr.bf16.mxu0 %v3055
    %4101 = vmatpush1.bf16.msra.mxu0 %v3054
    %4102 = vmatprep.subr.bf16.mxu0 %v3047
    %4103 = vmatpush1.bf16.msra.mxu0 %v3046
    %4104 = vmatprep.subr.bf16.mxu0 %v3039
    %4105 = vmatpush1.bf16.msra.mxu0 %v3038
    %4106 = vmatprep.subr.bf16.mxu0 %v3031
    %4107 = vmatpush1.bf16.msra.mxu0 %v3030
    %4108 = vmatprep.subr.bf16.mxu0 %v3023
    %4109 = vmatpush1.bf16.msra.mxu0 %v3022
    %4110 = vmatprep.subr.bf16.mxu0 %v3015
    %4111 = vmatpush1.bf16.msra.mxu0 %v3014
    %4112 = vmatprep.subr.bf16.mxu0 %v3007
    %4113 = vmatpush1.bf16.msra.mxu0 %v3006
    %4114 = vmatprep.subr.bf16.mxu0 0
    %4115 = vmatpush2.bf16.msra.mxu0 0
    %4116 = vmatprep.subr.bf16.mxu0 %v3639
    %4117 = vmatpush2.bf16.msra.mxu0 %v3636
    %4118 = vmatprep.subr.bf16.mxu0 %v3111
    %4119 = vmatpush2.bf16.msra.mxu0 %v3110
    %4120 = vmatprep.subr.bf16.mxu0 %v3103
    %4121 = vmatpush2.bf16.msra.mxu0 %v3102
    %4122 = vmatprep.subr.bf16.mxu0 %v3095
    %4123 = vmatpush2.bf16.msra.mxu0 %v3094
    %4124 = vmatprep.subr.bf16.mxu0 %v3087
    %4125 = vmatpush2.bf16.msra.mxu0 %v3086
    %4126 = vmatprep.subr.bf16.mxu0 %v3079
    %4127 = vmatpush2.bf16.msra.mxu0 %v3078
    %4128 = vmatprep.subr.bf16.mxu0 %v3071
    %4129 = vmatpush2.bf16.msra.mxu0 %v3070
    %4130 = vmatprep.mubr.bf16.mxu0 %v3620
    %4131 = vmatmul.mubr.bf16.gmra.mxu0 %v116
    %v4132 = vpop.f32.mrf.mxu0
    %v4133 = vadd.f32 %v4092, %v4132
    %v4134 = vpop.f32.mrf.mxu0
    %v4135 = vadd.f32 %v4094, %v4134
    %v4136 = vpop.f32.mrf.mxu0
    %v4137 = vpop.f32.mrf.mxu0
    %4138 = vdwg.mxu0
    %4139 = vmatprep.subr.bf16.mxu0 %v2681
    %4140 = vmatpush1.bf16.msra.mxu0 %v2680
    %4141 = vmatprep.subr.bf16.mxu0 %v2673
    %4142 = vmatpush1.bf16.msra.mxu0 %v2672
    %4143 = vmatprep.subr.bf16.mxu0 %v2665
    %4144 = vmatpush1.bf16.msra.mxu0 %v2664
    %4145 = vmatprep.subr.bf16.mxu0 %v2657
    %4146 = vmatpush1.bf16.msra.mxu0 %v2656
    %4147 = vmatprep.subr.bf16.mxu0 %v2649
    %4148 = vmatpush1.bf16.msra.mxu0 %v2648
    %4149 = vmatprep.subr.bf16.mxu0 %v2641
    %4150 = vmatpush1.bf16.msra.mxu0 %v2640
    %4151 = vmatprep.subr.bf16.mxu0 %v2633
    %4152 = vmatpush1.bf16.msra.mxu0 %v2632
    %4153 = vmatprep.subr.bf16.mxu0 %v2625
    %4154 = vmatpush1.bf16.msra.mxu0 %v2624
    %4155 = vmatprep.subr.bf16.mxu0 %v2745
    %4156 = vmatpush2.bf16.msra.mxu0 %v2744
    %4157 = vmatprep.subr.bf16.mxu0 %v2737
    %4158 = vmatpush2.bf16.msra.mxu0 %v2736
    %4159 = vmatprep.subr.bf16.mxu0 %v2729
    %4160 = vmatpush2.bf16.msra.mxu0 %v2728
    %4161 = vmatprep.subr.bf16.mxu0 %v2721
    %4162 = vmatpush2.bf16.msra.mxu0 %v2720
    %4163 = vmatprep.subr.bf16.mxu0 %v2713
    %4164 = vmatpush2.bf16.msra.mxu0 %v2712
    %4165 = vmatprep.subr.bf16.mxu0 %v2705
    %4166 = vmatpush2.bf16.msra.mxu0 %v2704
    %4167 = vmatprep.subr.bf16.mxu0 %v2697
    %4168 = vmatpush2.bf16.msra.mxu0 %v2696
    %4169 = vmatprep.subr.bf16.mxu0 %v2689
    %4170 = vmatpush2.bf16.msra.mxu0 %v2688
    %4171 = vmatprep.mubr.bf16.mxu0 %v111
    %4172 = vmatmul.mubr.bf16.gmra.mxu0 %v110
    %v4173 = vpop.f32.mrf.mxu0
    %v4174 = vadd.f32 0.0, %v4173
    %v4175 = vpop.f32.mrf.mxu0
    %v4176 = vadd.f32 0.0, %v4175
    %v4177 = vpop.f32.mrf.mxu0
    %v4178 = vpop.f32.mrf.mxu0
    %4179 = vdwg.mxu0
    %4180 = vmatprep.subr.bf16.mxu0 %v2809
    %4181 = vmatpush1.bf16.msra.mxu0 %v2808
    %4182 = vmatprep.subr.bf16.mxu0 %v2801
    %4183 = vmatpush1.bf16.msra.mxu0 %v2800
    %4184 = vmatprep.subr.bf16.mxu0 %v2793
    %4185 = vmatpush1.bf16.msra.mxu0 %v2792
    %4186 = vmatprep.subr.bf16.mxu0 %v2785
    %4187 = vmatpush1.bf16.msra.mxu0 %v2784
    %4188 = vmatprep.subr.bf16.mxu0 %v2777
    %4189 = vmatpush1.bf16.msra.mxu0 %v2776
    %4190 = vmatprep.subr.bf16.mxu0 %v2769
    %4191 = vmatpush1.bf16.msra.mxu0 %v2768
    %4192 = vmatprep.subr.bf16.mxu0 %v2761
    %4193 = vmatpush1.bf16.msra.mxu0 %v2760
    %4194 = vmatprep.subr.bf16.mxu0 %v2753
    %4195 = vmatpush1.bf16.msra.mxu0 %v2752
    %4196 = vmatprep.subr.bf16.mxu0 %v2873
    %4197 = vmatpush2.bf16.msra.mxu0 %v2872
    %4198 = vmatprep.subr.bf16.mxu0 %v2865
    %4199 = vmatpush2.bf16.msra.mxu0 %v2864
    %4200 = vmatprep.subr.bf16.mxu0 %v2857
    %4201 = vmatpush2.bf16.msra.mxu0 %v2856
    %4202 = vmatprep.subr.bf16.mxu0 %v2849
    %4203 = vmatpush2.bf16.msra.mxu0 %v2848
    %4204 = vmatprep.subr.bf16.mxu0 %v2841
    %4205 = vmatpush2.bf16.msra.mxu0 %v2840
    %4206 = vmatprep.subr.bf16.mxu0 %v2833
    %4207 = vmatpush2.bf16.msra.mxu0 %v2832
    %4208 = vmatprep.subr.bf16.mxu0 %v2825
    %4209 = vmatpush2.bf16.msra.mxu0 %v2824
    %4210 = vmatprep.subr.bf16.mxu0 %v2817
    %4211 = vmatpush2.bf16.msra.mxu0 %v2816
    %4212 = vmatprep.mubr.bf16.mxu0 %v113
    %4213 = vmatmul.mubr.bf16.gmra.mxu0 %v112
    %v4214 = vpop.f32.mrf.mxu0
    %v4215 = vadd.f32 %v4174, %v4214
    %v4216 = vpop.f32.mrf.mxu0
    %v4217 = vadd.f32 %v4176, %v4216
    %v4218 = vpop.f32.mrf.mxu0
    %v4219 = vpop.f32.mrf.mxu0
    %4220 = vdwg.mxu0
    %4221 = vmatprep.subr.bf16.mxu0 %v2937
    %4222 = vmatpush1.bf16.msra.mxu0 %v2936
    %4223 = vmatprep.subr.bf16.mxu0 %v2929
    %4224 = vmatpush1.bf16.msra.mxu0 %v2928
    %4225 = vmatprep.subr.bf16.mxu0 %v2921
    %4226 = vmatpush1.bf16.msra.mxu0 %v2920
    %4227 = vmatprep.subr.bf16.mxu0 %v2913
    %4228 = vmatpush1.bf16.msra.mxu0 %v2912
    %4229 = vmatprep.subr.bf16.mxu0 %v2905
    %4230 = vmatpush1.bf16.msra.mxu0 %v2904
    %4231 = vmatprep.subr.bf16.mxu0 %v2897
    %4232 = vmatpush1.bf16.msra.mxu0 %v2896
    %4233 = vmatprep.subr.bf16.mxu0 %v2889
    %4234 = vmatpush1.bf16.msra.mxu0 %v2888
    %4235 = vmatprep.subr.bf16.mxu0 %v2881
    %4236 = vmatpush1.bf16.msra.mxu0 %v2880
    %4237 = vmatprep.subr.bf16.mxu0 %v3001
    %4238 = vmatpush2.bf16.msra.mxu0 %v3000
    %4239 = vmatprep.subr.bf16.mxu0 %v2993
    %4240 = vmatpush2.bf16.msra.mxu0 %v2992
    %4241 = vmatprep.subr.bf16.mxu0 %v2985
    %4242 = vmatpush2.bf16.msra.mxu0 %v2984
    %4243 = vmatprep.subr.bf16.mxu0 %v2977
    %4244 = vmatpush2.bf16.msra.mxu0 %v2976
    %4245 = vmatprep.subr.bf16.mxu0 %v2969
    %4246 = vmatpush2.bf16.msra.mxu0 %v2968
    %4247 = vmatprep.subr.bf16.mxu0 %v2961
    %4248 = vmatpush2.bf16.msra.mxu0 %v2960
    %4249 = vmatprep.subr.bf16.mxu0 %v2953
    %4250 = vmatpush2.bf16.msra.mxu0 %v2952
    %4251 = vmatprep.subr.bf16.mxu0 %v2945
    %4252 = vmatpush2.bf16.msra.mxu0 %v2944
    %4253 = vmatprep.mubr.bf16.mxu0 %v115
    %4254 = vmatmul.mubr.bf16.gmra.mxu0 %v114
    %v4255 = vpop.f32.mrf.mxu0
    %v4256 = vadd.f32 %v4215, %v4255
    %v4257 = vpop.f32.mrf.mxu0
    %v4258 = vadd.f32 %v4217, %v4257
    %v4259 = vpop.f32.mrf.mxu0
    %v4260 = vpop.f32.mrf.mxu0
    %4261 = vdwg.mxu0
    %4262 = vmatprep.subr.bf16.mxu0 %v3065
    %4263 = vmatpush1.bf16.msra.mxu0 %v3064
    %4264 = vmatprep.subr.bf16.mxu0 %v3057
    %4265 = vmatpush1.bf16.msra.mxu0 %v3056
    %4266 = vmatprep.subr.bf16.mxu0 %v3049
    %4267 = vmatpush1.bf16.msra.mxu0 %v3048
    %4268 = vmatprep.subr.bf16.mxu0 %v3041
    %4269 = vmatpush1.bf16.msra.mxu0 %v3040
    %4270 = vmatprep.subr.bf16.mxu0 %v3033
    %4271 = vmatpush1.bf16.msra.mxu0 %v3032
    %4272 = vmatprep.subr.bf16.mxu0 %v3025
    %4273 = vmatpush1.bf16.msra.mxu0 %v3024
    %4274 = vmatprep.subr.bf16.mxu0 %v3017
    %4275 = vmatpush1.bf16.msra.mxu0 %v3016
    %4276 = vmatprep.subr.bf16.mxu0 %v3009
    %4277 = vmatpush1.bf16.msra.mxu0 %v3008
    %4278 = vmatprep.subr.bf16.mxu0 0
    %4279 = vmatpush2.bf16.msra.mxu0 0
    %4280 = vmatprep.subr.bf16.mxu0 %v3645
    %4281 = vmatpush2.bf16.msra.mxu0 %v3642
    %4282 = vmatprep.subr.bf16.mxu0 %v3113
    %4283 = vmatpush2.bf16.msra.mxu0 %v3112
    %4284 = vmatprep.subr.bf16.mxu0 %v3105
    %4285 = vmatpush2.bf16.msra.mxu0 %v3104
    %4286 = vmatprep.subr.bf16.mxu0 %v3097
    %4287 = vmatpush2.bf16.msra.mxu0 %v3096
    %4288 = vmatprep.subr.bf16.mxu0 %v3089
    %4289 = vmatpush2.bf16.msra.mxu0 %v3088
    %4290 = vmatprep.subr.bf16.mxu0 %v3081
    %4291 = vmatpush2.bf16.msra.mxu0 %v3080
    %4292 = vmatprep.subr.bf16.mxu0 %v3073
    %4293 = vmatpush2.bf16.msra.mxu0 %v3072
    %4294 = vmatprep.mubr.bf16.mxu0 %v3620
    %4295 = vmatmul.mubr.bf16.gmra.mxu0 %v116
    %v4296 = vpop.f32.mrf.mxu0
    %v4297 = vadd.f32 %v4256, %v4296
    %v4298 = vpop.f32.mrf.mxu0
    %v4299 = vadd.f32 %v4258, %v4298
    %v4300 = vpop.f32.mrf.mxu0
    %v4301 = vpop.f32.mrf.mxu0
    %4302 = vdwg.mxu0
    %v4803 = vunpack.c.l.b16 %v118
    %v4804 = vunpack.c.h.b16 %v118
    %v4805 = vunpack.c.l.b16 %v119
    %v4806 = vunpack.c.h.b16 %v119
    %v4807 = vunpack.c.l.b16 %v120
    %v4808 = vunpack.c.h.b16 %v120
    %v4809 = vunpack.c.l.b16 %v121
    %v4810 = vunpack.c.h.b16 %v121
    %v4811 = vunpack.c.l.b16 %v122
    %v4812 = vunpack.c.h.b16 %v122
    %v4813 = vunpack.c.l.b16 %v123
    %v4814 = vunpack.c.h.b16 %v123
    %v4815 = vunpack.c.l.b16 %v124
    %v4816 = vunpack.c.h.b16 %v124
    %v4817 = vunpack.c.l.b16 %v125
    %v4818 = vunpack.c.h.b16 %v125
    %v4819 = vunpack.c.l.b16 %v126
    %v4820 = vunpack.c.h.b16 %v126
    %v4821 = vunpack.c.l.b16 %v127
    %v4822 = vunpack.c.h.b16 %v127
    %v4823 = vunpack.c.l.b16 %v128
    %v4824 = vunpack.c.h.b16 %v128
    %v4825 = vunpack.c.l.b16 %v129
    %v4826 = vunpack.c.h.b16 %v129
    %v4827 = vunpack.c.l.b16 %v130
    %v4828 = vunpack.c.h.b16 %v130
    %v4829 = vunpack.c.l.b16 %v131
    %v4830 = vunpack.c.h.b16 %v131
    %v4831 = vunpack.c.l.b16 %v132
    %v4832 = vunpack.c.h.b16 %v132
    %v4833 = vunpack.c.l.b16 %v133
    %v4834 = vunpack.c.h.b16 %v133
    %v4835 = vunpack.c.l.b16 %v134
    %v4836 = vunpack.c.h.b16 %v134
    %v4837 = vunpack.c.l.b16 %v135
    %v4838 = vunpack.c.h.b16 %v135
    %v4839 = vunpack.c.l.b16 %v136
    %v4840 = vunpack.c.h.b16 %v136
    %v4841 = vunpack.c.l.b16 %v137
    %v4842 = vunpack.c.h.b16 %v137
    %v4843 = vunpack.c.l.b16 %v138
    %v4844 = vunpack.c.h.b16 %v138
    %v4845 = vunpack.c.l.b16 %v139
    %v4846 = vunpack.c.h.b16 %v139
    %v4847 = vunpack.c.l.b16 %v140
    %v4848 = vunpack.c.h.b16 %v140
    %v4849 = vunpack.c.l.b16 %v141
    %v4850 = vunpack.c.h.b16 %v141
    %v4851 = vunpack.c.l.b16 %v142
    %v4852 = vunpack.c.h.b16 %v142
    %v4853 = vunpack.c.l.b16 %v143
    %v4854 = vunpack.c.h.b16 %v143
    %v4855 = vunpack.c.l.b16 %v144
    %v4856 = vunpack.c.h.b16 %v144
    %v4857 = vunpack.c.l.b16 %v145
    %v4858 = vunpack.c.h.b16 %v145
    %v4859 = vunpack.c.l.b16 %v146
    %v4860 = vunpack.c.h.b16 %v146
    %v4861 = vunpack.c.l.b16 %v147
    %v4862 = vunpack.c.h.b16 %v147
    %v4863 = vunpack.c.l.b16 %v148
    %v4864 = vunpack.c.h.b16 %v148
    %v4865 = vunpack.c.l.b16 %v149
    %v4866 = vunpack.c.h.b16 %v149
    %v4867 = vunpack.c.l.b16 %v150
    %v4868 = vunpack.c.h.b16 %v150
    %v4869 = vunpack.c.l.b16 %v151
    %v4870 = vunpack.c.h.b16 %v151
    %v4871 = vunpack.c.l.b16 %v152
    %v4872 = vunpack.c.h.b16 %v152
    %v4873 = vunpack.c.l.b16 %v153
    %v4874 = vunpack.c.h.b16 %v153
    %v4875 = vunpack.c.l.b16 %v154
    %v4876 = vunpack.c.h.b16 %v154
    %v4877 = vunpack.c.l.b16 %v155
    %v4878 = vunpack.c.h.b16 %v155
    %v4879 = vunpack.c.l.b16 %v156
    %v4880 = vunpack.c.h.b16 %v156
    %v4881 = vunpack.c.l.b16 %v157
    %v4882 = vunpack.c.h.b16 %v157
    %v4883 = vunpack.c.l.b16 %v158
    %v4884 = vunpack.c.h.b16 %v158
    %v4885 = vunpack.c.l.b16 %v159
    %v4886 = vunpack.c.h.b16 %v159
    %v4887 = vunpack.c.l.b16 %v160
    %v4888 = vunpack.c.h.b16 %v160
    %v4889 = vunpack.c.l.b16 %v161
    %v4890 = vunpack.c.h.b16 %v161
    %v4891 = vunpack.c.l.b16 %v162
    %v4892 = vunpack.c.h.b16 %v162
    %v4893 = vunpack.c.l.b16 %v163
    %v4894 = vunpack.c.h.b16 %v163
    %v4895 = vunpack.c.l.b16 %v164
    %v4896 = vunpack.c.h.b16 %v164
    %v4897 = vunpack.c.l.b16 %v165
    %v4898 = vunpack.c.h.b16 %v165
    %v4899 = vunpack.c.l.b16 %v166
    %v4900 = vunpack.c.h.b16 %v166
    %v4901 = vunpack.c.l.b16 %v167
    %v4902 = vunpack.c.h.b16 %v167
    %v4903 = vunpack.c.l.b16 %v168
    %v4904 = vunpack.c.h.b16 %v168
    %v4905 = vunpack.c.l.b16 %v169
    %v4906 = vunpack.c.h.b16 %v169
    %v4907 = vunpack.c.l.b16 %v170
    %v4908 = vunpack.c.h.b16 %v170
    %v4909 = vunpack.c.l.b16 %v171
    %v4910 = vunpack.c.h.b16 %v171
    %v4911 = vunpack.c.l.b16 %v172
    %v4912 = vunpack.c.h.b16 %v172
    %v4913 = vunpack.c.l.b16 %v173
    %v4914 = vunpack.c.h.b16 %v173
    %v4915 = vunpack.c.l.b16 %v174
    %v4916 = vunpack.c.h.b16 %v174
    %v4917 = vunpack.c.l.b16 %v175
    %v4918 = vunpack.c.h.b16 %v175
    %v4919 = vunpack.c.l.b16 %v176
    %v4920 = vunpack.c.h.b16 %v176
    %v4921 = vunpack.c.l.b16 %v177
    %v4922 = vunpack.c.h.b16 %v177
    %v4923 = vunpack.c.l.b16 %v178
    %v4924 = vunpack.c.h.b16 %v178
    %v4925 = vunpack.c.l.b16 %v179
    %v4926 = vunpack.c.h.b16 %v179
    %v4927 = vunpack.c.l.b16 %v180
    %v4928 = vunpack.c.h.b16 %v180
    %v4929 = vunpack.c.l.b16 %v181
    %v4930 = vunpack.c.h.b16 %v181
    %v4931 = vunpack.c.l.b16 %v182
    %v4932 = vunpack.c.h.b16 %v182
    %v4933 = vunpack.c.l.b16 %v183
    %v4934 = vunpack.c.h.b16 %v183
    %v4935 = vunpack.c.l.b16 %v184
    %v4936 = vunpack.c.h.b16 %v184
    %v4937 = vunpack.c.l.b16 %v185
    %v4938 = vunpack.c.h.b16 %v185
    %v4939 = vunpack.c.l.b16 %v186
    %v4940 = vunpack.c.h.b16 %v186
    %v4941 = vunpack.c.l.b16 %v187
    %v4942 = vunpack.c.h.b16 %v187
    %v4943 = vunpack.c.l.b16 %v188
    %v4944 = vunpack.c.h.b16 %v188
    %v4945 = vunpack.c.l.b16 %v189
    %v4946 = vunpack.c.h.b16 %v189
    %v4947 = vunpack.c.l.b16 %v190
    %v4948 = vunpack.c.h.b16 %v190
    %v4949 = vunpack.c.l.b16 %v191
    %v4950 = vunpack.c.h.b16 %v191
    %v4951 = vunpack.c.l.b16 %v192
    %v4952 = vunpack.c.h.b16 %v192
    %v4953 = vunpack.c.l.b16 %v193
    %v4954 = vunpack.c.h.b16 %v193
    %v4955 = vunpack.c.l.b16 %v194
    %v4956 = vunpack.c.h.b16 %v194
    %v4957 = vunpack.c.l.b16 %v195
    %v4958 = vunpack.c.h.b16 %v195
    %v4959 = vunpack.c.l.b16 %v196
    %v4960 = vunpack.c.h.b16 %v196
    %v4961 = vunpack.c.l.b16 %v197
    %v4962 = vunpack.c.h.b16 %v197
    %v4963 = vunpack.c.l.b16 %v198
    %v4964 = vunpack.c.h.b16 %v198
    %v4965 = vunpack.c.l.b16 %v199
    %v4966 = vunpack.c.h.b16 %v199
    %v4967 = vunpack.c.l.b16 %v200
    %v4968 = vunpack.c.h.b16 %v200
    %v4969 = vunpack.c.l.b16 %v201
    %v4970 = vunpack.c.h.b16 %v201
    %v4971 = vunpack.c.l.b16 %v202
    %v4972 = vunpack.c.h.b16 %v202
    %v4973 = vunpack.c.l.b16 %v203
    %v4974 = vunpack.c.h.b16 %v203
    %v4975 = vunpack.c.l.b16 %v204
    %v4976 = vunpack.c.h.b16 %v204
    %v4977 = vunpack.c.l.b16 %v205
    %v4978 = vunpack.c.h.b16 %v205
    %v4979 = vunpack.c.l.b16 %v206
    %v4980 = vunpack.c.h.b16 %v206
    %v4981 = vunpack.c.l.b16 %v207
    %v4982 = vunpack.c.h.b16 %v207
    %v4983 = vunpack.c.l.b16 %v208
    %v4984 = vunpack.c.h.b16 %v208
    %v4985 = vunpack.c.l.b16 %v209
    %v4986 = vunpack.c.h.b16 %v209
    %v4987 = vunpack.c.l.b16 %v210
    %v4988 = vunpack.c.h.b16 %v210
    %v4989 = vunpack.c.l.b16 %v211
    %v4990 = vunpack.c.h.b16 %v211
    %v4991 = vunpack.c.l.b16 %v212
    %v4992 = vunpack.c.h.b16 %v212
    %v4993 = vunpack.c.l.b16 %v213
    %v4994 = vunpack.c.h.b16 %v213
    %v4995 = vunpack.c.l.b16 %v214
    %v4996 = vunpack.c.h.b16 %v214
    %v4997 = vunpack.c.l.b16 %v215
    %v4998 = vunpack.c.h.b16 %v215
    %v4999 = vunpack.c.l.b16 %v216
    %v5000 = vunpack.c.h.b16 %v216
    %v5001 = vunpack.c.l.b16 %v217
    %v5002 = vunpack.c.h.b16 %v217
    %v5003 = vunpack.c.l.b16 %v218
    %v5004 = vunpack.c.h.b16 %v218
    %v5005 = vunpack.c.l.b16 %v219
    %v5006 = vunpack.c.h.b16 %v219
    %v5007 = vunpack.c.l.b16 %v220
    %v5008 = vunpack.c.h.b16 %v220
    %v5009 = vunpack.c.l.b16 %v221
    %v5010 = vunpack.c.h.b16 %v221
    %v5011 = vunpack.c.l.b16 %v222
    %v5012 = vunpack.c.h.b16 %v222
    %v5013 = vunpack.c.l.b16 %v223
    %v5014 = vunpack.c.h.b16 %v223
    %v5015 = vunpack.c.l.b16 %v224
    %v5016 = vunpack.c.h.b16 %v224
    %v5017 = vunpack.c.l.b16 %v225
    %v5018 = vunpack.c.h.b16 %v225
    %v5019 = vunpack.c.l.b16 %v226
    %v5020 = vunpack.c.h.b16 %v226
    %v5021 = vunpack.c.l.b16 %v227
    %v5022 = vunpack.c.h.b16 %v227
    %v5023 = vunpack.c.l.b16 %v228
    %v5024 = vunpack.c.h.b16 %v228
    %v5025 = vunpack.c.l.b16 %v229
    %v5026 = vunpack.c.h.b16 %v229
    %v5027 = vunpack.c.l.b16 %v230
    %v5028 = vunpack.c.h.b16 %v230
    %v5029 = vunpack.c.l.b16 %v231
    %v5030 = vunpack.c.h.b16 %v231
    %v5031 = vunpack.c.l.b16 %v232
    %v5032 = vunpack.c.h.b16 %v232
    %v5033 = vunpack.c.l.b16 %v233
    %v5034 = vunpack.c.h.b16 %v233
    %v5035 = vunpack.c.l.b16 %v234
    %v5036 = vunpack.c.h.b16 %v234
    %v5037 = vunpack.c.l.b16 %v235
    %v5038 = vunpack.c.h.b16 %v235
    %v5039 = vunpack.c.l.b16 %v236
    %v5040 = vunpack.c.h.b16 %v236
    %v5041 = vunpack.c.l.b16 %v237
    %v5042 = vunpack.c.h.b16 %v237
    %v5043 = vunpack.c.l.b16 %v238
    %v5044 = vunpack.c.h.b16 %v238
    %v5045 = vunpack.c.l.b16 %v239
    %v5046 = vunpack.c.h.b16 %v239
    %v5047 = vunpack.c.l.b16 %v240
    %v5048 = vunpack.c.h.b16 %v240
    %v5049 = vunpack.c.l.b16 %v241
    %v5050 = vunpack.c.h.b16 %v241
    %v5051 = vunpack.c.l.b16 %v242
    %v5052 = vunpack.c.h.b16 %v242
    %v5053 = vunpack.c.l.b16 %v243
    %v5054 = vunpack.c.h.b16 %v243
    %v5055 = vunpack.c.l.b16 %v244
    %v5056 = vunpack.c.h.b16 %v244
    %v5057 = vunpack.c.l.b16 %v245
    %v5058 = vunpack.c.h.b16 %v245
    %v5059 = vunpack.c.l.b16 %v246
    %v5060 = vunpack.c.h.b16 %v246
    %v5061 = vunpack.c.l.b16 %v247
    %v5062 = vunpack.c.h.b16 %v247
    %v5063 = vunpack.c.l.b16 %v248
    %v5064 = vunpack.c.h.b16 %v248
    %v5065 = vunpack.c.l.b16 %v249
    %v5066 = vunpack.c.h.b16 %v249
    %v5067 = vunpack.c.l.b16 %v250
    %v5068 = vunpack.c.h.b16 %v250
    %v5069 = vunpack.c.l.b16 %v251
    %v5070 = vunpack.c.h.b16 %v251
    %v5071 = vunpack.c.l.b16 %v252
    %v5072 = vunpack.c.h.b16 %v252
    %v5073 = vunpack.c.l.b16 %v253
    %v5074 = vunpack.c.h.b16 %v253
    %v5075 = vunpack.c.l.b16 %v254
    %v5076 = vunpack.c.h.b16 %v254
    %v5077 = vunpack.c.l.b16 %v255
    %v5078 = vunpack.c.h.b16 %v255
    %v5079 = vunpack.c.l.b16 %v256
    %v5080 = vunpack.c.h.b16 %v256
    %v5081 = vunpack.c.l.b16 %v257
    %v5082 = vunpack.c.h.b16 %v257
    %v5083 = vunpack.c.l.b16 %v258
    %v5084 = vunpack.c.h.b16 %v258
    %v5085 = vunpack.c.l.b16 %v259
    %v5086 = vunpack.c.h.b16 %v259
    %v5087 = vunpack.c.l.b16 %v260
    %v5088 = vunpack.c.h.b16 %v260
    %v5089 = vunpack.c.l.b16 %v261
    %v5090 = vunpack.c.h.b16 %v261
    %v5091 = vunpack.c.l.b16 %v262
    %v5092 = vunpack.c.h.b16 %v262
    %v5093 = vunpack.c.l.b16 %v263
    %v5094 = vunpack.c.h.b16 %v263
    %v5095 = vunpack.c.l.b16 %v264
    %v5096 = vunpack.c.h.b16 %v264
    %v5097 = vunpack.c.l.b16 %v265
    %v5098 = vunpack.c.h.b16 %v265
    %v5099 = vunpack.c.l.b16 %v266
    %v5100 = vunpack.c.h.b16 %v266
    %v5101 = vunpack.c.l.b16 %v267
    %v5102 = vunpack.c.h.b16 %v267
    %v5103 = vunpack.c.l.b16 %v268
    %v5104 = vunpack.c.h.b16 %v268
    %v5105 = vunpack.c.l.b16 %v269
    %v5106 = vunpack.c.h.b16 %v269
    %v5107 = vunpack.c.l.b16 %v270
    %v5108 = vunpack.c.h.b16 %v270
    %v5109 = vunpack.c.l.b16 %v271
    %v5110 = vunpack.c.h.b16 %v271
    %v5111 = vunpack.c.l.b16 %v272
    %v5112 = vunpack.c.h.b16 %v272
    %v5113 = vunpack.c.l.b16 %v273
    %v5114 = vunpack.c.h.b16 %v273
    %v5115 = vunpack.c.l.b16 %v274
    %v5116 = vunpack.c.h.b16 %v274
    %v5117 = vunpack.c.l.b16 %v275
    %v5118 = vunpack.c.h.b16 %v275
    %v5119 = vunpack.c.l.b16 %v276
    %v5120 = vunpack.c.h.b16 %v276
    %v5121 = vunpack.c.l.b16 %v277
    %v5122 = vunpack.c.h.b16 %v277
    %v5123 = vunpack.c.l.b16 %v278
    %v5124 = vunpack.c.h.b16 %v278
    %v5125 = vunpack.c.l.b16 %v279
    %v5126 = vunpack.c.h.b16 %v279
    %v5127 = vunpack.c.l.b16 %v280
    %v5128 = vunpack.c.h.b16 %v280
    %v5129 = vunpack.c.l.b16 %v281
    %v5130 = vunpack.c.h.b16 %v281
    %v5131 = vunpack.c.l.b16 %v282
    %v5132 = vunpack.c.h.b16 %v282
    %v5133 = vunpack.c.l.b16 %v283
    %v5134 = vunpack.c.h.b16 %v283
    %v5135 = vunpack.c.l.b16 %v284
    %v5136 = vunpack.c.h.b16 %v284
    %v5137 = vunpack.c.l.b16 %v285
    %v5138 = vunpack.c.h.b16 %v285
    %v5139 = vunpack.c.l.b16 %v286
    %v5140 = vunpack.c.h.b16 %v286
    %v5141 = vunpack.c.l.b16 %v287
    %v5142 = vunpack.c.h.b16 %v287
    %v5143 = vunpack.c.l.b16 %v288
    %v5144 = vunpack.c.h.b16 %v288
    %v5145 = vunpack.c.l.b16 %v289
    %v5146 = vunpack.c.h.b16 %v289
    %v5147 = vunpack.c.l.b16 %v290
    %v5148 = vunpack.c.h.b16 %v290
    %v5149 = vunpack.c.l.b16 %v291
    %v5150 = vunpack.c.h.b16 %v291
    %v5151 = vunpack.c.l.b16 %v292
    %v5152 = vunpack.c.h.b16 %v292
    %v5153 = vunpack.c.l.b16 %v293
    %v5154 = vunpack.c.h.b16 %v293
    %v5155 = vunpack.c.l.b16 %v294
    %v5156 = vunpack.c.h.b16 %v294
    %v5157 = vunpack.c.l.b16 %v295
    %v5158 = vunpack.c.h.b16 %v295
    %v5159 = vunpack.c.l.b16 %v296
    %v5160 = vunpack.c.h.b16 %v296
    %v5161 = vunpack.c.l.b16 %v297
    %v5162 = vunpack.c.h.b16 %v297
    %v5163 = vunpack.c.l.b16 %v298
    %v5164 = vunpack.c.h.b16 %v298
    %v5165 = vunpack.c.l.b16 %v299
    %v5166 = vunpack.c.h.b16 %v299
    %v5167 = vunpack.c.l.b16 %v300
    %v5168 = vunpack.c.h.b16 %v300
    %v5169 = vunpack.c.l.b16 %v301
    %v5170 = vunpack.c.h.b16 %v301
    %v5171 = vunpack.c.l.b16 %v302
    %v5172 = vunpack.c.h.b16 %v302
    %v5173 = vunpack.c.l.b16 %v303
    %v5174 = vunpack.c.h.b16 %v303
    %v5175 = vunpack.c.l.b16 %v304
    %v5176 = vunpack.c.h.b16 %v304
    %v5177 = vunpack.c.l.b16 %v305
    %v5178 = vunpack.c.h.b16 %v305
    %v5179 = vunpack.c.l.b16 %v306
    %v5180 = vunpack.c.h.b16 %v306
    %v5181 = vunpack.c.l.b16 %v307
    %v5182 = vunpack.c.h.b16 %v307
    %v5183 = vunpack.c.l.b16 %v308
    %v5184 = vunpack.c.h.b16 %v308
    %v5185 = vunpack.c.l.b16 %v309
    %v5186 = vunpack.c.h.b16 %v309
    %v5187 = vunpack.c.l.b16 %v310
    %v5188 = vunpack.c.h.b16 %v310
    %v5189 = vunpack.c.l.b16 %v311
    %v5190 = vunpack.c.h.b16 %v311
    %v5191 = vunpack.c.l.b16 %v312
    %v5192 = vunpack.c.h.b16 %v312
    %v5193 = vunpack.c.l.b16 %v313
    %v5194 = vunpack.c.h.b16 %v313
    %v5195 = vunpack.c.l.b16 %v314
    %v5196 = vunpack.c.h.b16 %v314
    %v5197 = vunpack.c.l.b16 %v315
    %v5198 = vunpack.c.h.b16 %v315
    %v5199 = vunpack.c.l.b16 %v316
    %v5200 = vunpack.c.h.b16 %v316
    %v5201 = vunpack.c.l.b16 %v317
    %v5202 = vunpack.c.h.b16 %v317
    %v5203 = vunpack.c.l.b16 %v318
    %v5204 = vunpack.c.h.b16 %v318
    %v5205 = vunpack.c.l.b16 %v319
    %v5206 = vunpack.c.h.b16 %v319
    %v5207 = vunpack.c.l.b16 %v320
    %v5208 = vunpack.c.h.b16 %v320
    %v5209 = vunpack.c.l.b16 %v321
    %v5210 = vunpack.c.h.b16 %v321
    %v5211 = vunpack.c.l.b16 %v322
    %v5212 = vunpack.c.h.b16 %v322
    %v5213 = vunpack.c.l.b16 %v323
    %v5214 = vunpack.c.h.b16 %v323
    %v5215 = vunpack.c.l.b16 %v324
    %v5216 = vunpack.c.h.b16 %v324
    %v5217 = vunpack.c.l.b16 %v325
    %v5218 = vunpack.c.h.b16 %v325
    %v5219 = vunpack.c.l.b16 %v326
    %v5220 = vunpack.c.h.b16 %v326
    %v5221 = vunpack.c.l.b16 %v327
    %v5222 = vunpack.c.h.b16 %v327
    %v5223 = vunpack.c.l.b16 %v328
    %v5224 = vunpack.c.h.b16 %v328
    %v5225 = vunpack.c.l.b16 %v329
    %v5226 = vunpack.c.h.b16 %v329
    %v5227 = vunpack.c.l.b16 %v330
    %v5228 = vunpack.c.h.b16 %v330
    %v5229 = vunpack.c.l.b16 %v331
    %v5230 = vunpack.c.h.b16 %v331
    %v5231 = vunpack.c.l.b16 %v332
    %v5232 = vunpack.c.h.b16 %v332
    %v5233 = vunpack.c.l.b16 %v333
    %v5234 = vunpack.c.h.b16 %v333
    %v5235 = vunpack.c.l.b16 %v334
    %v5236 = vunpack.c.h.b16 %v334
    %v5237 = vunpack.c.l.b16 %v335
    %v5238 = vunpack.c.h.b16 %v335
    %v5239 = vunpack.c.l.b16 %v336
    %v5240 = vunpack.c.h.b16 %v336
    %v5241 = vunpack.c.l.b16 %v337
    %v5242 = vunpack.c.h.b16 %v337
    %v5243 = vunpack.c.l.b16 %v338
    %v5244 = vunpack.c.h.b16 %v338
    %v5245 = vunpack.c.l.b16 %v339
    %v5246 = vunpack.c.h.b16 %v339
    %v5247 = vunpack.c.l.b16 %v340
    %v5248 = vunpack.c.h.b16 %v340
    %v5249 = vunpack.c.l.b16 %v341
    %v5250 = vunpack.c.h.b16 %v341
    %v5251 = vunpack.c.l.b16 %v342
    %v5252 = vunpack.c.h.b16 %v342
    %v5253 = vunpack.c.l.b16 %v343
    %v5254 = vunpack.c.h.b16 %v343
    %v5255 = vunpack.c.l.b16 %v344
    %v5256 = vunpack.c.h.b16 %v344
    %v5257 = vunpack.c.l.b16 %v345
    %v5258 = vunpack.c.h.b16 %v345
    %v5259 = vunpack.c.l.b16 %v346
    %v5260 = vunpack.c.h.b16 %v346
    %v5261 = vunpack.c.l.b16 %v347
    %v5262 = vunpack.c.h.b16 %v347
    %v5263 = vunpack.c.l.b16 %v348
    %v5264 = vunpack.c.h.b16 %v348
    %v5265 = vunpack.c.l.b16 %v349
    %v5266 = vunpack.c.h.b16 %v349
    %v5267 = vunpack.c.l.b16 %v350
    %v5268 = vunpack.c.h.b16 %v350
    %v5269 = vunpack.c.l.b16 %v351
    %v5270 = vunpack.c.h.b16 %v351
    %v5271 = vunpack.c.l.b16 %v352
    %v5272 = vunpack.c.h.b16 %v352
    %v5273 = vunpack.c.l.b16 %v353
    %v5274 = vunpack.c.h.b16 %v353
    %v5275 = vunpack.c.l.b16 %v354
    %v5276 = vunpack.c.h.b16 %v354
    %v5277 = vunpack.c.l.b16 %v355
    %v5278 = vunpack.c.h.b16 %v355
    %v5279 = vunpack.c.l.b16 %v356
    %v5280 = vunpack.c.h.b16 %v356
    %v5281 = vunpack.c.l.b16 %v357
    %v5282 = vunpack.c.h.b16 %v357
    %v5283 = vunpack.c.l.b16 %v358
    %v5284 = vunpack.c.h.b16 %v358
    %v5285 = vunpack.c.l.b16 %v359
    %v5286 = vunpack.c.h.b16 %v359
    %v5287 = vunpack.c.l.b16 %v360
    %v5288 = vunpack.c.h.b16 %v360
    %v5289 = vunpack.c.l.b16 %v361
    %v5290 = vunpack.c.h.b16 %v361
    %v5291 = vunpack.c.l.b16 %v362
    %v5292 = vunpack.c.h.b16 %v362
    %v5293 = vunpack.c.l.b16 %v363
    %v5294 = vunpack.c.h.b16 %v363
    %v5295 = vunpack.c.l.b16 %v364
    %v5296 = vunpack.c.h.b16 %v364
    %v5297 = vunpack.c.l.b16 %v365
    %v5298 = vunpack.c.h.b16 %v365
    %v5299 = vunpack.c.l.b16 %v366
    %v5300 = vunpack.c.h.b16 %v366
    %v5301 = vunpack.c.l.b16 %v367
    %v5302 = vunpack.c.h.b16 %v367
    %v5303 = vunpack.c.l.b16 %v368
    %v5304 = vunpack.c.h.b16 %v368
    %v5305 = vunpack.c.l.b16 %v369
    %v5306 = vunpack.c.h.b16 %v369
    %v5307 = vunpack.c.l.b16 %v370
    %v5308 = vunpack.c.h.b16 %v370
    %v5309 = vunpack.c.l.b16 %v371
    %v5310 = vunpack.c.h.b16 %v371
    %v5311 = vunpack.c.l.b16 %v372
    %v5312 = vunpack.c.h.b16 %v372
    %v5313 = vunpack.c.l.b16 %v373
    %v5314 = vunpack.c.h.b16 %v373
    %v5315 = vunpack.c.l.b16 %v374
    %v5316 = vunpack.c.h.b16 %v374
    %v5317 = vunpack.c.l.b16 %v375
    %v5318 = vunpack.c.h.b16 %v375
    %v5319 = vunpack.c.l.b16 %v376
    %v5320 = vunpack.c.h.b16 %v376
    %v5321 = vunpack.c.l.b16 %v377
    %v5322 = vunpack.c.h.b16 %v377
    %v5323 = vunpack.c.l.b16 %v378
    %v5324 = vunpack.c.h.b16 %v378
    %v5325 = vunpack.c.l.b16 %v379
    %v5326 = vunpack.c.h.b16 %v379
    %v5327 = vunpack.c.l.b16 %v380
    %v5328 = vunpack.c.h.b16 %v380
    %v5329 = vunpack.c.l.b16 %v381
    %v5330 = vunpack.c.h.b16 %v381
    %v5331 = vunpack.c.l.b16 %v382
    %v5332 = vunpack.c.h.b16 %v382
    %v5333 = vunpack.c.l.b16 %v383
    %v5334 = vunpack.c.h.b16 %v383
    %v5335 = vunpack.c.l.b16 %v384
    %v5336 = vunpack.c.h.b16 %v384
    %v5337 = vunpack.c.l.b16 %v385
    %v5338 = vunpack.c.h.b16 %v385
    %v5339 = vunpack.c.l.b16 %v386
    %v5340 = vunpack.c.h.b16 %v386
    %v5341 = vunpack.c.l.b16 %v387
    %v5342 = vunpack.c.h.b16 %v387
    %v5343 = vunpack.c.l.b16 %v388
    %v5344 = vunpack.c.h.b16 %v388
    %v5345 = vunpack.c.l.b16 %v389
    %v5346 = vunpack.c.h.b16 %v389
    %v5347 = vunpack.c.l.b16 %v390
    %v5348 = vunpack.c.h.b16 %v390
    %v5349 = vunpack.c.l.b16 %v391
    %v5350 = vunpack.c.h.b16 %v391
    %v5351 = vunpack.c.l.b16 %v392
    %v5352 = vunpack.c.h.b16 %v392
    %v5353 = vunpack.c.l.b16 %v393
    %v5354 = vunpack.c.h.b16 %v393
    %v5355 = vunpack.c.l.b16 %v394
    %v5356 = vunpack.c.h.b16 %v394
    %v5357 = vunpack.c.l.b16 %v395
    %v5358 = vunpack.c.h.b16 %v395
    %v5359 = vunpack.c.l.b16 %v396
    %v5360 = vunpack.c.h.b16 %v396
    %v5361 = vunpack.c.l.b16 %v397
    %v5362 = vunpack.c.h.b16 %v397
    %v5363 = vunpack.c.l.b16 %v398
    %v5364 = vunpack.c.h.b16 %v398
    %v5365 = vunpack.c.l.b16 %v399
    %v5366 = vunpack.c.h.b16 %v399
    %v5367 = vunpack.c.l.b16 %v400
    %v5368 = vunpack.c.h.b16 %v400
    %v5369 = vunpack.c.l.b16 %v401
    %v5370 = vunpack.c.h.b16 %v401
    %v5371 = vunpack.c.l.b16 %v402
    %v5372 = vunpack.c.h.b16 %v402
    %v5373 = vunpack.c.l.b16 %v403
    %v5374 = vunpack.c.h.b16 %v403
    %v5375 = vunpack.c.l.b16 %v404
    %v5376 = vunpack.c.h.b16 %v404
    %v5377 = vunpack.c.l.b16 %v405
    %v5378 = vunpack.c.h.b16 %v405
    %v5379 = vunpack.c.l.b16 %v406
    %v5380 = vunpack.c.h.b16 %v406
    %v5381 = vunpack.c.l.b16 %v407
    %v5382 = vunpack.c.h.b16 %v407
    %v5383 = vunpack.c.l.b16 %v408
    %v5384 = vunpack.c.h.b16 %v408
    %v5385 = vunpack.c.l.b16 %v409
    %v5386 = vunpack.c.h.b16 %v409
    %v5387 = vunpack.c.l.b16 %v410
    %v5388 = vunpack.c.h.b16 %v410
    %v5389 = vunpack.c.l.b16 %v411
    %v5390 = vunpack.c.h.b16 %v411
    %v5391 = vunpack.c.l.b16 %v412
    %v5392 = vunpack.c.h.b16 %v412
    %v5393 = vunpack.c.l.b16 %v413
    %v5394 = vunpack.c.h.b16 %v413
    %v5395 = vunpack.c.l.b16 %v414
    %v5396 = vunpack.c.h.b16 %v414
    %v5397 = vunpack.c.l.b16 %v415
    %v5398 = vunpack.c.h.b16 %v415
    %v5399 = vunpack.c.l.b16 %v416
    %v5400 = vunpack.c.h.b16 %v416
    %v5401 = vunpack.c.l.b16 %v417
    %v5402 = vunpack.c.h.b16 %v417
    %v5403 = vunpack.c.l.b16 %v418
    %v5404 = vunpack.c.h.b16 %v418
    %v5405 = vunpack.c.l.b16 %v419
    %v5406 = vunpack.c.h.b16 %v419
    %v5407 = vunpack.c.l.b16 %v420
    %v5408 = vunpack.c.h.b16 %v420
    %v5409 = vunpack.c.l.b16 %v421
    %v5410 = vunpack.c.h.b16 %v421
    %v5411 = vunpack.c.l.b16 %v422
    %v5412 = vunpack.c.h.b16 %v422
    %v5413 = vunpack.c.l.b16 %v423
    %v5414 = vunpack.c.h.b16 %v423
    %v5415 = vunpack.c.l.b16 %v424
    %v5416 = vunpack.c.h.b16 %v424
    %v5417 = vunpack.c.l.b16 %v425
    %v5418 = vunpack.c.h.b16 %v425
    %v5419 = vunpack.c.l.b16 %v426
    %v5420 = vunpack.c.h.b16 %v426
    %v5421 = vunpack.c.l.b16 %v427
    %v5422 = vunpack.c.h.b16 %v427
    %v5423 = vunpack.c.l.b16 %v428
    %v5424 = vunpack.c.h.b16 %v428
    %v5425 = vunpack.c.l.b16 %v429
    %v5426 = vunpack.c.h.b16 %v429
    %v5427 = vunpack.c.l.b16 %v430
    %v5428 = vunpack.c.h.b16 %v430
    %v5429 = vunpack.c.l.b16 %v431
    %v5430 = vunpack.c.h.b16 %v431
    %v5431 = vunpack.c.l.b16 %v432
    %v5432 = vunpack.c.h.b16 %v432
    %v5433 = vunpack.c.l.b16 %v433
    %v5434 = vunpack.c.h.b16 %v433
    %v5435 = vunpack.c.l.b16 %v434
    %v5436 = vunpack.c.h.b16 %v434
    %v5437 = vunpack.c.l.b16 %v435
    %v5438 = vunpack.c.h.b16 %v435
    %v5439 = vunpack.c.l.b16 %v436
    %v5440 = vunpack.c.h.b16 %v436
    %v5441 = vunpack.c.l.b16 %v437
    %v5442 = vunpack.c.h.b16 %v437
    %v5443 = vunpack.c.l.b16 %v438
    %v5444 = vunpack.c.h.b16 %v438
    %v5445 = vunpack.c.l.b16 %v439
    %v5446 = vunpack.c.h.b16 %v439
    %v5447 = vunpack.c.l.b16 %v440
    %v5448 = vunpack.c.h.b16 %v440
    %v5449 = vunpack.c.l.b16 %v441
    %v5450 = vunpack.c.h.b16 %v441
    %v5451 = vunpack.c.l.b16 %v442
    %v5452 = vunpack.c.h.b16 %v442
    %v5453 = vunpack.c.l.b16 %v443
    %v5454 = vunpack.c.h.b16 %v443
    %v5455 = vunpack.c.l.b16 %v444
    %v5456 = vunpack.c.h.b16 %v444
    %v5457 = vunpack.c.l.b16 %v445
    %v5458 = vunpack.c.h.b16 %v445
    %v5459 = vunpack.c.l.b16 %v446
    %v5460 = vunpack.c.h.b16 %v446
    %v5461 = vunpack.c.l.b16 %v447
    %v5462 = vunpack.c.h.b16 %v447
    %v5463 = vunpack.c.l.b16 %v448
    %v5464 = vunpack.c.h.b16 %v448
    %v5465 = vunpack.c.l.b16 %v449
    %v5466 = vunpack.c.h.b16 %v449
    %v5467 = vunpack.c.l.b16 %v450
    %v5468 = vunpack.c.h.b16 %v450
    %v5469 = vunpack.c.l.b16 %v451
    %v5470 = vunpack.c.h.b16 %v451
    %v5471 = vunpack.c.l.b16 %v452
    %v5472 = vunpack.c.h.b16 %v452
    %v5473 = vunpack.c.l.b16 %v453
    %v5474 = vunpack.c.h.b16 %v453
    %v5475 = vunpack.c.l.b16 %v454
    %v5476 = vunpack.c.h.b16 %v454
    %v5477 = vunpack.c.l.b16 %v455
    %v5478 = vunpack.c.h.b16 %v455
    %v5479 = vunpack.c.l.b16 %v456
    %v5480 = vunpack.c.h.b16 %v456
    %v5481 = vunpack.c.l.b16 %v457
    %v5482 = vunpack.c.h.b16 %v457
    %v5483 = vunpack.c.l.b16 %v458
    %v5484 = vunpack.c.h.b16 %v458
    %v5485 = vunpack.c.l.b16 %v459
    %v5486 = vunpack.c.h.b16 %v459
    %v5487 = vunpack.c.l.b16 %v460
    %v5488 = vunpack.c.h.b16 %v460
    %v5489 = vunpack.c.l.b16 %v461
    %v5490 = vunpack.c.h.b16 %v461
    %v5491 = vunpack.c.l.b16 %v462
    %v5492 = vunpack.c.h.b16 %v462
    %v5493 = vunpack.c.l.b16 %v463
    %v5494 = vunpack.c.h.b16 %v463
    %v5495 = vunpack.c.l.b16 %v464
    %v5496 = vunpack.c.h.b16 %v464
    %v5497 = vunpack.c.l.b16 %v465
    %v5498 = vunpack.c.h.b16 %v465
    %v5499 = vunpack.c.l.b16 %v466
    %v5500 = vunpack.c.h.b16 %v466
    %v5501 = vunpack.c.l.b16 %v467
    %v5502 = vunpack.c.h.b16 %v467
    %v5503 = vunpack.c.l.b16 %v468
    %v5504 = vunpack.c.h.b16 %v468
    %v5505 = vunpack.c.l.b16 %v469
    %v5506 = vunpack.c.h.b16 %v469
    %v5507 = vunpack.c.l.b16 %v470
    %v5508 = vunpack.c.h.b16 %v470
    %v5509 = vunpack.c.l.b16 %v471
    %v5510 = vunpack.c.h.b16 %v471
    %v5511 = vunpack.c.l.b16 %v472
    %v5512 = vunpack.c.h.b16 %v472
    %v5513 = vunpack.c.l.b16 %v473
    %v5514 = vunpack.c.h.b16 %v473
    %v5515 = vunpack.c.l.b16 %v474
    %v5516 = vunpack.c.h.b16 %v474
    %v5517 = vunpack.c.l.b16 %v475
    %v5518 = vunpack.c.h.b16 %v475
    %v5519 = vunpack.c.l.b16 %v476
    %v5520 = vunpack.c.h.b16 %v476
    %v5521 = vunpack.c.l.b16 %v477
    %v5522 = vunpack.c.h.b16 %v477
    %v5523 = vunpack.c.l.b16 %v478
    %v5524 = vunpack.c.h.b16 %v478
    %v5525 = vunpack.c.l.b16 %v479
    %v5526 = vunpack.c.h.b16 %v479
    %v5527 = vunpack.c.l.b16 %v480
    %v5528 = vunpack.c.h.b16 %v480
    %v5529 = vunpack.c.l.b16 %v481
    %v5530 = vunpack.c.h.b16 %v481
    %v5531 = vunpack.c.l.b16 %v482
    %v5532 = vunpack.c.h.b16 %v482
    %v5533 = vunpack.c.l.b16 %v483
    %v5534 = vunpack.c.h.b16 %v483
    %v5535 = vunpack.c.l.b16 %v484
    %v5536 = vunpack.c.h.b16 %v484
    %v5537 = vunpack.c.l.b16 %v485
    %v5538 = vunpack.c.h.b16 %v485
    %v5539 = vunpack.c.l.b16 %v486
    %v5540 = vunpack.c.h.b16 %v486
    %v5541 = vunpack.c.l.b16 %v487
    %v5542 = vunpack.c.h.b16 %v487
    %v5543 = vunpack.c.l.b16 %v488
    %v5544 = vunpack.c.h.b16 %v488
    %v5545 = vunpack.c.l.b16 %v489
    %v5546 = vunpack.c.h.b16 %v489
    %v5547 = vunpack.c.l.b16 %v490
    %v5548 = vunpack.c.h.b16 %v490
    %v5549 = vunpack.c.l.b16 %v491
    %v5550 = vunpack.c.h.b16 %v491
    %v5551 = vunpack.c.l.b16 %v492
    %v5552 = vunpack.c.h.b16 %v492
    %v5553 = vunpack.c.l.b16 %v493
    %v5554 = vunpack.c.h.b16 %v493
    %v5555 = vunpack.c.l.b16 %v494
    %v5556 = vunpack.c.h.b16 %v494
    %v5557 = vunpack.c.l.b16 %v495
    %v5558 = vunpack.c.h.b16 %v495
    %v5559 = vunpack.c.l.b16 %v496
    %v5560 = vunpack.c.h.b16 %v496
    %v5561 = vunpack.c.l.b16 %v497
    %v5562 = vunpack.c.h.b16 %v497
    %v5563 = vunpack.c.l.b16 %v498
    %v5564 = vunpack.c.h.b16 %v498
    %v5565 = vunpack.c.l.b16 %v499
    %v5566 = vunpack.c.h.b16 %v499
    %v5567 = vunpack.c.l.b16 %v500
    %v5568 = vunpack.c.h.b16 %v500
    %v5569 = vunpack.c.l.b16 %v501
    %v5570 = vunpack.c.h.b16 %v501
    %v5571 = vunpack.c.l.b16 %v502
    %v5572 = vunpack.c.h.b16 %v502
    %v5573 = vunpack.c.l.b16 %v503
    %v5574 = vunpack.c.h.b16 %v503
    %v5575 = vunpack.c.l.b16 %v504
    %v5576 = vunpack.c.h.b16 %v504
    %v5577 = vunpack.c.l.b16 %v505
    %v5578 = vunpack.c.h.b16 %v505
    %v5579 = vunpack.c.l.b16 %v506
    %v5580 = vunpack.c.h.b16 %v506
    %v5581 = vunpack.c.l.b16 %v507
    %v5582 = vunpack.c.h.b16 %v507
    %v5583 = vunpack.c.l.b16 %v508
    %v5584 = vunpack.c.h.b16 %v508
    %v5585 = vunpack.c.l.b16 %v509
    %v5586 = vunpack.c.h.b16 %v509
    %v5587 = vunpack.c.l.b16 %v510
    %v5588 = vunpack.c.h.b16 %v510
    %v5589 = vunpack.c.l.b16 %v511
    %v5590 = vunpack.c.h.b16 %v511
    %v5591 = vunpack.c.l.b16 %v512
    %v5592 = vunpack.c.h.b16 %v512
    %v5593 = vunpack.c.l.b16 %v513
    %v5594 = vunpack.c.h.b16 %v513
    %v5595 = vunpack.c.l.b16 %v514
    %v5596 = vunpack.c.h.b16 %v514
    %v5597 = vunpack.c.l.b16 %v515
    %v5598 = vunpack.c.h.b16 %v515
    %v5599 = vunpack.c.l.b16 %v516
    %v5600 = vunpack.c.h.b16 %v516
    %v5601 = vunpack.c.l.b16 %v517
    %v5602 = vunpack.c.h.b16 %v517
    %v5603 = vunpack.c.l.b16 %v518
    %v5604 = vunpack.c.h.b16 %v518
    %v5605 = vunpack.c.l.b16 %v519
    %v5606 = vunpack.c.h.b16 %v519
    %v5607 = vunpack.c.l.b16 %v520
    %v5608 = vunpack.c.h.b16 %v520
    %v5609 = vunpack.c.l.b16 %v521
    %v5610 = vunpack.c.h.b16 %v521
    %v5611 = vunpack.c.l.b16 %v522
    %v5612 = vunpack.c.h.b16 %v522
    %v5613 = vunpack.c.l.b16 %v523
    %v5614 = vunpack.c.h.b16 %v523
    %v5615 = vunpack.c.l.b16 %v524
    %v5616 = vunpack.c.h.b16 %v524
    %v5617 = vunpack.c.l.b16 %v525
    %v5618 = vunpack.c.h.b16 %v525
    %v5619 = vunpack.c.l.b16 %v526
    %v5620 = vunpack.c.h.b16 %v526
    %v5621 = vunpack.c.l.b16 %v527
    %v5622 = vunpack.c.h.b16 %v527
    %v5623 = vunpack.c.l.b16 %v528
    %v5624 = vunpack.c.h.b16 %v528
    %v5625 = vunpack.c.l.b16 %v529
    %v5626 = vunpack.c.h.b16 %v529
    %v5627 = vunpack.c.l.b16 %v530
    %v5628 = vunpack.c.h.b16 %v530
    %v5629 = vunpack.c.l.b16 %v531
    %v5630 = vunpack.c.h.b16 %v531
    %v5631 = vunpack.c.l.b16 %v532
    %v5632 = vunpack.c.h.b16 %v532
    %v5633 = vunpack.c.l.b16 %v533
    %v5634 = vunpack.c.h.b16 %v533
    %v5635 = vunpack.c.l.b16 %v534
    %v5636 = vunpack.c.h.b16 %v534
    %v5637 = vunpack.c.l.b16 %v535
    %v5638 = vunpack.c.h.b16 %v535
    %v5639 = vunpack.c.l.b16 %v536
    %v5640 = vunpack.c.h.b16 %v536
    %v5641 = vunpack.c.l.b16 %v537
    %v5642 = vunpack.c.h.b16 %v537
    %v5643 = vunpack.c.l.b16 %v538
    %v5644 = vunpack.c.h.b16 %v538
    %v5645 = vunpack.c.l.b16 %v539
    %v5646 = vunpack.c.h.b16 %v539
    %v5647 = vunpack.c.l.b16 %v540
    %v5648 = vunpack.c.h.b16 %v540
    %v5649 = vunpack.c.l.b16 %v541
    %v5650 = vunpack.c.h.b16 %v541
    %v5651 = vunpack.c.l.b16 %v542
    %v5652 = vunpack.c.h.b16 %v542
    %v5653 = vunpack.c.l.b16 %v543
    %v5654 = vunpack.c.h.b16 %v543
    %v5655 = vunpack.c.l.b16 %v544
    %v5656 = vunpack.c.h.b16 %v544
    %v5657 = vunpack.c.l.b16 %v545
    %v5658 = vunpack.c.h.b16 %v545
    %v5659 = vunpack.c.l.b16 %v546
    %v5660 = vunpack.c.h.b16 %v546
    %v5661 = vunpack.c.l.b16 %v547
    %v5662 = vunpack.c.h.b16 %v547
    %v5663 = vunpack.c.l.b16 %v548
    %v5664 = vunpack.c.h.b16 %v548
    %v5665 = vunpack.c.l.b16 %v549
    %v5666 = vunpack.c.h.b16 %v549
    %v5667 = vunpack.c.l.b16 %v550
    %v5668 = vunpack.c.h.b16 %v550
    %v5669 = vunpack.c.l.b16 %v551
    %v5670 = vunpack.c.h.b16 %v551
    %v5671 = vunpack.c.l.b16 %v552
    %v5672 = vunpack.c.h.b16 %v552
    %v5673 = vunpack.c.l.b16 %v553
    %v5674 = vunpack.c.h.b16 %v553
    %v5675 = vunpack.c.l.b16 %v554
    %v5676 = vunpack.c.h.b16 %v554
    %v5677 = vunpack.c.l.b16 %v555
    %v5678 = vunpack.c.h.b16 %v555
    %v5679 = vunpack.c.l.b16 %v556
    %v5680 = vunpack.c.h.b16 %v556
    %v5681 = vunpack.c.l.b16 %v557
    %v5682 = vunpack.c.h.b16 %v557
    %v5683 = vunpack.c.l.b16 %v558
    %v5684 = vunpack.c.h.b16 %v558
    %v5685 = vunpack.c.l.b16 %v559
    %v5686 = vunpack.c.h.b16 %v559
    %v5687 = vunpack.c.l.b16 %v560
    %v5688 = vunpack.c.h.b16 %v560
    %v5689 = vunpack.c.l.b16 %v561
    %v5690 = vunpack.c.h.b16 %v561
    %v5691 = vunpack.c.l.b16 %v562
    %v5692 = vunpack.c.h.b16 %v562
    %v5693 = vunpack.c.l.b16 %v563
    %v5694 = vunpack.c.h.b16 %v563
    %v5695 = vunpack.c.l.b16 %v564
    %v5696 = vunpack.c.h.b16 %v564
    %v5697 = vunpack.c.l.b16 %v565
    %v5698 = vunpack.c.h.b16 %v565
    %v5699 = vunpack.c.l.b16 %v566
    %v5700 = vunpack.c.h.b16 %v566
    %v5701 = vunpack.c.l.b16 %v567
    %v5702 = vunpack.c.h.b16 %v567
    %v5703 = vunpack.c.l.b16 %v568
    %v5704 = vunpack.c.h.b16 %v568
    %v5705 = vunpack.c.l.b16 %v569
    %v5706 = vunpack.c.h.b16 %v569
    %v5707 = vunpack.c.l.b16 %v570
    %v5708 = vunpack.c.h.b16 %v570
    %v5709 = vunpack.c.l.b16 %v571
    %v5710 = vunpack.c.h.b16 %v571
    %v5711 = vunpack.c.l.b16 %v572
    %v5712 = vunpack.c.h.b16 %v572
    %v5713 = vunpack.c.l.b16 %v573
    %v5714 = vunpack.c.h.b16 %v573
    %v5715 = vunpack.c.l.b16 %v574
    %v5716 = vunpack.c.h.b16 %v574
    %v5717 = vunpack.c.l.b16 %v575
    %v5718 = vunpack.c.h.b16 %v575
    %v5719 = vunpack.c.l.b16 %v576
    %v5720 = vunpack.c.h.b16 %v576
    %v5721 = vunpack.c.l.b16 %v577
    %v5722 = vunpack.c.h.b16 %v577
    %v5723 = vunpack.c.l.b16 %v578
    %v5724 = vunpack.c.h.b16 %v578
    %v5725 = vunpack.c.l.b16 %v579
    %v5726 = vunpack.c.h.b16 %v579
    %v5727 = vunpack.c.l.b16 %v580
    %v5728 = vunpack.c.h.b16 %v580
    %v5729 = vunpack.c.l.b16 %v581
    %v5730 = vunpack.c.h.b16 %v581
    %v5731 = vunpack.c.l.b16 %v582
    %v5732 = vunpack.c.h.b16 %v582
    %v5733 = vunpack.c.l.b16 %v583
    %v5734 = vunpack.c.h.b16 %v583
    %v5735 = vunpack.c.l.b16 %v584
    %v5736 = vunpack.c.h.b16 %v584
    %v5737 = vunpack.c.l.b16 %v585
    %v5738 = vunpack.c.h.b16 %v585
    %v5739 = vunpack.c.l.b16 %v586
    %v5740 = vunpack.c.h.b16 %v586
    %v5741 = vunpack.c.l.b16 %v587
    %v5742 = vunpack.c.h.b16 %v587
    %v5743 = vunpack.c.l.b16 %v588
    %v5744 = vunpack.c.h.b16 %v588
    %v5745 = vunpack.c.l.b16 %v589
    %v5746 = vunpack.c.h.b16 %v589
    %v5747 = vunpack.c.l.b16 %v590
    %v5748 = vunpack.c.h.b16 %v590
    %v5749 = vunpack.c.l.b16 %v591
    %v5750 = vunpack.c.h.b16 %v591
    %v5751 = vunpack.c.l.b16 %v592
    %v5752 = vunpack.c.h.b16 %v592
    %v5753 = vunpack.c.l.b16 %v593
    %v5754 = vunpack.c.h.b16 %v593
    %v5755 = vunpack.c.l.b16 %v594
    %v5756 = vunpack.c.h.b16 %v594
    %v5757 = vunpack.c.l.b16 %v595
    %v5758 = vunpack.c.h.b16 %v595
    %v5759 = vunpack.c.l.b16 %v596
    %v5760 = vunpack.c.h.b16 %v596
    %v5761 = vunpack.c.l.b16 %v597
    %v5762 = vunpack.c.h.b16 %v597
    %v5763 = vunpack.c.l.b16 %v598
    %v5764 = vunpack.c.h.b16 %v598
    %v5765 = vunpack.c.l.b16 %v599
    %v5766 = vunpack.c.h.b16 %v599
    %v5767 = vunpack.c.l.b16 %v600
    %v5768 = vunpack.c.h.b16 %v600
    %v5769 = vunpack.c.l.b16 %v601
    %v5770 = vunpack.c.h.b16 %v601
    %v5771 = vunpack.c.l.b16 %v602
    %v5772 = vunpack.c.h.b16 %v602
    %v5773 = vunpack.c.l.b16 %v603
    %v5774 = vunpack.c.h.b16 %v603
    %v5775 = vunpack.c.l.b16 %v604
    %v5776 = vunpack.c.h.b16 %v604
    %v5777 = vunpack.c.l.b16 %v605
    %v5778 = vunpack.c.h.b16 %v605
    %v5779 = vunpack.c.l.b16 %v606
    %v5780 = vunpack.c.h.b16 %v606
    %v5781 = vunpack.c.l.b16 %v607
    %v5782 = vunpack.c.h.b16 %v607
    %v5783 = vunpack.c.l.b16 %v608
    %v5784 = vunpack.c.h.b16 %v608
    %v5785 = vunpack.c.l.b16 %v609
    %v5786 = vunpack.c.h.b16 %v609
    %v5787 = vunpack.c.l.b16 %v610
    %v5788 = vunpack.c.h.b16 %v610
    %v5789 = vunpack.c.l.b16 %v611
    %v5790 = vunpack.c.h.b16 %v611
    %v5791 = vunpack.c.l.b16 %v612
    %v5792 = vunpack.c.h.b16 %v612
    %v5793 = vunpack.c.l.b16 %v613
    %v5794 = vunpack.c.h.b16 %v613
    %v5795 = vunpack.c.l.b16 %v614
    %v5796 = vunpack.c.h.b16 %v614
    %v5797 = vunpack.c.l.b16 %v615
    %v5798 = vunpack.c.h.b16 %v615
    %v5799 = vunpack.c.l.b16 %v616
    %v5800 = vunpack.c.h.b16 %v616
    %v5801 = vunpack.c.l.b16 %v617
    %v5802 = vunpack.c.h.b16 %v617
    %v5803 = vpack.c.b16 %v4811, %v4803
    %v5804 = vpack.c.b16 %v4812, %v4804
    %v5805 = vpack.c.b16 %v4813, %v4805
    %v5806 = vpack.c.b16 %v4814, %v4806
    %v5807 = vpack.c.b16 %v4815, %v4807
    %v5808 = vpack.c.b16 %v4816, %v4808
    %v5809 = vpack.c.b16 %v4817, %v4809
    %v5810 = vpack.c.b16 %v4818, %v4810
    %v5811 = vpack.c.b16 %v4827, %v4819
    %v5812 = vpack.c.b16 %v4828, %v4820
    %v5813 = vpack.c.b16 %v4829, %v4821
    %v5814 = vpack.c.b16 %v4830, %v4822
    %v5815 = vpack.c.b16 %v4831, %v4823
    %v5816 = vpack.c.b16 %v4832, %v4824
    %v5817 = vpack.c.b16 %v4833, %v4825
    %v5818 = vpack.c.b16 %v4834, %v4826
    %v5819 = vpack.c.b16 %v4843, %v4835
    %v5820 = vpack.c.b16 %v4844, %v4836
    %v5821 = vpack.c.b16 %v4845, %v4837
    %v5822 = vpack.c.b16 %v4846, %v4838
    %v5823 = vpack.c.b16 %v4847, %v4839
    %v5824 = vpack.c.b16 %v4848, %v4840
    %v5825 = vpack.c.b16 %v4849, %v4841
    %v5826 = vpack.c.b16 %v4850, %v4842
    %v5827 = vpack.c.b16 %v4859, %v4851
    %v5828 = vpack.c.b16 %v4860, %v4852
    %v5829 = vpack.c.b16 %v4861, %v4853
    %v5830 = vpack.c.b16 %v4862, %v4854
    %v5831 = vpack.c.b16 %v4863, %v4855
    %v5832 = vpack.c.b16 %v4864, %v4856
    %v5833 = vpack.c.b16 %v4865, %v4857
    %v5834 = vpack.c.b16 %v4866, %v4858
    %v5835 = vpack.c.b16 %v4875, %v4867
    %v5836 = vpack.c.b16 %v4876, %v4868
    %v5837 = vpack.c.b16 %v4877, %v4869
    %v5838 = vpack.c.b16 %v4878, %v4870
    %v5839 = vpack.c.b16 %v4879, %v4871
    %v5840 = vpack.c.b16 %v4880, %v4872
    %v5841 = vpack.c.b16 %v4881, %v4873
    %v5842 = vpack.c.b16 %v4882, %v4874
    %v5843 = vpack.c.b16 %v4891, %v4883
    %v5844 = vpack.c.b16 %v4892, %v4884
    %v5845 = vpack.c.b16 %v4893, %v4885
    %v5846 = vpack.c.b16 %v4894, %v4886
    %v5847 = vpack.c.b16 %v4895, %v4887
    %v5848 = vpack.c.b16 %v4896, %v4888
    %v5849 = vpack.c.b16 %v4897, %v4889
    %v5850 = vpack.c.b16 %v4898, %v4890
    %v5851 = vpack.c.b16 %v4907, %v4899
    %v5852 = vpack.c.b16 %v4908, %v4900
    %v5853 = vpack.c.b16 %v4909, %v4901
    %v5854 = vpack.c.b16 %v4910, %v4902
    %v5855 = vpack.c.b16 %v4911, %v4903
    %v5856 = vpack.c.b16 %v4912, %v4904
    %v5857 = vpack.c.b16 %v4913, %v4905
    %v5858 = vpack.c.b16 %v4914, %v4906
    %v5859 = vpack.c.b16 %v4923, %v4915
    %v5860 = vpack.c.b16 %v4924, %v4916
    %v5861 = vpack.c.b16 %v4925, %v4917
    %v5862 = vpack.c.b16 %v4926, %v4918
    %v5863 = vpack.c.b16 %v4927, %v4919
    %v5864 = vpack.c.b16 %v4928, %v4920
    %v5865 = vpack.c.b16 %v4929, %v4921
    %v5866 = vpack.c.b16 %v4930, %v4922
    %v5867 = vpack.c.b16 %v4939, %v4931
    %v5868 = vpack.c.b16 %v4940, %v4932
    %v5869 = vpack.c.b16 %v4941, %v4933
    %v5870 = vpack.c.b16 %v4942, %v4934
    %v5871 = vpack.c.b16 %v4943, %v4935
    %v5872 = vpack.c.b16 %v4944, %v4936
    %v5873 = vpack.c.b16 %v4945, %v4937
    %v5874 = vpack.c.b16 %v4946, %v4938
    %v5875 = vpack.c.b16 %v4955, %v4947
    %v5876 = vpack.c.b16 %v4956, %v4948
    %v5877 = vpack.c.b16 %v4957, %v4949
    %v5878 = vpack.c.b16 %v4958, %v4950
    %v5879 = vpack.c.b16 %v4959, %v4951
    %v5880 = vpack.c.b16 %v4960, %v4952
    %v5881 = vpack.c.b16 %v4961, %v4953
    %v5882 = vpack.c.b16 %v4962, %v4954
    %v5883 = vpack.c.b16 %v4971, %v4963
    %v5884 = vpack.c.b16 %v4972, %v4964
    %v5885 = vpack.c.b16 %v4973, %v4965
    %v5886 = vpack.c.b16 %v4974, %v4966
    %v5887 = vpack.c.b16 %v4975, %v4967
    %v5888 = vpack.c.b16 %v4976, %v4968
    %v5889 = vpack.c.b16 %v4977, %v4969
    %v5890 = vpack.c.b16 %v4978, %v4970
    %v5891 = vpack.c.b16 %v4987, %v4979
    %v5892 = vpack.c.b16 %v4988, %v4980
    %v5893 = vpack.c.b16 %v4989, %v4981
    %v5894 = vpack.c.b16 %v4990, %v4982
    %v5895 = vpack.c.b16 %v4991, %v4983
    %v5896 = vpack.c.b16 %v4992, %v4984
    %v5897 = vpack.c.b16 %v4993, %v4985
    %v5898 = vpack.c.b16 %v4994, %v4986
    %v5899 = vpack.c.b16 %v5003, %v4995
    %v5900 = vpack.c.b16 %v5004, %v4996
    %v5901 = vpack.c.b16 %v5005, %v4997
    %v5902 = vpack.c.b16 %v5006, %v4998
    %v5903 = vpack.c.b16 %v5007, %v4999
    %v5904 = vpack.c.b16 %v5008, %v5000
    %v5905 = vpack.c.b16 %v5009, %v5001
    %v5906 = vpack.c.b16 %v5010, %v5002
    %v5907 = vpack.c.b16 %v5019, %v5011
    %v5908 = vpack.c.b16 %v5020, %v5012
    %v5909 = vpack.c.b16 %v5021, %v5013
    %v5910 = vpack.c.b16 %v5022, %v5014
    %v5911 = vpack.c.b16 %v5023, %v5015
    %v5912 = vpack.c.b16 %v5024, %v5016
    %v5913 = vpack.c.b16 %v5025, %v5017
    %v5914 = vpack.c.b16 %v5026, %v5018
    %v5915 = vpack.c.b16 %v5035, %v5027
    %v5916 = vpack.c.b16 %v5036, %v5028
    %v5917 = vpack.c.b16 %v5037, %v5029
    %v5918 = vpack.c.b16 %v5038, %v5030
    %v5919 = vpack.c.b16 %v5039, %v5031
    %v5920 = vpack.c.b16 %v5040, %v5032
    %v5921 = vpack.c.b16 %v5041, %v5033
    %v5922 = vpack.c.b16 %v5042, %v5034
    %v5923 = vpack.c.b16 %v5051, %v5043
    %v5924 = vpack.c.b16 %v5052, %v5044
    %v5925 = vpack.c.b16 %v5053, %v5045
    %v5926 = vpack.c.b16 %v5054, %v5046
    %v5927 = vpack.c.b16 %v5055, %v5047
    %v5928 = vpack.c.b16 %v5056, %v5048
    %v5929 = vpack.c.b16 %v5057, %v5049
    %v5930 = vpack.c.b16 %v5058, %v5050
    %v5931 = vpack.c.b16 %v5067, %v5059
    %v5932 = vpack.c.b16 %v5068, %v5060
    %v5933 = vpack.c.b16 %v5069, %v5061
    %v5934 = vpack.c.b16 %v5070, %v5062
    %v5935 = vpack.c.b16 %v5071, %v5063
    %v5936 = vpack.c.b16 %v5072, %v5064
    %v5937 = vpack.c.b16 %v5073, %v5065
    %v5938 = vpack.c.b16 %v5074, %v5066
    %v5939 = vpack.c.b16 %v5083, %v5075
    %v5940 = vpack.c.b16 %v5084, %v5076
    %v5941 = vpack.c.b16 %v5085, %v5077
    %v5942 = vpack.c.b16 %v5086, %v5078
    %v5943 = vpack.c.b16 %v5087, %v5079
    %v5944 = vpack.c.b16 %v5088, %v5080
    %v5945 = vpack.c.b16 %v5089, %v5081
    %v5946 = vpack.c.b16 %v5090, %v5082
    %v5947 = vpack.c.b16 %v5099, %v5091
    %v5948 = vpack.c.b16 %v5100, %v5092
    %v5949 = vpack.c.b16 %v5101, %v5093
    %v5950 = vpack.c.b16 %v5102, %v5094
    %v5951 = vpack.c.b16 %v5103, %v5095
    %v5952 = vpack.c.b16 %v5104, %v5096
    %v5953 = vpack.c.b16 %v5105, %v5097
    %v5954 = vpack.c.b16 %v5106, %v5098
    %v5955 = vpack.c.b16 %v5115, %v5107
    %v5956 = vpack.c.b16 %v5116, %v5108
    %v5957 = vpack.c.b16 %v5117, %v5109
    %v5958 = vpack.c.b16 %v5118, %v5110
    %v5959 = vpack.c.b16 %v5119, %v5111
    %v5960 = vpack.c.b16 %v5120, %v5112
    %v5961 = vpack.c.b16 %v5121, %v5113
    %v5962 = vpack.c.b16 %v5122, %v5114
    %v5963 = vpack.c.b16 %v5131, %v5123
    %v5964 = vpack.c.b16 %v5132, %v5124
    %v5965 = vpack.c.b16 %v5133, %v5125
    %v5966 = vpack.c.b16 %v5134, %v5126
    %v5967 = vpack.c.b16 %v5135, %v5127
    %v5968 = vpack.c.b16 %v5136, %v5128
    %v5969 = vpack.c.b16 %v5137, %v5129
    %v5970 = vpack.c.b16 %v5138, %v5130
    %v5971 = vpack.c.b16 %v5147, %v5139
    %v5972 = vpack.c.b16 %v5148, %v5140
    %v5973 = vpack.c.b16 %v5149, %v5141
    %v5974 = vpack.c.b16 %v5150, %v5142
    %v5975 = vpack.c.b16 %v5151, %v5143
    %v5976 = vpack.c.b16 %v5152, %v5144
    %v5977 = vpack.c.b16 %v5153, %v5145
    %v5978 = vpack.c.b16 %v5154, %v5146
    %v5979 = vpack.c.b16 %v5163, %v5155
    %v5980 = vpack.c.b16 %v5164, %v5156
    %v5981 = vpack.c.b16 %v5165, %v5157
    %v5982 = vpack.c.b16 %v5166, %v5158
    %v5983 = vpack.c.b16 %v5167, %v5159
    %v5984 = vpack.c.b16 %v5168, %v5160
    %v5985 = vpack.c.b16 %v5169, %v5161
    %v5986 = vpack.c.b16 %v5170, %v5162
    %v5987 = vpack.c.b16 %v5179, %v5171
    %v5988 = vpack.c.b16 %v5180, %v5172
    %v5989 = vpack.c.b16 %v5181, %v5173
    %v5990 = vpack.c.b16 %v5182, %v5174
    %v5991 = vpack.c.b16 %v5183, %v5175
    %v5992 = vpack.c.b16 %v5184, %v5176
    %v5993 = vpack.c.b16 %v5185, %v5177
    %v5994 = vpack.c.b16 %v5186, %v5178
    %v5995 = vpack.c.b16 %v5195, %v5187
    %v5996 = vpack.c.b16 %v5196, %v5188
    %v5997 = vpack.c.b16 %v5197, %v5189
    %v5998 = vpack.c.b16 %v5198, %v5190
    %v5999 = vpack.c.b16 %v5199, %v5191
    %v6000 = vpack.c.b16 %v5200, %v5192
    %v6001 = vpack.c.b16 %v5201, %v5193
    %v6002 = vpack.c.b16 %v5202, %v5194
    %v6003 = vpack.c.b16 %v5211, %v5203
    %v6004 = vpack.c.b16 %v5212, %v5204
    %v6005 = vpack.c.b16 %v5213, %v5205
    %v6006 = vpack.c.b16 %v5214, %v5206
    %v6007 = vpack.c.b16 %v5215, %v5207
    %v6008 = vpack.c.b16 %v5216, %v5208
    %v6009 = vpack.c.b16 %v5217, %v5209
    %v6010 = vpack.c.b16 %v5218, %v5210
    %v6011 = vpack.c.b16 %v5227, %v5219
    %v6012 = vpack.c.b16 %v5228, %v5220
    %v6013 = vpack.c.b16 %v5229, %v5221
    %v6014 = vpack.c.b16 %v5230, %v5222
    %v6015 = vpack.c.b16 %v5231, %v5223
    %v6016 = vpack.c.b16 %v5232, %v5224
    %v6017 = vpack.c.b16 %v5233, %v5225
    %v6018 = vpack.c.b16 %v5234, %v5226
    %v6019 = vpack.c.b16 %v5243, %v5235
    %v6020 = vpack.c.b16 %v5244, %v5236
    %v6021 = vpack.c.b16 %v5245, %v5237
    %v6022 = vpack.c.b16 %v5246, %v5238
    %v6023 = vpack.c.b16 %v5247, %v5239
    %v6024 = vpack.c.b16 %v5248, %v5240
    %v6025 = vpack.c.b16 %v5249, %v5241
    %v6026 = vpack.c.b16 %v5250, %v5242
    %v6027 = vpack.c.b16 %v5259, %v5251
    %v6028 = vpack.c.b16 %v5260, %v5252
    %v6029 = vpack.c.b16 %v5261, %v5253
    %v6030 = vpack.c.b16 %v5262, %v5254
    %v6031 = vpack.c.b16 %v5263, %v5255
    %v6032 = vpack.c.b16 %v5264, %v5256
    %v6033 = vpack.c.b16 %v5265, %v5257
    %v6034 = vpack.c.b16 %v5266, %v5258
    %v6035 = vpack.c.b16 %v5275, %v5267
    %v6036 = vpack.c.b16 %v5276, %v5268
    %v6037 = vpack.c.b16 %v5277, %v5269
    %v6038 = vpack.c.b16 %v5278, %v5270
    %v6039 = vpack.c.b16 %v5279, %v5271
    %v6040 = vpack.c.b16 %v5280, %v5272
    %v6041 = vpack.c.b16 %v5281, %v5273
    %v6042 = vpack.c.b16 %v5282, %v5274
    %v6043 = vpack.c.b16 %v5291, %v5283
    %v6044 = vpack.c.b16 %v5292, %v5284
    %v6045 = vpack.c.b16 %v5293, %v5285
    %v6046 = vpack.c.b16 %v5294, %v5286
    %v6047 = vpack.c.b16 %v5295, %v5287
    %v6048 = vpack.c.b16 %v5296, %v5288
    %v6049 = vpack.c.b16 %v5297, %v5289
    %v6050 = vpack.c.b16 %v5298, %v5290
    %v6051 = vpack.c.b16 %v5307, %v5299
    %v6052 = vpack.c.b16 %v5308, %v5300
    %v6053 = vpack.c.b16 %v5309, %v5301
    %v6054 = vpack.c.b16 %v5310, %v5302
    %v6055 = vpack.c.b16 %v5311, %v5303
    %v6056 = vpack.c.b16 %v5312, %v5304
    %v6057 = vpack.c.b16 %v5313, %v5305
    %v6058 = vpack.c.b16 %v5314, %v5306
    %v6059 = vpack.c.b16 %v5323, %v5315
    %v6060 = vpack.c.b16 %v5324, %v5316
    %v6061 = vpack.c.b16 %v5325, %v5317
    %v6062 = vpack.c.b16 %v5326, %v5318
    %v6063 = vpack.c.b16 %v5327, %v5319
    %v6064 = vpack.c.b16 %v5328, %v5320
    %v6065 = vpack.c.b16 %v5329, %v5321
    %v6066 = vpack.c.b16 %v5330, %v5322
    %v6067 = vpack.c.b16 %v5339, %v5331
    %v6068 = vpack.c.b16 %v5340, %v5332
    %v6069 = vpack.c.b16 %v5341, %v5333
    %v6070 = vpack.c.b16 %v5342, %v5334
    %v6071 = vpack.c.b16 %v5343, %v5335
    %v6072 = vpack.c.b16 %v5344, %v5336
    %v6073 = vpack.c.b16 %v5345, %v5337
    %v6074 = vpack.c.b16 %v5346, %v5338
    %v6075 = vpack.c.b16 %v5355, %v5347
    %v6076 = vpack.c.b16 %v5356, %v5348
    %v6077 = vpack.c.b16 %v5357, %v5349
    %v6078 = vpack.c.b16 %v5358, %v5350
    %v6079 = vpack.c.b16 %v5359, %v5351
    %v6080 = vpack.c.b16 %v5360, %v5352
    %v6081 = vpack.c.b16 %v5361, %v5353
    %v6082 = vpack.c.b16 %v5362, %v5354
    %v6083 = vpack.c.b16 %v5371, %v5363
    %v6084 = vpack.c.b16 %v5372, %v5364
    %v6085 = vpack.c.b16 %v5373, %v5365
    %v6086 = vpack.c.b16 %v5374, %v5366
    %v6087 = vpack.c.b16 %v5375, %v5367
    %v6088 = vpack.c.b16 %v5376, %v5368
    %v6089 = vpack.c.b16 %v5377, %v5369
    %v6090 = vpack.c.b16 %v5378, %v5370
    %v6091 = vpack.c.b16 %v5387, %v5379
    %v6092 = vpack.c.b16 %v5388, %v5380
    %v6093 = vpack.c.b16 %v5389, %v5381
    %v6094 = vpack.c.b16 %v5390, %v5382
    %v6095 = vpack.c.b16 %v5391, %v5383
    %v6096 = vpack.c.b16 %v5392, %v5384
    %v6097 = vpack.c.b16 %v5393, %v5385
    %v6098 = vpack.c.b16 %v5394, %v5386
    %v6099 = vpack.c.b16 %v5403, %v5395
    %v6100 = vpack.c.b16 %v5404, %v5396
    %v6101 = vpack.c.b16 %v5405, %v5397
    %v6102 = vpack.c.b16 %v5406, %v5398
    %v6103 = vpack.c.b16 %v5407, %v5399
    %v6104 = vpack.c.b16 %v5408, %v5400
    %v6105 = vpack.c.b16 %v5409, %v5401
    %v6106 = vpack.c.b16 %v5410, %v5402
    %v6107 = vpack.c.b16 %v5419, %v5411
    %v6108 = vpack.c.b16 %v5420, %v5412
    %v6109 = vpack.c.b16 %v5421, %v5413
    %v6110 = vpack.c.b16 %v5422, %v5414
    %v6111 = vpack.c.b16 %v5423, %v5415
    %v6112 = vpack.c.b16 %v5424, %v5416
    %v6113 = vpack.c.b16 %v5425, %v5417
    %v6114 = vpack.c.b16 %v5426, %v5418
    %v6115 = vpack.c.b16 %v5435, %v5427
    %v6116 = vpack.c.b16 %v5436, %v5428
    %v6117 = vpack.c.b16 %v5437, %v5429
    %v6118 = vpack.c.b16 %v5438, %v5430
    %v6119 = vpack.c.b16 %v5439, %v5431
    %v6120 = vpack.c.b16 %v5440, %v5432
    %v6121 = vpack.c.b16 %v5441, %v5433
    %v6122 = vpack.c.b16 %v5442, %v5434
    %v6123 = vpack.c.b16 %v5451, %v5443
    %v6124 = vpack.c.b16 %v5452, %v5444
    %v6125 = vpack.c.b16 %v5453, %v5445
    %v6126 = vpack.c.b16 %v5454, %v5446
    %v6127 = vpack.c.b16 %v5455, %v5447
    %v6128 = vpack.c.b16 %v5456, %v5448
    %v6129 = vpack.c.b16 %v5457, %v5449
    %v6130 = vpack.c.b16 %v5458, %v5450
    %v6131 = vpack.c.b16 %v5467, %v5459
    %v6132 = vpack.c.b16 %v5468, %v5460
    %v6133 = vpack.c.b16 %v5469, %v5461
    %v6134 = vpack.c.b16 %v5470, %v5462
    %v6135 = vpack.c.b16 %v5471, %v5463
    %v6136 = vpack.c.b16 %v5472, %v5464
    %v6137 = vpack.c.b16 %v5473, %v5465
    %v6138 = vpack.c.b16 %v5474, %v5466
    %v6139 = vpack.c.b16 %v5483, %v5475
    %v6140 = vpack.c.b16 %v5484, %v5476
    %v6141 = vpack.c.b16 %v5485, %v5477
    %v6142 = vpack.c.b16 %v5486, %v5478
    %v6143 = vpack.c.b16 %v5487, %v5479
    %v6144 = vpack.c.b16 %v5488, %v5480
    %v6145 = vpack.c.b16 %v5489, %v5481
    %v6146 = vpack.c.b16 %v5490, %v5482
    %v6147 = vpack.c.b16 %v5499, %v5491
    %v6148 = vpack.c.b16 %v5500, %v5492
    %v6149 = vpack.c.b16 %v5501, %v5493
    %v6150 = vpack.c.b16 %v5502, %v5494
    %v6151 = vpack.c.b16 %v5503, %v5495
    %v6152 = vpack.c.b16 %v5504, %v5496
    %v6153 = vpack.c.b16 %v5505, %v5497
    %v6154 = vpack.c.b16 %v5506, %v5498
    %v6155 = vpack.c.b16 %v5515, %v5507
    %v6156 = vpack.c.b16 %v5516, %v5508
    %v6157 = vpack.c.b16 %v5517, %v5509
    %v6158 = vpack.c.b16 %v5518, %v5510
    %v6159 = vpack.c.b16 %v5519, %v5511
    %v6160 = vpack.c.b16 %v5520, %v5512
    %v6161 = vpack.c.b16 %v5521, %v5513
    %v6162 = vpack.c.b16 %v5522, %v5514
    %v6163 = vpack.c.b16 %v5531, %v5523
    %v6164 = vpack.c.b16 %v5532, %v5524
    %v6165 = vpack.c.b16 %v5533, %v5525
    %v6166 = vpack.c.b16 %v5534, %v5526
    %v6167 = vpack.c.b16 %v5535, %v5527
    %v6168 = vpack.c.b16 %v5536, %v5528
    %v6169 = vpack.c.b16 %v5537, %v5529
    %v6170 = vpack.c.b16 %v5538, %v5530
    %v6171 = vpack.c.b16 %v5547, %v5539
    %v6172 = vpack.c.b16 %v5548, %v5540
    %v6173 = vpack.c.b16 %v5549, %v5541
    %v6174 = vpack.c.b16 %v5550, %v5542
    %v6175 = vpack.c.b16 %v5551, %v5543
    %v6176 = vpack.c.b16 %v5552, %v5544
    %v6177 = vpack.c.b16 %v5553, %v5545
    %v6178 = vpack.c.b16 %v5554, %v5546
    %v6179 = vpack.c.b16 %v5563, %v5555
    %v6180 = vpack.c.b16 %v5564, %v5556
    %v6181 = vpack.c.b16 %v5565, %v5557
    %v6182 = vpack.c.b16 %v5566, %v5558
    %v6183 = vpack.c.b16 %v5567, %v5559
    %v6184 = vpack.c.b16 %v5568, %v5560
    %v6185 = vpack.c.b16 %v5569, %v5561
    %v6186 = vpack.c.b16 %v5570, %v5562
    %v6187 = vpack.c.b16 %v5579, %v5571
    %v6188 = vpack.c.b16 %v5580, %v5572
    %v6189 = vpack.c.b16 %v5581, %v5573
    %v6190 = vpack.c.b16 %v5582, %v5574
    %v6191 = vpack.c.b16 %v5583, %v5575
    %v6192 = vpack.c.b16 %v5584, %v5576
    %v6193 = vpack.c.b16 %v5585, %v5577
    %v6194 = vpack.c.b16 %v5586, %v5578
    %v6195 = vpack.c.b16 %v5595, %v5587
    %v6196 = vpack.c.b16 %v5596, %v5588
    %v6197 = vpack.c.b16 %v5597, %v5589
    %v6198 = vpack.c.b16 %v5598, %v5590
    %v6199 = vpack.c.b16 %v5599, %v5591
    %v6200 = vpack.c.b16 %v5600, %v5592
    %v6201 = vpack.c.b16 %v5601, %v5593
    %v6202 = vpack.c.b16 %v5602, %v5594
    %v6203 = vpack.c.b16 %v5611, %v5603
    %v6204 = vpack.c.b16 %v5612, %v5604
    %v6205 = vpack.c.b16 %v5613, %v5605
    %v6206 = vpack.c.b16 %v5614, %v5606
    %v6207 = vpack.c.b16 %v5615, %v5607
    %v6208 = vpack.c.b16 %v5616, %v5608
    %v6209 = vpack.c.b16 %v5617, %v5609
    %v6210 = vpack.c.b16 %v5618, %v5610
    %v6211 = vpack.c.b16 %v5627, %v5619
    %v6212 = vpack.c.b16 %v5628, %v5620
    %v6213 = vpack.c.b16 %v5629, %v5621
    %v6214 = vpack.c.b16 %v5630, %v5622
    %v6215 = vpack.c.b16 %v5631, %v5623
    %v6216 = vpack.c.b16 %v5632, %v5624
    %v6217 = vpack.c.b16 %v5633, %v5625
    %v6218 = vpack.c.b16 %v5634, %v5626
    %v6219 = vpack.c.b16 %v5643, %v5635
    %v6220 = vpack.c.b16 %v5644, %v5636
    %v6221 = vpack.c.b16 %v5645, %v5637
    %v6222 = vpack.c.b16 %v5646, %v5638
    %v6223 = vpack.c.b16 %v5647, %v5639
    %v6224 = vpack.c.b16 %v5648, %v5640
    %v6225 = vpack.c.b16 %v5649, %v5641
    %v6226 = vpack.c.b16 %v5650, %v5642
    %v6227 = vpack.c.b16 %v5659, %v5651
    %v6228 = vpack.c.b16 %v5660, %v5652
    %v6229 = vpack.c.b16 %v5661, %v5653
    %v6230 = vpack.c.b16 %v5662, %v5654
    %v6231 = vpack.c.b16 %v5663, %v5655
    %v6232 = vpack.c.b16 %v5664, %v5656
    %v6233 = vpack.c.b16 %v5665, %v5657
    %v6234 = vpack.c.b16 %v5666, %v5658
    %v6235 = vpack.c.b16 %v5675, %v5667
    %v6236 = vpack.c.b16 %v5676, %v5668
    %v6237 = vpack.c.b16 %v5677, %v5669
    %v6238 = vpack.c.b16 %v5678, %v5670
    %v6239 = vpack.c.b16 %v5679, %v5671
    %v6240 = vpack.c.b16 %v5680, %v5672
    %v6241 = vpack.c.b16 %v5681, %v5673
    %v6242 = vpack.c.b16 %v5682, %v5674
    %v6243 = vpack.c.b16 %v5691, %v5683
    %v6244 = vpack.c.b16 %v5692, %v5684
    %v6245 = vpack.c.b16 %v5693, %v5685
    %v6246 = vpack.c.b16 %v5694, %v5686
    %v6247 = vpack.c.b16 %v5695, %v5687
    %v6248 = vpack.c.b16 %v5696, %v5688
    %v6249 = vpack.c.b16 %v5697, %v5689
    %v6250 = vpack.c.b16 %v5698, %v5690
    %v6251 = vpack.c.b16 %v5707, %v5699
    %v6252 = vpack.c.b16 %v5708, %v5700
    %v6253 = vpack.c.b16 %v5709, %v5701
    %v6254 = vpack.c.b16 %v5710, %v5702
    %v6255 = vpack.c.b16 %v5711, %v5703
    %v6256 = vpack.c.b16 %v5712, %v5704
    %v6257 = vpack.c.b16 %v5713, %v5705
    %v6258 = vpack.c.b16 %v5714, %v5706
    %v6259 = vpack.c.b16 %v5723, %v5715
    %v6260 = vpack.c.b16 %v5724, %v5716
    %v6261 = vpack.c.b16 %v5725, %v5717
    %v6262 = vpack.c.b16 %v5726, %v5718
    %v6263 = vpack.c.b16 %v5727, %v5719
    %v6264 = vpack.c.b16 %v5728, %v5720
    %v6265 = vpack.c.b16 %v5729, %v5721
    %v6266 = vpack.c.b16 %v5730, %v5722
    %v6267 = vpack.c.b16 %v5739, %v5731
    %v6268 = vpack.c.b16 %v5740, %v5732
    %v6269 = vpack.c.b16 %v5741, %v5733
    %v6270 = vpack.c.b16 %v5742, %v5734
    %v6271 = vpack.c.b16 %v5743, %v5735
    %v6272 = vpack.c.b16 %v5744, %v5736
    %v6273 = vpack.c.b16 %v5745, %v5737
    %v6274 = vpack.c.b16 %v5746, %v5738
    %v6275 = vpack.c.b16 %v5755, %v5747
    %v6276 = vpack.c.b16 %v5756, %v5748
    %v6277 = vpack.c.b16 %v5757, %v5749
    %v6278 = vpack.c.b16 %v5758, %v5750
    %v6279 = vpack.c.b16 %v5759, %v5751
    %v6280 = vpack.c.b16 %v5760, %v5752
    %v6281 = vpack.c.b16 %v5761, %v5753
    %v6282 = vpack.c.b16 %v5762, %v5754
    %v6283 = vpack.c.b16 %v5771, %v5763
    %v6284 = vpack.c.b16 %v5772, %v5764
    %v6285 = vpack.c.b16 %v5773, %v5765
    %v6286 = vpack.c.b16 %v5774, %v5766
    %v6287 = vpack.c.b16 %v5775, %v5767
    %v6288 = vpack.c.b16 %v5776, %v5768
    %v6289 = vpack.c.b16 %v5777, %v5769
    %v6290 = vpack.c.b16 %v5778, %v5770
    %v6291 = vpack.c.b16 %v5787, %v5779
    %v6292 = vpack.c.b16 %v5788, %v5780
    %v6293 = vpack.c.b16 %v5789, %v5781
    %v6294 = vpack.c.b16 %v5790, %v5782
    %v6295 = vpack.c.b16 %v5791, %v5783
    %v6296 = vpack.c.b16 %v5792, %v5784
    %v6297 = vpack.c.b16 %v5793, %v5785
    %v6298 = vpack.c.b16 %v5794, %v5786
    %v6299 = vpack.c.b16 %v5795, %v5795
    %v6300 = vpack.c.b16 %v5796, %v5796
    %v6301 = vpack.c.b16 %v5797, %v5797
    %v6302 = vpack.c.b16 %v5798, %v5798
    %v6303 = vpack.c.b16 %v5799, %v5799
    %v6304 = vpack.c.b16 %v5800, %v5800
    %v6305 = vpack.c.b16 %v5801, %v5801
    %v6306 = vpack.c.b16 %v5802, %v5802
    %v6804 = vsel %vm3618, %v101, 0
    %v6807 = vsel %vm3622, %v6299, 0
    %v6810 = vsel %vm3622, %v6300, 0
    %v6813 = vsel %vm3622, %v6301, 0
    %v6816 = vsel %vm3622, %v6302, 0
    %v6819 = vsel %vm3622, %v6303, 0
    %v6822 = vsel %vm3622, %v6304, 0
    %v6825 = vsel %vm3622, %v6305, 0
    %v6828 = vsel %vm3622, %v6306, 0
    %6830 = vmatprep.subr.bf16.mxu0 %v5860
    %6831 = vmatpush1.bf16.msra.mxu0 %v5859
    %6832 = vmatprep.subr.bf16.mxu0 %v5852
    %6833 = vmatpush1.bf16.msra.mxu0 %v5851
    %6834 = vmatprep.subr.bf16.mxu0 %v5844
    %6835 = vmatpush1.bf16.msra.mxu0 %v5843
    %6836 = vmatprep.subr.bf16.mxu0 %v5836
    %6837 = vmatpush1.bf16.msra.mxu0 %v5835
    %6838 = vmatprep.subr.bf16.mxu0 %v5828
    %6839 = vmatpush1.bf16.msra.mxu0 %v5827
    %6840 = vmatprep.subr.bf16.mxu0 %v5820
    %6841 = vmatpush1.bf16.msra.mxu0 %v5819
    %6842 = vmatprep.subr.bf16.mxu0 %v5812
    %6843 = vmatpush1.bf16.msra.mxu0 %v5811
    %6844 = vmatprep.subr.bf16.mxu0 %v5804
    %6845 = vmatpush1.bf16.msra.mxu0 %v5803
    %6846 = vmatprep.subr.bf16.mxu0 %v5924
    %6847 = vmatpush2.bf16.msra.mxu0 %v5923
    %6848 = vmatprep.subr.bf16.mxu0 %v5916
    %6849 = vmatpush2.bf16.msra.mxu0 %v5915
    %6850 = vmatprep.subr.bf16.mxu0 %v5908
    %6851 = vmatpush2.bf16.msra.mxu0 %v5907
    %6852 = vmatprep.subr.bf16.mxu0 %v5900
    %6853 = vmatpush2.bf16.msra.mxu0 %v5899
    %6854 = vmatprep.subr.bf16.mxu0 %v5892
    %6855 = vmatpush2.bf16.msra.mxu0 %v5891
    %6856 = vmatprep.subr.bf16.mxu0 %v5884
    %6857 = vmatpush2.bf16.msra.mxu0 %v5883
    %6858 = vmatprep.subr.bf16.mxu0 %v5876
    %6859 = vmatpush2.bf16.msra.mxu0 %v5875
    %6860 = vmatprep.subr.bf16.mxu0 %v5868
    %6861 = vmatpush2.bf16.msra.mxu0 %v5867
    %6862 = vmatprep.mubr.bf16.mxu0 %v95
    %6863 = vmatmul.mubr.bf16.gmra.mxu0 %v94
    %v6864 = vpop.f32.mrf.mxu0
    %v6865 = vadd.f32 %v3805, %v6864
    %v6866 = vpop.f32.mrf.mxu0
    %v6867 = vadd.f32 %v3807, %v6866
    %v6868 = vpop.f32.mrf.mxu0
    %v6869 = vpop.f32.mrf.mxu0
    %6870 = vdwg.mxu0
    %6871 = vmatprep.subr.bf16.mxu0 %v5988
    %6872 = vmatpush1.bf16.msra.mxu0 %v5987
    %6873 = vmatprep.subr.bf16.mxu0 %v5980
    %6874 = vmatpush1.bf16.msra.mxu0 %v5979
    %6875 = vmatprep.subr.bf16.mxu0 %v5972
    %6876 = vmatpush1.bf16.msra.mxu0 %v5971
    %6877 = vmatprep.subr.bf16.mxu0 %v5964
    %6878 = vmatpush1.bf16.msra.mxu0 %v5963
    %6879 = vmatprep.subr.bf16.mxu0 %v5956
    %6880 = vmatpush1.bf16.msra.mxu0 %v5955
    %6881 = vmatprep.subr.bf16.mxu0 %v5948
    %6882 = vmatpush1.bf16.msra.mxu0 %v5947
    %6883 = vmatprep.subr.bf16.mxu0 %v5940
    %6884 = vmatpush1.bf16.msra.mxu0 %v5939
    %6885 = vmatprep.subr.bf16.mxu0 %v5932
    %6886 = vmatpush1.bf16.msra.mxu0 %v5931
    %6887 = vmatprep.subr.bf16.mxu0 %v6052
    %6888 = vmatpush2.bf16.msra.mxu0 %v6051
    %6889 = vmatprep.subr.bf16.mxu0 %v6044
    %6890 = vmatpush2.bf16.msra.mxu0 %v6043
    %6891 = vmatprep.subr.bf16.mxu0 %v6036
    %6892 = vmatpush2.bf16.msra.mxu0 %v6035
    %6893 = vmatprep.subr.bf16.mxu0 %v6028
    %6894 = vmatpush2.bf16.msra.mxu0 %v6027
    %6895 = vmatprep.subr.bf16.mxu0 %v6020
    %6896 = vmatpush2.bf16.msra.mxu0 %v6019
    %6897 = vmatprep.subr.bf16.mxu0 %v6012
    %6898 = vmatpush2.bf16.msra.mxu0 %v6011
    %6899 = vmatprep.subr.bf16.mxu0 %v6004
    %6900 = vmatpush2.bf16.msra.mxu0 %v6003
    %6901 = vmatprep.subr.bf16.mxu0 %v5996
    %6902 = vmatpush2.bf16.msra.mxu0 %v5995
    %6903 = vmatprep.mubr.bf16.mxu0 %v97
    %6904 = vmatmul.mubr.bf16.gmra.mxu0 %v96
    %v6905 = vpop.f32.mrf.mxu0
    %v6906 = vadd.f32 %v6865, %v6905
    %v6907 = vpop.f32.mrf.mxu0
    %v6908 = vadd.f32 %v6867, %v6907
    %v6909 = vpop.f32.mrf.mxu0
    %v6910 = vpop.f32.mrf.mxu0
    %6911 = vdwg.mxu0
    %6912 = vmatprep.subr.bf16.mxu0 %v6116
    %6913 = vmatpush1.bf16.msra.mxu0 %v6115
    %6914 = vmatprep.subr.bf16.mxu0 %v6108
    %6915 = vmatpush1.bf16.msra.mxu0 %v6107
    %6916 = vmatprep.subr.bf16.mxu0 %v6100
    %6917 = vmatpush1.bf16.msra.mxu0 %v6099
    %6918 = vmatprep.subr.bf16.mxu0 %v6092
    %6919 = vmatpush1.bf16.msra.mxu0 %v6091
    %6920 = vmatprep.subr.bf16.mxu0 %v6084
    %6921 = vmatpush1.bf16.msra.mxu0 %v6083
    %6922 = vmatprep.subr.bf16.mxu0 %v6076
    %6923 = vmatpush1.bf16.msra.mxu0 %v6075
    %6924 = vmatprep.subr.bf16.mxu0 %v6068
    %6925 = vmatpush1.bf16.msra.mxu0 %v6067
    %6926 = vmatprep.subr.bf16.mxu0 %v6060
    %6927 = vmatpush1.bf16.msra.mxu0 %v6059
    %6928 = vmatprep.subr.bf16.mxu0 %v6180
    %6929 = vmatpush2.bf16.msra.mxu0 %v6179
    %6930 = vmatprep.subr.bf16.mxu0 %v6172
    %6931 = vmatpush2.bf16.msra.mxu0 %v6171
    %6932 = vmatprep.subr.bf16.mxu0 %v6164
    %6933 = vmatpush2.bf16.msra.mxu0 %v6163
    %6934 = vmatprep.subr.bf16.mxu0 %v6156
    %6935 = vmatpush2.bf16.msra.mxu0 %v6155
    %6936 = vmatprep.subr.bf16.mxu0 %v6148
    %6937 = vmatpush2.bf16.msra.mxu0 %v6147
    %6938 = vmatprep.subr.bf16.mxu0 %v6140
    %6939 = vmatpush2.bf16.msra.mxu0 %v6139
    %6940 = vmatprep.subr.bf16.mxu0 %v6132
    %6941 = vmatpush2.bf16.msra.mxu0 %v6131
    %6942 = vmatprep.subr.bf16.mxu0 %v6124
    %6943 = vmatpush2.bf16.msra.mxu0 %v6123
    %6944 = vmatprep.mubr.bf16.mxu0 %v99
    %6945 = vmatmul.mubr.bf16.gmra.mxu0 %v98
    %v6946 = vpop.f32.mrf.mxu0
    %v6947 = vadd.f32 %v6906, %v6946
    %v6948 = vpop.f32.mrf.mxu0
    %v6949 = vadd.f32 %v6908, %v6948
    %v6950 = vpop.f32.mrf.mxu0
    %v6951 = vpop.f32.mrf.mxu0
    %6952 = vdwg.mxu0
    %6953 = vmatprep.subr.bf16.mxu0 %v6244
    %6954 = vmatpush1.bf16.msra.mxu0 %v6243
    %6955 = vmatprep.subr.bf16.mxu0 %v6236
    %6956 = vmatpush1.bf16.msra.mxu0 %v6235
    %6957 = vmatprep.subr.bf16.mxu0 %v6228
    %6958 = vmatpush1.bf16.msra.mxu0 %v6227
    %6959 = vmatprep.subr.bf16.mxu0 %v6220
    %6960 = vmatpush1.bf16.msra.mxu0 %v6219
    %6961 = vmatprep.subr.bf16.mxu0 %v6212
    %6962 = vmatpush1.bf16.msra.mxu0 %v6211
    %6963 = vmatprep.subr.bf16.mxu0 %v6204
    %6964 = vmatpush1.bf16.msra.mxu0 %v6203
    %6965 = vmatprep.subr.bf16.mxu0 %v6196
    %6966 = vmatpush1.bf16.msra.mxu0 %v6195
    %6967 = vmatprep.subr.bf16.mxu0 %v6188
    %6968 = vmatpush1.bf16.msra.mxu0 %v6187
    %6969 = vmatprep.subr.bf16.mxu0 0
    %6970 = vmatpush2.bf16.msra.mxu0 0
    %6971 = vmatprep.subr.bf16.mxu0 %v6810
    %6972 = vmatpush2.bf16.msra.mxu0 %v6807
    %6973 = vmatprep.subr.bf16.mxu0 %v6292
    %6974 = vmatpush2.bf16.msra.mxu0 %v6291
    %6975 = vmatprep.subr.bf16.mxu0 %v6284
    %6976 = vmatpush2.bf16.msra.mxu0 %v6283
    %6977 = vmatprep.subr.bf16.mxu0 %v6276
    %6978 = vmatpush2.bf16.msra.mxu0 %v6275
    %6979 = vmatprep.subr.bf16.mxu0 %v6268
    %6980 = vmatpush2.bf16.msra.mxu0 %v6267
    %6981 = vmatprep.subr.bf16.mxu0 %v6260
    %6982 = vmatpush2.bf16.msra.mxu0 %v6259
    %6983 = vmatprep.subr.bf16.mxu0 %v6252
    %6984 = vmatpush2.bf16.msra.mxu0 %v6251
    %6985 = vmatprep.mubr.bf16.mxu0 %v6804
    %6986 = vmatmul.mubr.bf16.gmra.mxu0 %v100
    %v6987 = vpop.f32.mrf.mxu0
    %v6988 = vadd.f32 %v6947, %v6987
    %v6989 = vpop.f32.mrf.mxu0
    %v6990 = vadd.f32 %v6949, %v6989
    %v6991 = vpop.f32.mrf.mxu0
    %v6992 = vpop.f32.mrf.mxu0
    %6993 = vdwg.mxu0
    %6994 = vmatprep.subr.bf16.mxu0 %v5862
    %6995 = vmatpush1.bf16.msra.mxu0 %v5861
    %6996 = vmatprep.subr.bf16.mxu0 %v5854
    %6997 = vmatpush1.bf16.msra.mxu0 %v5853
    %6998 = vmatprep.subr.bf16.mxu0 %v5846
    %6999 = vmatpush1.bf16.msra.mxu0 %v5845
    %7000 = vmatprep.subr.bf16.mxu0 %v5838
    %7001 = vmatpush1.bf16.msra.mxu0 %v5837
    %7002 = vmatprep.subr.bf16.mxu0 %v5830
    %7003 = vmatpush1.bf16.msra.mxu0 %v5829
    %7004 = vmatprep.subr.bf16.mxu0 %v5822
    %7005 = vmatpush1.bf16.msra.mxu0 %v5821
    %7006 = vmatprep.subr.bf16.mxu0 %v5814
    %7007 = vmatpush1.bf16.msra.mxu0 %v5813
    %7008 = vmatprep.subr.bf16.mxu0 %v5806
    %7009 = vmatpush1.bf16.msra.mxu0 %v5805
    %7010 = vmatprep.subr.bf16.mxu0 %v5926
    %7011 = vmatpush2.bf16.msra.mxu0 %v5925
    %7012 = vmatprep.subr.bf16.mxu0 %v5918
    %7013 = vmatpush2.bf16.msra.mxu0 %v5917
    %7014 = vmatprep.subr.bf16.mxu0 %v5910
    %7015 = vmatpush2.bf16.msra.mxu0 %v5909
    %7016 = vmatprep.subr.bf16.mxu0 %v5902
    %7017 = vmatpush2.bf16.msra.mxu0 %v5901
    %7018 = vmatprep.subr.bf16.mxu0 %v5894
    %7019 = vmatpush2.bf16.msra.mxu0 %v5893
    %7020 = vmatprep.subr.bf16.mxu0 %v5886
    %7021 = vmatpush2.bf16.msra.mxu0 %v5885
    %7022 = vmatprep.subr.bf16.mxu0 %v5878
    %7023 = vmatpush2.bf16.msra.mxu0 %v5877
    %7024 = vmatprep.subr.bf16.mxu0 %v5870
    %7025 = vmatpush2.bf16.msra.mxu0 %v5869
    %7026 = vmatprep.mubr.bf16.mxu0 %v95
    %7027 = vmatmul.mubr.bf16.gmra.mxu0 %v94
    %v7028 = vpop.f32.mrf.mxu0
    %v7029 = vadd.f32 %v3969, %v7028
    %v7030 = vpop.f32.mrf.mxu0
    %v7031 = vadd.f32 %v3971, %v7030
    %v7032 = vpop.f32.mrf.mxu0
    %v7033 = vpop.f32.mrf.mxu0
    %7034 = vdwg.mxu0
    %7035 = vmatprep.subr.bf16.mxu0 %v5990
    %7036 = vmatpush1.bf16.msra.mxu0 %v5989
    %7037 = vmatprep.subr.bf16.mxu0 %v5982
    %7038 = vmatpush1.bf16.msra.mxu0 %v5981
    %7039 = vmatprep.subr.bf16.mxu0 %v5974
    %7040 = vmatpush1.bf16.msra.mxu0 %v5973
    %7041 = vmatprep.subr.bf16.mxu0 %v5966
    %7042 = vmatpush1.bf16.msra.mxu0 %v5965
    %7043 = vmatprep.subr.bf16.mxu0 %v5958
    %7044 = vmatpush1.bf16.msra.mxu0 %v5957
    %7045 = vmatprep.subr.bf16.mxu0 %v5950
    %7046 = vmatpush1.bf16.msra.mxu0 %v5949
    %7047 = vmatprep.subr.bf16.mxu0 %v5942
    %7048 = vmatpush1.bf16.msra.mxu0 %v5941
    %7049 = vmatprep.subr.bf16.mxu0 %v5934
    %7050 = vmatpush1.bf16.msra.mxu0 %v5933
    %7051 = vmatprep.subr.bf16.mxu0 %v6054
    %7052 = vmatpush2.bf16.msra.mxu0 %v6053
    %7053 = vmatprep.subr.bf16.mxu0 %v6046
    %7054 = vmatpush2.bf16.msra.mxu0 %v6045
    %7055 = vmatprep.subr.bf16.mxu0 %v6038
    %7056 = vmatpush2.bf16.msra.mxu0 %v6037
    %7057 = vmatprep.subr.bf16.mxu0 %v6030
    %7058 = vmatpush2.bf16.msra.mxu0 %v6029
    %7059 = vmatprep.subr.bf16.mxu0 %v6022
    %7060 = vmatpush2.bf16.msra.mxu0 %v6021
    %7061 = vmatprep.subr.bf16.mxu0 %v6014
    %7062 = vmatpush2.bf16.msra.mxu0 %v6013
    %7063 = vmatprep.subr.bf16.mxu0 %v6006
    %7064 = vmatpush2.bf16.msra.mxu0 %v6005
    %7065 = vmatprep.subr.bf16.mxu0 %v5998
    %7066 = vmatpush2.bf16.msra.mxu0 %v5997
    %7067 = vmatprep.mubr.bf16.mxu0 %v97
    %7068 = vmatmul.mubr.bf16.gmra.mxu0 %v96
    %v7069 = vpop.f32.mrf.mxu0
    %v7070 = vadd.f32 %v7029, %v7069
    %v7071 = vpop.f32.mrf.mxu0
    %v7072 = vadd.f32 %v7031, %v7071
    %v7073 = vpop.f32.mrf.mxu0
    %v7074 = vpop.f32.mrf.mxu0
    %7075 = vdwg.mxu0
    %7076 = vmatprep.subr.bf16.mxu0 %v6118
    %7077 = vmatpush1.bf16.msra.mxu0 %v6117
    %7078 = vmatprep.subr.bf16.mxu0 %v6110
    %7079 = vmatpush1.bf16.msra.mxu0 %v6109
    %7080 = vmatprep.subr.bf16.mxu0 %v6102
    %7081 = vmatpush1.bf16.msra.mxu0 %v6101
    %7082 = vmatprep.subr.bf16.mxu0 %v6094
    %7083 = vmatpush1.bf16.msra.mxu0 %v6093
    %7084 = vmatprep.subr.bf16.mxu0 %v6086
    %7085 = vmatpush1.bf16.msra.mxu0 %v6085
    %7086 = vmatprep.subr.bf16.mxu0 %v6078
    %7087 = vmatpush1.bf16.msra.mxu0 %v6077
    %7088 = vmatprep.subr.bf16.mxu0 %v6070
    %7089 = vmatpush1.bf16.msra.mxu0 %v6069
    %7090 = vmatprep.subr.bf16.mxu0 %v6062
    %7091 = vmatpush1.bf16.msra.mxu0 %v6061
    %7092 = vmatprep.subr.bf16.mxu0 %v6182
    %7093 = vmatpush2.bf16.msra.mxu0 %v6181
    %7094 = vmatprep.subr.bf16.mxu0 %v6174
    %7095 = vmatpush2.bf16.msra.mxu0 %v6173
    %7096 = vmatprep.subr.bf16.mxu0 %v6166
    %7097 = vmatpush2.bf16.msra.mxu0 %v6165
    %7098 = vmatprep.subr.bf16.mxu0 %v6158
    %7099 = vmatpush2.bf16.msra.mxu0 %v6157
    %7100 = vmatprep.subr.bf16.mxu0 %v6150
    %7101 = vmatpush2.bf16.msra.mxu0 %v6149
    %7102 = vmatprep.subr.bf16.mxu0 %v6142
    %7103 = vmatpush2.bf16.msra.mxu0 %v6141
    %7104 = vmatprep.subr.bf16.mxu0 %v6134
    %7105 = vmatpush2.bf16.msra.mxu0 %v6133
    %7106 = vmatprep.subr.bf16.mxu0 %v6126
    %7107 = vmatpush2.bf16.msra.mxu0 %v6125
    %7108 = vmatprep.mubr.bf16.mxu0 %v99
    %7109 = vmatmul.mubr.bf16.gmra.mxu0 %v98
    %v7110 = vpop.f32.mrf.mxu0
    %v7111 = vadd.f32 %v7070, %v7110
    %v7112 = vpop.f32.mrf.mxu0
    %v7113 = vadd.f32 %v7072, %v7112
    %v7114 = vpop.f32.mrf.mxu0
    %v7115 = vpop.f32.mrf.mxu0
    %7116 = vdwg.mxu0
    %7117 = vmatprep.subr.bf16.mxu0 %v6246
    %7118 = vmatpush1.bf16.msra.mxu0 %v6245
    %7119 = vmatprep.subr.bf16.mxu0 %v6238
    %7120 = vmatpush1.bf16.msra.mxu0 %v6237
    %7121 = vmatprep.subr.bf16.mxu0 %v6230
    %7122 = vmatpush1.bf16.msra.mxu0 %v6229
    %7123 = vmatprep.subr.bf16.mxu0 %v6222
    %7124 = vmatpush1.bf16.msra.mxu0 %v6221
    %7125 = vmatprep.subr.bf16.mxu0 %v6214
    %7126 = vmatpush1.bf16.msra.mxu0 %v6213
    %7127 = vmatprep.subr.bf16.mxu0 %v6206
    %7128 = vmatpush1.bf16.msra.mxu0 %v6205
    %7129 = vmatprep.subr.bf16.mxu0 %v6198
    %7130 = vmatpush1.bf16.msra.mxu0 %v6197
    %7131 = vmatprep.subr.bf16.mxu0 %v6190
    %7132 = vmatpush1.bf16.msra.mxu0 %v6189
    %7133 = vmatprep.subr.bf16.mxu0 0
    %7134 = vmatpush2.bf16.msra.mxu0 0
    %7135 = vmatprep.subr.bf16.mxu0 %v6816
    %7136 = vmatpush2.bf16.msra.mxu0 %v6813
    %7137 = vmatprep.subr.bf16.mxu0 %v6294
    %7138 = vmatpush2.bf16.msra.mxu0 %v6293
    %7139 = vmatprep.subr.bf16.mxu0 %v6286
    %7140 = vmatpush2.bf16.msra.mxu0 %v6285
    %7141 = vmatprep.subr.bf16.mxu0 %v6278
    %7142 = vmatpush2.bf16.msra.mxu0 %v6277
    %7143 = vmatprep.subr.bf16.mxu0 %v6270
    %7144 = vmatpush2.bf16.msra.mxu0 %v6269
    %7145 = vmatprep.subr.bf16.mxu0 %v6262
    %7146 = vmatpush2.bf16.msra.mxu0 %v6261
    %7147 = vmatprep.subr.bf16.mxu0 %v6254
    %7148 = vmatpush2.bf16.msra.mxu0 %v6253
    %7149 = vmatprep.mubr.bf16.mxu0 %v6804
    %7150 = vmatmul.mubr.bf16.gmra.mxu0 %v100
    %v7151 = vpop.f32.mrf.mxu0
    %v7152 = vadd.f32 %v7111, %v7151
    %v7153 = vpop.f32.mrf.mxu0
    %v7154 = vadd.f32 %v7113, %v7153
    %v7155 = vpop.f32.mrf.mxu0
    %v7156 = vpop.f32.mrf.mxu0
    %7157 = vdwg.mxu0
    %7158 = vmatprep.subr.bf16.mxu0 %v5864
    %7159 = vmatpush1.bf16.msra.mxu0 %v5863
    %7160 = vmatprep.subr.bf16.mxu0 %v5856
    %7161 = vmatpush1.bf16.msra.mxu0 %v5855
    %7162 = vmatprep.subr.bf16.mxu0 %v5848
    %7163 = vmatpush1.bf16.msra.mxu0 %v5847
    %7164 = vmatprep.subr.bf16.mxu0 %v5840
    %7165 = vmatpush1.bf16.msra.mxu0 %v5839
    %7166 = vmatprep.subr.bf16.mxu0 %v5832
    %7167 = vmatpush1.bf16.msra.mxu0 %v5831
    %7168 = vmatprep.subr.bf16.mxu0 %v5824
    %7169 = vmatpush1.bf16.msra.mxu0 %v5823
    %7170 = vmatprep.subr.bf16.mxu0 %v5816
    %7171 = vmatpush1.bf16.msra.mxu0 %v5815
    %7172 = vmatprep.subr.bf16.mxu0 %v5808
    %7173 = vmatpush1.bf16.msra.mxu0 %v5807
    %7174 = vmatprep.subr.bf16.mxu0 %v5928
    %7175 = vmatpush2.bf16.msra.mxu0 %v5927
    %7176 = vmatprep.subr.bf16.mxu0 %v5920
    %7177 = vmatpush2.bf16.msra.mxu0 %v5919
    %7178 = vmatprep.subr.bf16.mxu0 %v5912
    %7179 = vmatpush2.bf16.msra.mxu0 %v5911
    %7180 = vmatprep.subr.bf16.mxu0 %v5904
    %7181 = vmatpush2.bf16.msra.mxu0 %v5903
    %7182 = vmatprep.subr.bf16.mxu0 %v5896
    %7183 = vmatpush2.bf16.msra.mxu0 %v5895
    %7184 = vmatprep.subr.bf16.mxu0 %v5888
    %7185 = vmatpush2.bf16.msra.mxu0 %v5887
    %7186 = vmatprep.subr.bf16.mxu0 %v5880
    %7187 = vmatpush2.bf16.msra.mxu0 %v5879
    %7188 = vmatprep.subr.bf16.mxu0 %v5872
    %7189 = vmatpush2.bf16.msra.mxu0 %v5871
    %7190 = vmatprep.mubr.bf16.mxu0 %v95
    %7191 = vmatmul.mubr.bf16.gmra.mxu0 %v94
    %v7192 = vpop.f32.mrf.mxu0
    %v7193 = vadd.f32 %v4133, %v7192
    %v7194 = vpop.f32.mrf.mxu0
    %v7195 = vadd.f32 %v4135, %v7194
    %v7196 = vpop.f32.mrf.mxu0
    %v7197 = vpop.f32.mrf.mxu0
    %7198 = vdwg.mxu0
    %7199 = vmatprep.subr.bf16.mxu0 %v5992
    %7200 = vmatpush1.bf16.msra.mxu0 %v5991
    %7201 = vmatprep.subr.bf16.mxu0 %v5984
    %7202 = vmatpush1.bf16.msra.mxu0 %v5983
    %7203 = vmatprep.subr.bf16.mxu0 %v5976
    %7204 = vmatpush1.bf16.msra.mxu0 %v5975
    %7205 = vmatprep.subr.bf16.mxu0 %v5968
    %7206 = vmatpush1.bf16.msra.mxu0 %v5967
    %7207 = vmatprep.subr.bf16.mxu0 %v5960
    %7208 = vmatpush1.bf16.msra.mxu0 %v5959
    %7209 = vmatprep.subr.bf16.mxu0 %v5952
    %7210 = vmatpush1.bf16.msra.mxu0 %v5951
    %7211 = vmatprep.subr.bf16.mxu0 %v5944
    %7212 = vmatpush1.bf16.msra.mxu0 %v5943
    %7213 = vmatprep.subr.bf16.mxu0 %v5936
    %7214 = vmatpush1.bf16.msra.mxu0 %v5935
    %7215 = vmatprep.subr.bf16.mxu0 %v6056
    %7216 = vmatpush2.bf16.msra.mxu0 %v6055
    %7217 = vmatprep.subr.bf16.mxu0 %v6048
    %7218 = vmatpush2.bf16.msra.mxu0 %v6047
    %7219 = vmatprep.subr.bf16.mxu0 %v6040
    %7220 = vmatpush2.bf16.msra.mxu0 %v6039
    %7221 = vmatprep.subr.bf16.mxu0 %v6032
    %7222 = vmatpush2.bf16.msra.mxu0 %v6031
    %7223 = vmatprep.subr.bf16.mxu0 %v6024
    %7224 = vmatpush2.bf16.msra.mxu0 %v6023
    %7225 = vmatprep.subr.bf16.mxu0 %v6016
    %7226 = vmatpush2.bf16.msra.mxu0 %v6015
    %7227 = vmatprep.subr.bf16.mxu0 %v6008
    %7228 = vmatpush2.bf16.msra.mxu0 %v6007
    %7229 = vmatprep.subr.bf16.mxu0 %v6000
    %7230 = vmatpush2.bf16.msra.mxu0 %v5999
    %7231 = vmatprep.mubr.bf16.mxu0 %v97
    %7232 = vmatmul.mubr.bf16.gmra.mxu0 %v96
    %v7233 = vpop.f32.mrf.mxu0
    %v7234 = vadd.f32 %v7193, %v7233
    %v7235 = vpop.f32.mrf.mxu0
    %v7236 = vadd.f32 %v7195, %v7235
    %v7237 = vpop.f32.mrf.mxu0
    %v7238 = vpop.f32.mrf.mxu0
    %7239 = vdwg.mxu0
    %7240 = vmatprep.subr.bf16.mxu0 %v6120
    %7241 = vmatpush1.bf16.msra.mxu0 %v6119
    %7242 = vmatprep.subr.bf16.mxu0 %v6112
    %7243 = vmatpush1.bf16.msra.mxu0 %v6111
    %7244 = vmatprep.subr.bf16.mxu0 %v6104
    %7245 = vmatpush1.bf16.msra.mxu0 %v6103
    %7246 = vmatprep.subr.bf16.mxu0 %v6096
    %7247 = vmatpush1.bf16.msra.mxu0 %v6095
    %7248 = vmatprep.subr.bf16.mxu0 %v6088
    %7249 = vmatpush1.bf16.msra.mxu0 %v6087
    %7250 = vmatprep.subr.bf16.mxu0 %v6080
    %7251 = vmatpush1.bf16.msra.mxu0 %v6079
    %7252 = vmatprep.subr.bf16.mxu0 %v6072
    %7253 = vmatpush1.bf16.msra.mxu0 %v6071
    %7254 = vmatprep.subr.bf16.mxu0 %v6064
    %7255 = vmatpush1.bf16.msra.mxu0 %v6063
    %7256 = vmatprep.subr.bf16.mxu0 %v6184
    %7257 = vmatpush2.bf16.msra.mxu0 %v6183
    %7258 = vmatprep.subr.bf16.mxu0 %v6176
    %7259 = vmatpush2.bf16.msra.mxu0 %v6175
    %7260 = vmatprep.subr.bf16.mxu0 %v6168
    %7261 = vmatpush2.bf16.msra.mxu0 %v6167
    %7262 = vmatprep.subr.bf16.mxu0 %v6160
    %7263 = vmatpush2.bf16.msra.mxu0 %v6159
    %7264 = vmatprep.subr.bf16.mxu0 %v6152
    %7265 = vmatpush2.bf16.msra.mxu0 %v6151
    %7266 = vmatprep.subr.bf16.mxu0 %v6144
    %7267 = vmatpush2.bf16.msra.mxu0 %v6143
    %7268 = vmatprep.subr.bf16.mxu0 %v6136
    %7269 = vmatpush2.bf16.msra.mxu0 %v6135
    %7270 = vmatprep.subr.bf16.mxu0 %v6128
    %7271 = vmatpush2.bf16.msra.mxu0 %v6127
    %7272 = vmatprep.mubr.bf16.mxu0 %v99
    %7273 = vmatmul.mubr.bf16.gmra.mxu0 %v98
    %v7274 = vpop.f32.mrf.mxu0
    %v7275 = vadd.f32 %v7234, %v7274
    %v7276 = vpop.f32.mrf.mxu0
    %v7277 = vadd.f32 %v7236, %v7276
    %v7278 = vpop.f32.mrf.mxu0
    %v7279 = vpop.f32.mrf.mxu0
    %7280 = vdwg.mxu0
    %7281 = vmatprep.subr.bf16.mxu0 %v6248
    %7282 = vmatpush1.bf16.msra.mxu0 %v6247
    %7283 = vmatprep.subr.bf16.mxu0 %v6240
    %7284 = vmatpush1.bf16.msra.mxu0 %v6239
    %7285 = vmatprep.subr.bf16.mxu0 %v6232
    %7286 = vmatpush1.bf16.msra.mxu0 %v6231
    %7287 = vmatprep.subr.bf16.mxu0 %v6224
    %7288 = vmatpush1.bf16.msra.mxu0 %v6223
    %7289 = vmatprep.subr.bf16.mxu0 %v6216
    %7290 = vmatpush1.bf16.msra.mxu0 %v6215
    %7291 = vmatprep.subr.bf16.mxu0 %v6208
    %7292 = vmatpush1.bf16.msra.mxu0 %v6207
    %7293 = vmatprep.subr.bf16.mxu0 %v6200
    %7294 = vmatpush1.bf16.msra.mxu0 %v6199
    %7295 = vmatprep.subr.bf16.mxu0 %v6192
    %7296 = vmatpush1.bf16.msra.mxu0 %v6191
    %7297 = vmatprep.subr.bf16.mxu0 0
    %7298 = vmatpush2.bf16.msra.mxu0 0
    %7299 = vmatprep.subr.bf16.mxu0 %v6822
    %7300 = vmatpush2.bf16.msra.mxu0 %v6819
    %7301 = vmatprep.subr.bf16.mxu0 %v6296
    %7302 = vmatpush2.bf16.msra.mxu0 %v6295
    %7303 = vmatprep.subr.bf16.mxu0 %v6288
    %7304 = vmatpush2.bf16.msra.mxu0 %v6287
    %7305 = vmatprep.subr.bf16.mxu0 %v6280
    %7306 = vmatpush2.bf16.msra.mxu0 %v6279
    %7307 = vmatprep.subr.bf16.mxu0 %v6272
    %7308 = vmatpush2.bf16.msra.mxu0 %v6271
    %7309 = vmatprep.subr.bf16.mxu0 %v6264
    %7310 = vmatpush2.bf16.msra.mxu0 %v6263
    %7311 = vmatprep.subr.bf16.mxu0 %v6256
    %7312 = vmatpush2.bf16.msra.mxu0 %v6255
    %7313 = vmatprep.mubr.bf16.mxu0 %v6804
    %7314 = vmatmul.mubr.bf16.gmra.mxu0 %v100
    %v7315 = vpop.f32.mrf.mxu0
    %v7316 = vadd.f32 %v7275, %v7315
    %v7317 = vpop.f32.mrf.mxu0
    %v7318 = vadd.f32 %v7277, %v7317
    %v7319 = vpop.f32.mrf.mxu0
    %v7320 = vpop.f32.mrf.mxu0
    %7321 = vdwg.mxu0
    %7322 = vmatprep.subr.bf16.mxu0 %v5866
    %7323 = vmatpush1.bf16.msra.mxu0 %v5865
    %7324 = vmatprep.subr.bf16.mxu0 %v5858
    %7325 = vmatpush1.bf16.msra.mxu0 %v5857
    %7326 = vmatprep.subr.bf16.mxu0 %v5850
    %7327 = vmatpush1.bf16.msra.mxu0 %v5849
    %7328 = vmatprep.subr.bf16.mxu0 %v5842
    %7329 = vmatpush1.bf16.msra.mxu0 %v5841
    %7330 = vmatprep.subr.bf16.mxu0 %v5834
    %7331 = vmatpush1.bf16.msra.mxu0 %v5833
    %7332 = vmatprep.subr.bf16.mxu0 %v5826
    %7333 = vmatpush1.bf16.msra.mxu0 %v5825
    %7334 = vmatprep.subr.bf16.mxu0 %v5818
    %7335 = vmatpush1.bf16.msra.mxu0 %v5817
    %7336 = vmatprep.subr.bf16.mxu0 %v5810
    %7337 = vmatpush1.bf16.msra.mxu0 %v5809
    %7338 = vmatprep.subr.bf16.mxu0 %v5930
    %7339 = vmatpush2.bf16.msra.mxu0 %v5929
    %7340 = vmatprep.subr.bf16.mxu0 %v5922
    %7341 = vmatpush2.bf16.msra.mxu0 %v5921
    %7342 = vmatprep.subr.bf16.mxu0 %v5914
    %7343 = vmatpush2.bf16.msra.mxu0 %v5913
    %7344 = vmatprep.subr.bf16.mxu0 %v5906
    %7345 = vmatpush2.bf16.msra.mxu0 %v5905
    %7346 = vmatprep.subr.bf16.mxu0 %v5898
    %7347 = vmatpush2.bf16.msra.mxu0 %v5897
    %7348 = vmatprep.subr.bf16.mxu0 %v5890
    %7349 = vmatpush2.bf16.msra.mxu0 %v5889
    %7350 = vmatprep.subr.bf16.mxu0 %v5882
    %7351 = vmatpush2.bf16.msra.mxu0 %v5881
    %7352 = vmatprep.subr.bf16.mxu0 %v5874
    %7353 = vmatpush2.bf16.msra.mxu0 %v5873
    %7354 = vmatprep.mubr.bf16.mxu0 %v95
    %7355 = vmatmul.mubr.bf16.gmra.mxu0 %v94
    %v7356 = vpop.f32.mrf.mxu0
    %v7357 = vadd.f32 %v4297, %v7356
    %v7358 = vpop.f32.mrf.mxu0
    %v7359 = vadd.f32 %v4299, %v7358
    %v7360 = vpop.f32.mrf.mxu0
    %v7361 = vpop.f32.mrf.mxu0
    %7362 = vdwg.mxu0
    %7363 = vmatprep.subr.bf16.mxu0 %v5994
    %7364 = vmatpush1.bf16.msra.mxu0 %v5993
    %7365 = vmatprep.subr.bf16.mxu0 %v5986
    %7366 = vmatpush1.bf16.msra.mxu0 %v5985
    %7367 = vmatprep.subr.bf16.mxu0 %v5978
    %7368 = vmatpush1.bf16.msra.mxu0 %v5977
    %7369 = vmatprep.subr.bf16.mxu0 %v5970
    %7370 = vmatpush1.bf16.msra.mxu0 %v5969
    %7371 = vmatprep.subr.bf16.mxu0 %v5962
    %7372 = vmatpush1.bf16.msra.mxu0 %v5961
    %7373 = vmatprep.subr.bf16.mxu0 %v5954
    %7374 = vmatpush1.bf16.msra.mxu0 %v5953
    %7375 = vmatprep.subr.bf16.mxu0 %v5946
    %7376 = vmatpush1.bf16.msra.mxu0 %v5945
    %7377 = vmatprep.subr.bf16.mxu0 %v5938
    %7378 = vmatpush1.bf16.msra.mxu0 %v5937
    %7379 = vmatprep.subr.bf16.mxu0 %v6058
    %7380 = vmatpush2.bf16.msra.mxu0 %v6057
    %7381 = vmatprep.subr.bf16.mxu0 %v6050
    %7382 = vmatpush2.bf16.msra.mxu0 %v6049
    %7383 = vmatprep.subr.bf16.mxu0 %v6042
    %7384 = vmatpush2.bf16.msra.mxu0 %v6041
    %7385 = vmatprep.subr.bf16.mxu0 %v6034
    %7386 = vmatpush2.bf16.msra.mxu0 %v6033
    %7387 = vmatprep.subr.bf16.mxu0 %v6026
    %7388 = vmatpush2.bf16.msra.mxu0 %v6025
    %7389 = vmatprep.subr.bf16.mxu0 %v6018
    %7390 = vmatpush2.bf16.msra.mxu0 %v6017
    %7391 = vmatprep.subr.bf16.mxu0 %v6010
    %7392 = vmatpush2.bf16.msra.mxu0 %v6009
    %7393 = vmatprep.subr.bf16.mxu0 %v6002
    %7394 = vmatpush2.bf16.msra.mxu0 %v6001
    %7395 = vmatprep.mubr.bf16.mxu0 %v97
    %7396 = vmatmul.mubr.bf16.gmra.mxu0 %v96
    %v7397 = vpop.f32.mrf.mxu0
    %v7398 = vadd.f32 %v7357, %v7397
    %v7399 = vpop.f32.mrf.mxu0
    %v7400 = vadd.f32 %v7359, %v7399
    %v7401 = vpop.f32.mrf.mxu0
    %v7402 = vpop.f32.mrf.mxu0
    %7403 = vdwg.mxu0
    %7404 = vmatprep.subr.bf16.mxu0 %v6122
    %7405 = vmatpush1.bf16.msra.mxu0 %v6121
    %7406 = vmatprep.subr.bf16.mxu0 %v6114
    %7407 = vmatpush1.bf16.msra.mxu0 %v6113
    %7408 = vmatprep.subr.bf16.mxu0 %v6106
    %7409 = vmatpush1.bf16.msra.mxu0 %v6105
    %7410 = vmatprep.subr.bf16.mxu0 %v6098
    %7411 = vmatpush1.bf16.msra.mxu0 %v6097
    %7412 = vmatprep.subr.bf16.mxu0 %v6090
    %7413 = vmatpush1.bf16.msra.mxu0 %v6089
    %7414 = vmatprep.subr.bf16.mxu0 %v6082
    %7415 = vmatpush1.bf16.msra.mxu0 %v6081
    %7416 = vmatprep.subr.bf16.mxu0 %v6074
    %7417 = vmatpush1.bf16.msra.mxu0 %v6073
    %7418 = vmatprep.subr.bf16.mxu0 %v6066
    %7419 = vmatpush1.bf16.msra.mxu0 %v6065
    %7420 = vmatprep.subr.bf16.mxu0 %v6186
    %7421 = vmatpush2.bf16.msra.mxu0 %v6185
    %7422 = vmatprep.subr.bf16.mxu0 %v6178
    %7423 = vmatpush2.bf16.msra.mxu0 %v6177
    %7424 = vmatprep.subr.bf16.mxu0 %v6170
    %7425 = vmatpush2.bf16.msra.mxu0 %v6169
    %7426 = vmatprep.subr.bf16.mxu0 %v6162
    %7427 = vmatpush2.bf16.msra.mxu0 %v6161
    %7428 = vmatprep.subr.bf16.mxu0 %v6154
    %7429 = vmatpush2.bf16.msra.mxu0 %v6153
    %7430 = vmatprep.subr.bf16.mxu0 %v6146
    %7431 = vmatpush2.bf16.msra.mxu0 %v6145
    %7432 = vmatprep.subr.bf16.mxu0 %v6138
    %7433 = vmatpush2.bf16.msra.mxu0 %v6137
    %7434 = vmatprep.subr.bf16.mxu0 %v6130
    %7435 = vmatpush2.bf16.msra.mxu0 %v6129
    %7436 = vmatprep.mubr.bf16.mxu0 %v99
    %7437 = vmatmul.mubr.bf16.gmra.mxu0 %v98
    %v7438 = vpop.f32.mrf.mxu0
    %v7439 = vadd.f32 %v7398, %v7438
    %v7440 = vpop.f32.mrf.mxu0
    %v7441 = vadd.f32 %v7400, %v7440
    %v7442 = vpop.f32.mrf.mxu0
    %v7443 = vpop.f32.mrf.mxu0
    %7444 = vdwg.mxu0
    %7445 = vmatprep.subr.bf16.mxu0 %v6250
    %7446 = vmatpush1.bf16.msra.mxu0 %v6249
    %7447 = vmatprep.subr.bf16.mxu0 %v6242
    %7448 = vmatpush1.bf16.msra.mxu0 %v6241
    %7449 = vmatprep.subr.bf16.mxu0 %v6234
    %7450 = vmatpush1.bf16.msra.mxu0 %v6233
    %7451 = vmatprep.subr.bf16.mxu0 %v6226
    %7452 = vmatpush1.bf16.msra.mxu0 %v6225
    %7453 = vmatprep.subr.bf16.mxu0 %v6218
    %7454 = vmatpush1.bf16.msra.mxu0 %v6217
    %7455 = vmatprep.subr.bf16.mxu0 %v6210
    %7456 = vmatpush1.bf16.msra.mxu0 %v6209
    %7457 = vmatprep.subr.bf16.mxu0 %v6202
    %7458 = vmatpush1.bf16.msra.mxu0 %v6201
    %7459 = vmatprep.subr.bf16.mxu0 %v6194
    %7460 = vmatpush1.bf16.msra.mxu0 %v6193
    %7461 = vmatprep.subr.bf16.mxu0 0
    %7462 = vmatpush2.bf16.msra.mxu0 0
    %7463 = vmatprep.subr.bf16.mxu0 %v6828
    %7464 = vmatpush2.bf16.msra.mxu0 %v6825
    %7465 = vmatprep.subr.bf16.mxu0 %v6298
    %7466 = vmatpush2.bf16.msra.mxu0 %v6297
    %7467 = vmatprep.subr.bf16.mxu0 %v6290
    %7468 = vmatpush2.bf16.msra.mxu0 %v6289
    %7469 = vmatprep.subr.bf16.mxu0 %v6282
    %7470 = vmatpush2.bf16.msra.mxu0 %v6281
    %7471 = vmatprep.subr.bf16.mxu0 %v6274
    %7472 = vmatpush2.bf16.msra.mxu0 %v6273
    %7473 = vmatprep.subr.bf16.mxu0 %v6266
    %7474 = vmatpush2.bf16.msra.mxu0 %v6265
    %7475 = vmatprep.subr.bf16.mxu0 %v6258
    %7476 = vmatpush2.bf16.msra.mxu0 %v6257
    %7477 = vmatprep.mubr.bf16.mxu0 %v6804
    %7478 = vmatmul.mubr.bf16.gmra.mxu0 %v100
    %v7479 = vpop.f32.mrf.mxu0
    %v7480 = vadd.f32 %v7439, %v7479
    %v7481 = vpop.f32.mrf.mxu0
    %v7482 = vadd.f32 %v7441, %v7481
    %v7483 = vpop.f32.mrf.mxu0
    %v7484 = vpop.f32.mrf.mxu0
    %7485 = vdwg.mxu0
    %v7486 = vld [vmem:[#allocation8] sm:$0xff]
    %v7488 = vlaneseq
    %v7489 = vshrl.u32 %v7488, 7
    %v7490 = vsub.s32 0, %v7489
    %v7491 = vrot.slane %v7486, %v7490
    %v7492 = vlaneseq
    %v7493 = vshrl.u32 %v7492, 7
    %v7494 = vsub.s32 1, %v7493
    %v7495 = vrot.slane %v7486, %v7494
    %v7496 = vlaneseq
    %v7497 = vshrl.u32 %v7496, 7
    %v7498 = vsub.s32 2, %v7497
    %v7499 = vrot.slane %v7486, %v7498
    %v7500 = vlaneseq
    %v7501 = vshrl.u32 %v7500, 7
    %v7502 = vsub.s32 3, %v7501
    %v7503 = vrot.slane %v7486, %v7502
    %v7504 = vlaneseq
    %v7505 = vshrl.u32 %v7504, 7
    %v7506 = vsub.s32 4, %v7505
    %v7507 = vrot.slane %v7486, %v7506
    %v7508 = vlaneseq
    %v7509 = vshrl.u32 %v7508, 7
    %v7510 = vsub.s32 5, %v7509
    %v7511 = vrot.slane %v7486, %v7510
    %v7512 = vlaneseq
    %v7513 = vshrl.u32 %v7512, 7
    %v7514 = vsub.s32 6, %v7513
    %v7515 = vrot.slane %v7486, %v7514
    %v7516 = vlaneseq
    %v7517 = vshrl.u32 %v7516, 7
    %v7518 = vsub.s32 7, %v7517
    %v7519 = vrot.slane %v7486, %v7518
    %v7528 = vadd.f32 %v6988, %v7491
    %v7529 = vadd.f32 %v6990, %v7495
    %v7530 = vadd.f32 %v7152, %v7499
    %v7531 = vadd.f32 %v7154, %v7503
    %v7532 = vadd.f32 %v7316, %v7507
    %v7533 = vadd.f32 %v7318, %v7511
    %v7534 = vadd.f32 %v7480, %v7515
    %v7535 = vadd.f32 %v7482, %v7519
    %v7536 = vmax.f32 %v7528, 0.0
    %v7537 = vmax.f32 %v7529, 0.0
    %v7538 = vmax.f32 %v7530, 0.0
    %v7539 = vmax.f32 %v7531, 0.0
    %v7540 = vmax.f32 %v7532, 0.0
    %v7541 = vmax.f32 %v7533, 0.0
    %v7542 = vmax.f32 %v7534, 0.0
    %v7543 = vmax.f32 %v7535, 0.0
    %v7544 = vld [vmem:[#allocation10] sm:$0xff]
    %v7546 = vlaneseq
    %v7547 = vshrl.u32 %v7546, 7
    %v7548 = vsub.s32 0, %v7547
    %v7549 = vrot.slane %v7544, %v7548
    %v7550 = vlaneseq
    %v7551 = vshrl.u32 %v7550, 7
    %v7552 = vsub.s32 1, %v7551
    %v7553 = vrot.slane %v7544, %v7552
    %v7554 = vlaneseq
    %v7555 = vshrl.u32 %v7554, 7
    %v7556 = vsub.s32 2, %v7555
    %v7557 = vrot.slane %v7544, %v7556
    %v7558 = vlaneseq
    %v7559 = vshrl.u32 %v7558, 7
    %v7560 = vsub.s32 3, %v7559
    %v7561 = vrot.slane %v7544, %v7560
    %v7562 = vlaneseq
    %v7563 = vshrl.u32 %v7562, 7
    %v7564 = vsub.s32 4, %v7563
    %v7565 = vrot.slane %v7544, %v7564
    %v7566 = vlaneseq
    %v7567 = vshrl.u32 %v7566, 7
    %v7568 = vsub.s32 5, %v7567
    %v7569 = vrot.slane %v7544, %v7568
    %v7570 = vlaneseq
    %v7571 = vshrl.u32 %v7570, 7
    %v7572 = vsub.s32 6, %v7571
    %v7573 = vrot.slane %v7544, %v7572
    %v7574 = vlaneseq
    %v7575 = vshrl.u32 %v7574, 7
    %v7576 = vsub.s32 7, %v7575
    %v7577 = vrot.slane %v7544, %v7576
    %v7586 = vmul.f32 %v7536, %v7549
    %v7587 = vmul.f32 %v7537, %v7553
    %v7588 = vmul.f32 %v7538, %v7557
    %v7589 = vmul.f32 %v7539, %v7561
    %v7590 = vmul.f32 %v7540, %v7565
    %v7591 = vmul.f32 %v7541, %v7569
    %v7592 = vmul.f32 %v7542, %v7573
    %v7593 = vmul.f32 %v7543, %v7577
    %v7594 = vadd.f32 %v7586, %v7587
    %v7595 = vadd.f32 %v7594, %v7588
    %v7596 = vadd.f32 %v7595, %v7589
    %v7597 = vadd.f32 %v7596, %v7590
    %v7598 = vadd.f32 %v7597, %v7591
    %v7599 = vadd.f32 %v7598, %v7592
    %v7600 = vsel %vm3618, %v7593, 0.0
    %v7601 = vadd.f32 %v7599, %v7600
    %7602 = vadd.xlane.f32.xlu0 %v7601
    %v7603 = vpop.xlane.xlu0 %7602
    %v7604 = vld [vmem:[#allocation2] sm:$0x1]
    %v7606 = vlaneseq
    %v7607 = vshrl.u32 %v7606, 7
    %v7608 = vsub.s32 0, %v7607
    %v7609 = vrot.slane %v7604, %v7608
    %v7611 = vadd.f32 %v7603, %v7609
    %vm7612 = vcmask 7168
    %7613 = vst.msk [vmem:[%s6] sm:$0xff] %vm7612, %v7611
    // Predicated region
    $region46: #{tpu_custom_call.1} parent=1 // pred_check
      _
    $region47: #{tpu_custom_call.1} parent=1 // pred_check_branch
      %7615 = sbr.rel (0) target = $region49
    $region48: #{tpu_custom_call.1} parent=1 // pred_region
      _
    $region49: #{tpu_custom_call.1} parent=1 // pred_fallthru
      _
    // Predicated region
    $region50: #{tpu_custom_call.1} parent=1 // pred_check
      _
    $region51: #{tpu_custom_call.1} parent=1 // pred_check_branch
      %7617 = sbr.rel (0) target = $region53
    $region52: #{tpu_custom_call.1} parent=1 // pred_region
      _
    $region53: #{tpu_custom_call.1} parent=1 // pred_fallthru
      _
    %7618 = vsyncpa [#allocation4], 1
    %7619 = vsyncpa [#allocation6], 1
    %7620 = vsyncpa [#allocation9], 1

</llo_original>
